<compile_context>
chip_gen: v7x
topology: tpu7x:2x2x1
jax: 0.10.0
libtpu: 0.0.40
codegen_flags: <defaults>
</compile_context>

<pallas_src>
import functools
import math

import jax
import jax.numpy as jnp
import numpy as np
from jax import lax
from jax.experimental import pallas as pl
from jax.experimental.pallas import tpu as pltpu

_LANE = 128
_NEG_BIG = -1e30


# ----------------------------- small helpers -----------------------------

def _round_up(n, m):
    return ((n + m - 1) // m) * m


def _bspec(c, L):
    return pl.BlockSpec((None, c, L), lambda i: (i, 0, 0))


def _wspec(*shape):
    n = len(shape)
    return pl.BlockSpec(shape, lambda i: (0,) * n)


def _pick_tile(Lp, candidates):
    for c in candidates:
        if c <= Lp and Lp % c == 0:
            return c
    return Lp


def _tile_and_vmem(Lp, Cin, C, NC, rows_qkv):
    # Generation-aware tile sizes + an explicit VMEM budget clamped under physical VMEM.
    try:
        cap = int(getattr(pltpu.get_tpu_info(), "vmem_capacity_bytes", 64 << 20))
    except Exception:
        cap = 64 << 20
    if cap >= (100 << 20):              # v5e / v6e: 128 MiB VMEM -> larger key tiles
        qt = _pick_tile(Lp, (512, 256, 128))
        kt = _pick_tile(Lp, (1024, 512, 256, 128))
    else:                               # v7x: 64 MiB physical VMEM
        qt = _pick_tile(Lp, (256, 128))
        kt = _pick_tile(Lp, (512, 256, 128))
    f32 = 4
    need = ((2 * C + rows_qkv) * Lp          # VMEM scratch (ff, qkv)
            + 2 * (Cin + 2 + NC + C) * Lp    # double-buffered per-batch I/O blocks
            + 8 * qt * kt                    # live (kt, qt) energy/prob temporaries
            + 4 * C * Lp) * f32 + (4 << 20)  # misc temporaries, weights, margin
    limit = max(int(need), 32 << 20)
    limit = min(limit, max(cap - (16 << 20), 32 << 20))
    return qt, kt, limit


# ----------------------------- fused encoder kernel -----------------------------

def _encoder_kernel(x_ref, m_ref, kb_ref,
                    cinw_ref, cinb_ref,
                    ffw_ref, ffb_ref, qkvw_ref, qkvb_ref,
                    ow_ref, ob_ref, c1w_ref, c1b_ref,
                    coutw_ref, coutb_ref,
                    out_ref, feat_ref,
                    ff_sc, qkv_sc,
                    *, L, dilations, cq, cv, alpha, qt, kt, qa_rows, ka_rows):
    C, Lp = feat_ref.shape
    QA, KA = qa_rows, ka_rows
    n_qt = Lp // qt
    n_kt = Lp // kt

    lane = lax.broadcasted_iota(jnp.int32, (1, Lp), 1)
    lmask = (lane < L).astype(jnp.float32)      # 1 on real columns, 0 on lane padding
    inv_len = 1.0 / float(L)
    msk = m_ref[...]                            # (1, Lp) hard mask (0 on lane padding)
    kb = kb_ref[...]                            # (1, Lp) log(mask+1e-6) / -1e30 pad

    # ---- Encoder.conv_1x1 (input projection); zero lane padding so dilated-conv
    #      halos read true zeros beyond the real length L. -----------------------
    feat = jnp.dot(cinw_ref[...], x_ref[...],
                   preferred_element_type=jnp.float32) + cinb_ref[...]
    feat_ref[...] = feat * lmask

    # ---- AttModule layers, unrolled (dilation is a compile-time constant). ------
    for li, d in enumerate(dilations):
        x = feat_ref[...]

        # ConvFeedForward: Conv1d(k=3, padding=d, dilation=d) + ReLU.  Halo built
        # in-register with lane rotations; d >= Lp means both side taps are zero.
        if d < Lp:
            x_l = jnp.where(lane >= d, pltpu.roll(x, d, 1), 0.0)
            x_r = jnp.where(lane < Lp - d, pltpu.roll(x, Lp - d, 1), 0.0)
        else:
            x_l = jnp.zeros_like(x)
            x_r = jnp.zeros_like(x)
        x_taps = jnp.concatenate([x_l, x, x_r], axis=0)                     # (3C, Lp)
        ff = jnp.maximum(
            jnp.dot(ffw_ref[li], x_taps, preferred_element_type=jnp.float32)
            + ffb_ref[li], 0.0)
        ff_sc[...] = ff

        # InstanceNorm1d (affine=False, eps=1e-5) over the real L columns only.
        mean = jnp.sum(ff * lmask, axis=-1, keepdims=True) * inv_len
        cen = ff - mean
        var = jnp.sum(cen * cen * lmask, axis=-1, keepdims=True) * inv_len
        xn = cen * lax.rsqrt(var + 1e-5)

        # Fused q/k/v projection.  Host packing already folds 1/sqrt(cq) into the
        # q rows; here the additive key bias becomes an extra k row paired with a
        # ones row on q (so the bias rides the MXU contraction), and the hard key
        # mask is folded into v.  Sections are padded to sublane multiples of 8.
        qkv = jnp.dot(qkvw_ref[li], xn,
                      preferred_element_type=jnp.float32) + qkvb_ref[li]
        parts = [qkv[0:cq], jnp.ones((1, Lp), jnp.float32)]
        if QA > cq + 1:
            parts.append(jnp.zeros((QA - cq - 1, Lp), jnp.float32))
        parts += [qkv[cq:2 * cq], kb]
        if KA > cq + 1:
            parts.append(jnp.zeros((KA - cq - 1, Lp), jnp.float32))
        parts.append(qkv[2 * cq:2 * cq + cv] * msk)
        qkv_sc[...] = jnp.concatenate(parts, axis=0)                        # (QA+KA+cv, Lp)

        o_w = ow_ref[li]
        o_b = ob_ref[li]
        c1_w = c1w_ref[li]
        c1_b = c1b_ref[li]

        def q_body(qi, carry):
            qo = pl.multiple_of(qi * qt, qt)
            qa_t = qkv_sc[pl.ds(0, QA), pl.ds(qo, qt)]                      # (QA, qt)

            def k_body(ki, state):
                m_i, l_i, acc = state                                       # (1,qt),(1,qt),(cv,qt)
                ko = pl.multiple_of(ki * kt, kt)
                ka_t = qkv_sc[pl.ds(QA, KA), pl.ds(ko, kt)]                 # (KA, kt)
                v_t = qkv_sc[pl.ds(QA + KA, cv), pl.ds(ko, kt)]             # (cv, kt)
                # s[j,i] = <q_i,k_j>/sqrt(cq) + log(mask_j+1e-6), -1e30 on lane
                # padding (bias rides the matmul via the augmented rows).
                s = lax.dot_general(ka_t, qa_t, (((0,), (0,)), ((), ())),
                                    preferred_element_type=jnp.float32)     # (kt, qt)
                # Online softmax (key tile 0 always holds real columns, so the
                # running max never stays at -1e30 when a fully padded tile hits).
                m_new = jnp.maximum(m_i, jnp.max(s, axis=0, keepdims=True))
                corr = jnp.exp(m_i - m_new)
                p = jnp.exp(s - m_new)                                      # (kt, qt)
                l_new = corr * l_i + jnp.sum(p, axis=0, keepdims=True)
                pv = lax.dot_general(v_t, p, (((1,), (0,)), ((), ())),
                                     preferred_element_type=jnp.float32)    # (cv, qt)
                return m_new, l_new, corr * acc + pv

            m0 = jnp.full((1, qt), _NEG_BIG, jnp.float32)
            l0 = jnp.zeros((1, qt), jnp.float32)
            a0 = jnp.zeros((cv, qt), jnp.float32)
            _, l_i, acc = lax.fori_loop(0, n_kt, k_body, (m0, l0, a0))

            # Lane-dense normalize + ReLU, AttLayer.conv_out, mask.
            att_t = jnp.maximum(acc * pl.reciprocal(l_i, approx=False), 0.0)  # (cv, qt)
            q_mask = m_ref[:, pl.ds(qo, qt)]
            att_out = (jnp.dot(o_w, att_t, preferred_element_type=jnp.float32)
                       + o_b) * q_mask                                      # (C, qt)
            # AttModule tail: conv_1x1(alpha*att + ff), residual, mask.
            mix = alpha * att_out + ff_sc[:, pl.ds(qo, qt)]
            y = jnp.dot(c1_w, mix, preferred_element_type=jnp.float32) + c1_b
            feat_ref[:, pl.ds(qo, qt)] = (feat_ref[:, pl.ds(qo, qt)] + y) * q_mask
            return carry

        lax.fori_loop(0, n_qt, q_body, 0)

    # ---- Encoder.conv_out + mask. -----------------------------------------------
    out_ref[...] = (jnp.dot(coutw_ref[...], feat_ref[...],
                            preferred_element_type=jnp.float32)
                    + coutb_ref[...]) * msk


# ----------------------------- wrapper -----------------------------

def encoder_forward(params, x, mask, alpha):
    # channel_masking_rate == 0 -> Dropout2d branch skipped (matches PyTorch code path).
    B, Cin, L = x.shape
    Fm = params['conv_in_w'].shape[0]
    NC = params['conv_out_w'].shape[0]
    layers = params['layers']
    NL = len(layers)
    cq = layers[0]['q_w'].shape[0]
    cv = layers[0]['v_w'].shape[0]
    scale = 1.0 / math.sqrt(cq)

    Lp = _round_up(L, _LANE)
    pad = Lp - L
    xp = jnp.pad(x.astype(jnp.float32), ((0, 0), (0, 0), (0, pad)))
    mask_p = jnp.pad(mask.astype(jnp.float32), ((0, 0), (0, 0), (0, pad)))
    col = jnp.arange(Lp)[None, None, :]
    key_bias = jnp.where(col < L, jnp.log(mask_p + 1e-6), _NEG_BIG).astype(jnp.float32)

    # Host-side (tiny) weight packing: 3 conv taps -> one matmul; q (pre-scaled by
    # 1/sqrt(cq)) / k / v -> one matmul; per-layer weights stacked on a leading axis.
    cin_w = params['conv_in_w']
    cin_b = params['conv_in_b'].reshape(Fm, 1)
    cout_w = params['conv_out_w']
    cout_b = params['conv_out_b'].reshape(NC, 1)
    ff_w = jnp.stack([jnp.transpose(lp['ff_w'], (0, 2, 1)).reshape(Fm, 3 * Fm)
                      for lp in layers])
    ff_b = jnp.stack([lp['ff_b'].reshape(Fm, 1) for lp in layers])
    qkv_w = jnp.stack([jnp.concatenate([lp['q_w'] * scale, lp['k_w'], lp['v_w']], axis=0)
                       for lp in layers])
    qkv_b = jnp.stack([jnp.concatenate([lp['q_b'] * scale, lp['k_b'], lp['v_b']]
                                       ).reshape(-1, 1) for lp in layers])
    o_w = jnp.stack([lp['o_w'] for lp in layers])
    o_b = jnp.stack([lp['o_b'].reshape(Fm, 1) for lp in layers])
    c1_w = jnp.stack([lp['c1_w'] for lp in layers])
    c1_b = jnp.stack([lp['c1_b'].reshape(Fm, 1) for lp in layers])
    dilations = tuple(int(lp['dilation']) for lp in layers)

    QA = _round_up(cq + 1, 8)      # q rows + ones row, padded to a sublane multiple
    KA = QA                        # k rows + key-bias row, padded to a sublane multiple
    rows = QA + KA + cv
    qt, kt, vmem_limit = _tile_and_vmem(Lp, Cin, Fm, NC, rows)

    kern = functools.partial(_encoder_kernel, L=L, dilations=dilations, cq=cq, cv=cv,
                             alpha=float(alpha), qt=qt, kt=kt, qa_rows=QA, ka_rows=KA)

    out, feat = pl.pallas_call(
        kern, grid=(B,),
        in_specs=[_bspec(Cin, Lp), _bspec(1, Lp), _bspec(1, Lp),
                  _wspec(Fm, Cin), _wspec(Fm, 1),
                  _wspec(NL, Fm, 3 * Fm), _wspec(NL, Fm, 1),
                  _wspec(NL, 2 * cq + cv, Fm), _wspec(NL, 2 * cq + cv, 1),
                  _wspec(NL, Fm, cv), _wspec(NL, Fm, 1),
                  _wspec(NL, Fm, Fm), _wspec(NL, Fm, 1),
                  _wspec(NC, Fm), _wspec(NC, 1)],
        out_specs=(pl.BlockSpec((None, NC, Lp), lambda i: (i, 0, 0)),
                   pl.BlockSpec((None, Fm, Lp), lambda i: (i, 0, 0))),
        out_shape=(jax.ShapeDtypeStruct((B, NC, Lp), jnp.float32),
                   jax.ShapeDtypeStruct((B, Fm, Lp), jnp.float32)),
        scratch_shapes=[pltpu.VMEM((Fm, Lp), jnp.float32),     # ff (feed-forward branch)
                        pltpu.VMEM((rows, Lp), jnp.float32)],  # [q|1|k|bias|masked v]
        compiler_params=pltpu.CompilerParams(
            dimension_semantics=("parallel",),
            vmem_limit_bytes=vmem_limit),
    )(xp, mask_p, key_bias, cin_w, cin_b, ff_w, ff_b, qkv_w, qkv_b,
      o_w, o_b, c1_w, c1_b, cout_w, cout_b)
    return out[:, :, :L], feat[:, :, :L]


# ----------------------------- pure-JAX reference -----------------------------

def ref_encoder(params, x, mask, alpha):
    hp = jax.lax.Precision.HIGHEST

    def pw(x, w, b):
        return jnp.einsum('oc,bcl->bol', w, x, precision=hp) + b[None, :, None]

    def dconv(x, w, b, d):
        L = x.shape[-1]
        xp = jnp.pad(x, ((0, 0), (0, 0), (d, d)))
        y = sum(jnp.einsum('oc,bcl->bol', w[:, :, k], xp[:, :, k * d:k * d + L],
                           precision=hp) for k in range(3))
        return jax.nn.relu(y + b[None, :, None])

    def inorm(x):
        mean = x.mean(-1, keepdims=True)
        var = ((x - mean) ** 2).mean(-1, keepdims=True)
        return (x - mean) / jnp.sqrt(var + 1e-5)

    def attn(xn, mask, lp):
        q = pw(xn, lp['q_w'], lp['q_b'])
        k = pw(xn, lp['k_w'], lp['k_b'])
        v = pw(xn, lp['v_w'], lp['v_b'])
        cq = q.shape[1]
        e = jnp.einsum('bci,bcj->bij', q, k, precision=hp) / jnp.sqrt(float(cq))
        a = jax.nn.softmax(e + jnp.log(mask + 1e-6), axis=-1) * mask
        out = jnp.einsum('bcj,bij->bci', v, a, precision=hp)
        return pw(jax.nn.relu(out), lp['o_w'], lp['o_b']) * mask

    feature = pw(x, params['conv_in_w'], params['conv_in_b'])
    for lp in params['layers']:
        ff = dconv(feature, lp['ff_w'], lp['ff_b'], lp['dilation'])
        a = attn(inorm(ff), mask, lp)
        out = pw(alpha * a + ff, lp['c1_w'], lp['c1_b'])
        feature = (feature + out) * mask
    out = pw(feature, params['conv_out_w'], params['conv_out_b']) * mask
    return out, feature


# ----------------------------- params / main -----------------------------

def init_params(seed, num_layers, r1, r2, F, input_dim, num_classes):
    key = jax.random.PRNGKey(seed)
    state = {'key': key}

    def w(*shape):
        state['key'], sub = jax.random.split(state['key'])
        return 0.1 * jax.random.normal(sub, shape, dtype=jnp.float32)

    params = {
        'conv_in_w': w(F, input_dim), 'conv_in_b': w(F),
        'conv_out_w': w(num_classes, F), 'conv_out_b': w(num_classes),
        'layers': [],
    }
    for i in range(num_layers):
        params['layers'].append({
            'dilation': 2 ** i,
            'ff_w': w(F, F, 3), 'ff_b': w(F),           # ConvFeedForward (k=3, dil=2^i)
            'q_w': w(F // r1, F), 'q_b': w(F // r1),    # query_conv
            'k_w': w(F // r1, F), 'k_b': w(F // r1),    # key_conv
            'v_w': w(F // r2, F), 'v_b': w(F // r2),    # value_conv
            'o_w': w(F, F // r2), 'o_b': w(F),          # conv_out of AttLayer
            'c1_w': w(F, F), 'c1_b': w(F),              # AttModule conv_1x1
        })
    return params


if __name__ == "__main__":
    # Encoder(num_layers=2, r1=2, r2=2, num_f_maps=16, input_dim=8,
    #         num_classes=4, channel_masking_rate=0, att_type='normal_att', alpha=1.0)
    B, input_dim, F, L, num_classes, num_layers, r1, r2 = 2, 8, 16, 16, 4, 2, 2, 2
    alpha = 1.0

    params = init_params(0, num_layers, r1, r2, F, input_dim, num_classes)

    key = jax.random.PRNGKey(0)
    kx, _ = jax.random.split(key)
    x = jax.random.normal(kx, (B, input_dim, L), dtype=jnp.float32)
    mask = jnp.ones((B, 1, L), dtype=jnp.float32)
    mask = mask.at[1, :, 12:].set(0.0)   # second sequence is shorter

    out, feature = encoder_forward(params, x, mask, alpha)
    jax.block_until_ready((out, feature))

    ref_out, ref_feat = ref_encoder(params, x, mask, alpha)
    np.testing.assert_allclose(np.asarray(out), np.asarray(ref_out), rtol=5e-3, atol=5e-3)
    np.testing.assert_allclose(np.asarray(feature), np.asarray(ref_feat), rtol=5e-3, atol=5e-3)

    print("KERNEL_OK")
</pallas_src>

<mosaic_0001>
module attributes {stable_mosaic.version = 11 : i64} {
  func.func @_encoder_kernel(%arg0: i32, %arg1: memref<1x8x128xf32, #tpu.memory_space<vmem>>, %arg2: memref<1x1x128xf32, #tpu.memory_space<vmem>>, %arg3: memref<1x1x128xf32, #tpu.memory_space<vmem>>, %arg4: memref<16x8xf32, #tpu.memory_space<vmem>>, %arg5: memref<16x1xf32, #tpu.memory_space<vmem>>, %arg6: memref<2x16x48xf32, #tpu.memory_space<vmem>>, %arg7: memref<2x16x1xf32, #tpu.memory_space<vmem>>, %arg8: memref<2x24x16xf32, #tpu.memory_space<vmem>>, %arg9: memref<2x24x1xf32, #tpu.memory_space<vmem>>, %arg10: memref<2x16x8xf32, #tpu.memory_space<vmem>>, %arg11: memref<2x16x1xf32, #tpu.memory_space<vmem>>, %arg12: memref<2x16x16xf32, #tpu.memory_space<vmem>>, %arg13: memref<2x16x1xf32, #tpu.memory_space<vmem>>, %arg14: memref<4x16xf32, #tpu.memory_space<vmem>>, %arg15: memref<4x1xf32, #tpu.memory_space<vmem>>, %arg16: memref<1x4x128xf32, #tpu.memory_space<vmem>>, %arg17: memref<1x16x128xf32, #tpu.memory_space<vmem>>, %arg18: memref<16x128xf32, #tpu.memory_space<vmem>>, %arg19: memref<40x128xf32, #tpu.memory_space<vmem>>) attributes {dimension_semantics = [#tpu.dimension_semantics<parallel>], iteration_bounds = array<i64: 2>, scalar_prefetch = 0 : i64, scratch_operands = 2 : i64, tpu.core_type = #tpu.core_type<tc>, window_params = [{transform_indices = @transform_0, window_bounds = array<i64: 1, 8, 128>}, {transform_indices = @transform_1, window_bounds = array<i64: 1, 1, 128>}, {transform_indices = @transform_2, window_bounds = array<i64: 1, 1, 128>}, {pipeline_mode = #tpu.pipeline_mode<synchronous>, transform_indices = @transform_3, window_bounds = array<i64: 16, 8>}, {pipeline_mode = #tpu.pipeline_mode<synchronous>, transform_indices = @transform_4, window_bounds = array<i64: 16, 1>}, {pipeline_mode = #tpu.pipeline_mode<synchronous>, transform_indices = @transform_5, window_bounds = array<i64: 2, 16, 48>}, {pipeline_mode = #tpu.pipeline_mode<synchronous>, transform_indices = @transform_6, window_bounds = array<i64: 2, 16, 1>}, {pipeline_mode = #tpu.pipeline_mode<synchronous>, transform_indices = @transform_7, window_bounds = array<i64: 2, 24, 16>}, {pipeline_mode = #tpu.pipeline_mode<synchronous>, transform_indices = @transform_8, window_bounds = array<i64: 2, 24, 1>}, {pipeline_mode = #tpu.pipeline_mode<synchronous>, transform_indices = @transform_9, window_bounds = array<i64: 2, 16, 8>}, {pipeline_mode = #tpu.pipeline_mode<synchronous>, transform_indices = @transform_10, window_bounds = array<i64: 2, 16, 1>}, {pipeline_mode = #tpu.pipeline_mode<synchronous>, transform_indices = @transform_11, window_bounds = array<i64: 2, 16, 16>}, {pipeline_mode = #tpu.pipeline_mode<synchronous>, transform_indices = @transform_12, window_bounds = array<i64: 2, 16, 1>}, {pipeline_mode = #tpu.pipeline_mode<synchronous>, transform_indices = @transform_13, window_bounds = array<i64: 4, 16>}, {pipeline_mode = #tpu.pipeline_mode<synchronous>, transform_indices = @transform_14, window_bounds = array<i64: 4, 1>}, {transform_indices = @transform_15, window_bounds = array<i64: 1, 4, 128>}, {transform_indices = @transform_16, window_bounds = array<i64: 1, 16, 128>}]} {
    %0 = tpu.iota {dimensions = array<i32: 1>} : vector<1x128xi32>
    %c16_i32 = arith.constant 16 : i32
    %1 = vector.broadcast %c16_i32 : i32 to vector<1x128xi32>
    %2 = arith.cmpi slt, %0, %1 : vector<1x128xi32>
    %3 = arith.extui %2 : vector<1x128xi1> to vector<1x128xi32>
    %4 = arith.sitofp %3 : vector<1x128xi32> to vector<1x128xf32>
    %c0 = arith.constant 0 : index
    %c0_0 = arith.constant 0 : index
    %c0_1 = arith.constant 0 : index
    %5 = vector.load %arg2[%c0, %c0_0, %c0_1] : memref<1x1x128xf32, #tpu.memory_space<vmem>>, vector<1x1x128xf32>
    %6 = vector.shape_cast %5 : vector<1x1x128xf32> to vector<1x128xf32>
    %c0_2 = arith.constant 0 : index
    %c0_3 = arith.constant 0 : index
    %c0_4 = arith.constant 0 : index
    %7 = vector.load %arg3[%c0_2, %c0_3, %c0_4] : memref<1x1x128xf32, #tpu.memory_space<vmem>>, vector<1x1x128xf32>
    %8 = vector.shape_cast %7 : vector<1x1x128xf32> to vector<1x128xf32>
    %c0_5 = arith.constant 0 : index
    %c0_6 = arith.constant 0 : index
    %9 = vector.load %arg4[%c0_5, %c0_6] : memref<16x8xf32, #tpu.memory_space<vmem>>, vector<16x8xf32>
    %c0_7 = arith.constant 0 : index
    %c0_8 = arith.constant 0 : index
    %c0_9 = arith.constant 0 : index
    %10 = vector.load %arg1[%c0_7, %c0_8, %c0_9] : memref<1x8x128xf32, #tpu.memory_space<vmem>>, vector<1x8x128xf32>
    %11 = vector.shape_cast %10 : vector<1x8x128xf32> to vector<8x128xf32>
    %cst = arith.constant dense<0.000000e+00> : vector<16x128xf32>
    %12 = tpu.matmul %9, %11, %cst {dimension_numbers = #tpu.dot_dimension_numbers<[1], [0], [0], [1], [0, 0, 1, 1], [], []>} : vector<16x8xf32>, vector<8x128xf32>, vector<16x128xf32> -> vector<16x128xf32>
    %c0_10 = arith.constant 0 : index
    %c0_11 = arith.constant 0 : index
    %13 = vector.load %arg5[%c0_10, %c0_11] : memref<16x1xf32, #tpu.memory_space<vmem>>, vector<16x1xf32>
    %14 = vector.broadcast %13 : vector<16x1xf32> to vector<16x128xf32>
    %15 = arith.addf %12, %14 : vector<16x128xf32>
    %16 = vector.broadcast %4 : vector<1x128xf32> to vector<16x128xf32>
    %17 = arith.mulf %15, %16 : vector<16x128xf32>
    %c0_12 = arith.constant 0 : index
    %c0_13 = arith.constant 0 : index
    %c0_14 = arith.constant 0 : index
    %18 = vector.load %arg17[%c0_12, %c0_13, %c0_14] : memref<1x16x128xf32, #tpu.memory_space<vmem>>, vector<1x16x128xf32>
    %19 = vector.shape_cast %18 : vector<1x16x128xf32> to vector<16x128xf32>
    %20 = vector.shape_cast %17 : vector<16x128xf32> to vector<1x16x128xf32>
    tpu.vector_store %arg17[%c0_12, %c0_13, %c0_14], %20 {strides = array<i32>} : memref<1x16x128xf32, #tpu.memory_space<vmem>>, vector<1x16x128xf32>,
    %c0_15 = arith.constant 0 : index
    %c0_16 = arith.constant 0 : index
    %c0_17 = arith.constant 0 : index
    %21 = vector.load %arg17[%c0_15, %c0_16, %c0_17] : memref<1x16x128xf32, #tpu.memory_space<vmem>>, vector<1x16x128xf32>
    %22 = vector.shape_cast %21 : vector<1x16x128xf32> to vector<16x128xf32>
    %c1_i32 = arith.constant 1 : i32
    %23 = vector.broadcast %c1_i32 : i32 to vector<1x128xi32>
    %24 = arith.cmpi sge, %0, %23 : vector<1x128xi32>
    %c1_i32_18 = arith.constant 1 : i32
    %25 = tpu.dynamic_rotate %22 by %c1_i32_18 dim 1 : vector<16x128xf32>, i32 -> vector<16x128xf32>
    %cst_19 = arith.constant 0.000000e+00 : f32
    %26 = vector.shape_cast %24 : vector<1x128xi1> to vector<1x128xi1>
    %27 = vector.broadcast %26 : vector<1x128xi1> to vector<16x128xi1>
    %28 = vector.broadcast %cst_19 : f32 to vector<16x128xf32>
    %29 = arith.select %27, %25, %28 : vector<16x128xi1>, vector<16x128xf32>
    %c127_i32 = arith.constant 127 : i32
    %30 = vector.broadcast %c127_i32 : i32 to vector<1x128xi32>
    %31 = arith.cmpi slt, %0, %30 : vector<1x128xi32>
    %c127_i32_20 = arith.constant 127 : i32
    %32 = tpu.dynamic_rotate %22 by %c127_i32_20 dim 1 : vector<16x128xf32>, i32 -> vector<16x128xf32>
    %cst_21 = arith.constant 0.000000e+00 : f32
    %33 = vector.shape_cast %31 : vector<1x128xi1> to vector<1x128xi1>
    %34 = vector.broadcast %33 : vector<1x128xi1> to vector<16x128xi1>
    %35 = vector.broadcast %cst_21 : f32 to vector<16x128xf32>
    %36 = arith.select %34, %32, %35 : vector<16x128xi1>, vector<16x128xf32>
    %37 = tpu.concatenate %29, %22, %36 in 0 : vector<16x128xf32>, vector<16x128xf32>, vector<16x128xf32> -> vector<48x128xf32>
    %c0_22 = arith.constant 0 : index
    %c0_23 = arith.constant 0 : index
    %c0_24 = arith.constant 0 : index
    %38 = vector.load %arg6[%c0_22, %c0_23, %c0_24] : memref<2x16x48xf32, #tpu.memory_space<vmem>>, vector<1x16x48xf32>
    %39 = vector.shape_cast %38 : vector<1x16x48xf32> to vector<16x48xf32>
    %cst_25 = arith.constant dense<0.000000e+00> : vector<16x128xf32>
    %40 = tpu.matmul %39, %37, %cst_25 {dimension_numbers = #tpu.dot_dimension_numbers<[1], [0], [0], [1], [0, 0, 1, 1], [], []>} : vector<16x48xf32>, vector<48x128xf32>, vector<16x128xf32> -> vector<16x128xf32>
    %c0_26 = arith.constant 0 : index
    %c0_27 = arith.constant 0 : index
    %c0_28 = arith.constant 0 : index
    %41 = vector.load %arg7[%c0_26, %c0_27, %c0_28] : memref<2x16x1xf32, #tpu.memory_space<vmem>>, vector<1x16x1xf32>
    %42 = vector.shape_cast %41 : vector<1x16x1xf32> to vector<16x1xf32>
    %43 = vector.broadcast %42 : vector<16x1xf32> to vector<16x128xf32>
    %44 = arith.addf %40, %43 : vector<16x128xf32>
    %cst_29 = arith.constant 0.000000e+00 : f32
    %45 = vector.broadcast %cst_29 : f32 to vector<16x128xf32>
    %46 = arith.maximumf %44, %45 : vector<16x128xf32>
    %c0_30 = arith.constant 0 : index
    %c0_31 = arith.constant 0 : index
    %47 = vector.load %arg18[%c0_30, %c0_31] : memref<16x128xf32, #tpu.memory_space<vmem>>, vector<16x128xf32>
    tpu.vector_store %arg18[%c0_30, %c0_31], %46 {strides = array<i32>} : memref<16x128xf32, #tpu.memory_space<vmem>>, vector<16x128xf32>,
    %48 = vector.broadcast %4 : vector<1x128xf32> to vector<16x128xf32>
    %49 = arith.mulf %46, %48 : vector<16x128xf32>
    %cst_32 = arith.constant dense<0.000000e+00> : vector<16xf32>
    %50 = vector.multi_reduction <add>, %49, %cst_32 [1] : vector<16x128xf32> to vector<16xf32>
    %51 = vector.shape_cast %50 : vector<16xf32> to vector<16x1xf32>
    %cst_33 = arith.constant 6.250000e-02 : f32
    %52 = vector.broadcast %cst_33 : f32 to vector<16x1xf32>
    %53 = arith.mulf %51, %52 : vector<16x1xf32>
    %54 = vector.broadcast %53 : vector<16x1xf32> to vector<16x128xf32>
    %55 = arith.subf %46, %54 : vector<16x128xf32>
    %56 = arith.mulf %55, %55 : vector<16x128xf32>
    %57 = vector.broadcast %4 : vector<1x128xf32> to vector<16x128xf32>
    %58 = arith.mulf %56, %57 : vector<16x128xf32>
    %cst_34 = arith.constant dense<0.000000e+00> : vector<16xf32>
    %59 = vector.multi_reduction <add>, %58, %cst_34 [1] : vector<16x128xf32> to vector<16xf32>
    %60 = vector.shape_cast %59 : vector<16xf32> to vector<16x1xf32>
    %cst_35 = arith.constant 6.250000e-02 : f32
    %61 = vector.broadcast %cst_35 : f32 to vector<16x1xf32>
    %62 = arith.mulf %60, %61 : vector<16x1xf32>
    %cst_36 = arith.constant 9.99999974E-6 : f32
    %63 = vector.broadcast %cst_36 : f32 to vector<16x1xf32>
    %64 = arith.addf %62, %63 : vector<16x1xf32>
    %65 = math.rsqrt %64 : vector<16x1xf32>
    %66 = vector.broadcast %65 : vector<16x1xf32> to vector<16x128xf32>
    %67 = arith.mulf %55, %66 : vector<16x128xf32>
    %c0_37 = arith.constant 0 : index
    %c0_38 = arith.constant 0 : index
    %c0_39 = arith.constant 0 : index
    %68 = vector.load %arg8[%c0_37, %c0_38, %c0_39] : memref<2x24x16xf32, #tpu.memory_space<vmem>>, vector<1x24x16xf32>
    %69 = vector.shape_cast %68 : vector<1x24x16xf32> to vector<24x16xf32>
    %cst_40 = arith.constant dense<0.000000e+00> : vector<24x128xf32>
    %70 = tpu.matmul %69, %67, %cst_40 {dimension_numbers = #tpu.dot_dimension_numbers<[1], [0], [0], [1], [0, 0, 1, 1], [], []>} : vector<24x16xf32>, vector<16x128xf32>, vector<24x128xf32> -> vector<24x128xf32>
    %c0_41 = arith.constant 0 : index
    %c0_42 = arith.constant 0 : index
    %c0_43 = arith.constant 0 : index
    %71 = vector.load %arg9[%c0_41, %c0_42, %c0_43] : memref<2x24x1xf32, #tpu.memory_space<vmem>>, vector<1x24x1xf32>
    %72 = vector.shape_cast %71 : vector<1x24x1xf32> to vector<24x1xf32>
    %73 = vector.broadcast %72 : vector<24x1xf32> to vector<24x128xf32>
    %74 = arith.addf %70, %73 : vector<24x128xf32>
    %75 = vector.extract_strided_slice %74 {offsets = [0, 0], sizes = [8, 128], strides = [1, 1]} : vector<24x128xf32> to vector<8x128xf32>
    %cst_44 = arith.constant 1.000000e+00 : f32
    %76 = vector.broadcast %cst_44 : f32 to vector<1x128xf32>
    %cst_45 = arith.constant 0.000000e+00 : f32
    %77 = vector.broadcast %cst_45 : f32 to vector<7x128xf32>
    %78 = vector.extract_strided_slice %74 {offsets = [8, 0], sizes = [8, 128], strides = [1, 1]} : vector<24x128xf32> to vector<8x128xf32>
    %cst_46 = arith.constant 0.000000e+00 : f32
    %79 = vector.broadcast %cst_46 : f32 to vector<7x128xf32>
    %80 = vector.extract_strided_slice %74 {offsets = [16, 0], sizes = [8, 128], strides = [1, 1]} : vector<24x128xf32> to vector<8x128xf32>
    %81 = vector.broadcast %6 : vector<1x128xf32> to vector<8x128xf32>
    %82 = arith.mulf %80, %81 : vector<8x128xf32>
    %83 = tpu.concatenate %75, %76, %77, %78, %8, %79, %82 in 0 : vector<8x128xf32>, vector<1x128xf32>, vector<7x128xf32>, vector<8x128xf32>, vector<1x128xf32>, vector<7x128xf32>, vector<8x128xf32> -> vector<40x128xf32>
    %c0_47 = arith.constant 0 : index
    %c0_48 = arith.constant 0 : index
    %84 = vector.load %arg19[%c0_47, %c0_48] : memref<40x128xf32, #tpu.memory_space<vmem>>, vector<40x128xf32>
    tpu.vector_store %arg19[%c0_47, %c0_48], %83 {strides = array<i32>} : memref<40x128xf32, #tpu.memory_space<vmem>>, vector<40x128xf32>,
    %c0_49 = arith.constant 0 : index
    %c0_50 = arith.constant 0 : index
    %c0_51 = arith.constant 0 : index
    %85 = vector.load %arg10[%c0_49, %c0_50, %c0_51] : memref<2x16x8xf32, #tpu.memory_space<vmem>>, vector<1x16x8xf32>
    %86 = vector.shape_cast %85 : vector<1x16x8xf32> to vector<16x8xf32>
    %c0_52 = arith.constant 0 : index
    %c0_53 = arith.constant 0 : index
    %c0_54 = arith.constant 0 : index
    %87 = vector.load %arg11[%c0_52, %c0_53, %c0_54] : memref<2x16x1xf32, #tpu.memory_space<vmem>>, vector<1x16x1xf32>
    %88 = vector.shape_cast %87 : vector<1x16x1xf32> to vector<16x1xf32>
    %c0_55 = arith.constant 0 : index
    %c0_56 = arith.constant 0 : index
    %c0_57 = arith.constant 0 : index
    %89 = vector.load %arg12[%c0_55, %c0_56, %c0_57] : memref<2x16x16xf32, #tpu.memory_space<vmem>>, vector<1x16x16xf32>
    %90 = vector.shape_cast %89 : vector<1x16x16xf32> to vector<16x16xf32>
    %c0_58 = arith.constant 0 : index
    %c0_59 = arith.constant 0 : index
    %c0_60 = arith.constant 0 : index
    %91 = vector.load %arg13[%c0_58, %c0_59, %c0_60] : memref<2x16x1xf32, #tpu.memory_space<vmem>>, vector<1x16x1xf32>
    %92 = vector.shape_cast %91 : vector<1x16x1xf32> to vector<16x1xf32>
    %c0_i32 = arith.constant 0 : i32
    %c128_i32 = arith.constant 128 : i32
    %93 = arith.muli %c0_i32, %c128_i32 : i32
    %94 = tpu.assume_multiple %93, 128 : i32
    %c0_61 = arith.constant 0 : index
    %95 = arith.index_cast %94 : i32 to index
    %96 = vector.load %arg19[%c0_61, %95] : memref<40x128xf32, #tpu.memory_space<vmem>>, vector<16x128xf32>
    %cst_62 = arith.constant -1.000000e+30 : f32
    %97 = vector.broadcast %cst_62 : f32 to vector<1x128xf32>
    %cst_63 = arith.constant 0.000000e+00 : f32
    %98 = vector.broadcast %cst_63 : f32 to vector<1x128xf32>
    %cst_64 = arith.constant 0.000000e+00 : f32
    %99 = vector.broadcast %cst_64 : f32 to vector<8x128xf32>
    %c0_i32_65 = arith.constant 0 : i32
    %c128_i32_66 = arith.constant 128 : i32
    %100 = arith.muli %c0_i32_65, %c128_i32_66 : i32
    %101 = tpu.assume_multiple %100, 128 : i32
    %c16 = arith.constant 16 : index
    %102 = arith.index_cast %101 : i32 to index
    %103 = vector.load %arg19[%c16, %102] : memref<40x128xf32, #tpu.memory_space<vmem>>, vector<16x128xf32>
    %c32 = arith.constant 32 : index
    %104 = arith.index_cast %101 : i32 to index
    %105 = vector.load %arg19[%c32, %104] : memref<40x128xf32, #tpu.memory_space<vmem>>, vector<8x128xf32>
    %cst_67 = arith.constant dense<0.000000e+00> : vector<128x128xf32>
    %106 = tpu.matmul %103, %96, %cst_67 {dimension_numbers = #tpu.dot_dimension_numbers<[0], [0], [1], [1], [0, 1, 1, 1], [], []>} : vector<16x128xf32>, vector<16x128xf32>, vector<128x128xf32> -> vector<128x128xf32>
    %cst_68 = arith.constant dense<0xFF800000> : vector<128xf32>
    %107 = vector.multi_reduction <maximumf>, %106, %cst_68 [0] : vector<128x128xf32> to vector<128xf32>
    %108 = vector.shape_cast %107 : vector<128xf32> to vector<1x128xf32>
    %109 = arith.maximumf %97, %108 : vector<1x128xf32>
    %110 = arith.subf %97, %109 : vector<1x128xf32>
    %111 = math.exp %110 : vector<1x128xf32>
    %112 = vector.broadcast %109 : vector<1x128xf32> to vector<128x128xf32>
    %113 = arith.subf %106, %112 : vector<128x128xf32>
    %114 = math.exp %113 : vector<128x128xf32>
    %115 = arith.mulf %111, %98 : vector<1x128xf32>
    %cst_69 = arith.constant dense<0.000000e+00> : vector<128xf32>
    %116 = vector.multi_reduction <add>, %114, %cst_69 [0] : vector<128x128xf32> to vector<128xf32>
    %117 = vector.shape_cast %116 : vector<128xf32> to vector<1x128xf32>
    %118 = arith.addf %115, %117 : vector<1x128xf32>
    %cst_70 = arith.constant dense<0.000000e+00> : vector<8x128xf32>
    %119 = tpu.matmul %105, %114, %cst_70 {dimension_numbers = #tpu.dot_dimension_numbers<[1], [0], [0], [1], [0, 0, 1, 1], [], []>} : vector<8x128xf32>, vector<128x128xf32>, vector<8x128xf32> -> vector<8x128xf32>
    %120 = vector.broadcast %111 : vector<1x128xf32> to vector<8x128xf32>
    %121 = arith.mulf %120, %99 : vector<8x128xf32>
    %122 = arith.addf %121, %119 : vector<8x128xf32>
    %c1_i32_71 = arith.constant 1 : i32
    %123 = tpu.reciprocal %118 : vector<1x128xf32> -> vector<1x128xf32>
    %124 = vector.broadcast %123 : vector<1x128xf32> to vector<8x128xf32>
    %125 = arith.mulf %122, %124 : vector<8x128xf32>
    %cst_72 = arith.constant 0.000000e+00 : f32
    %126 = vector.broadcast %cst_72 : f32 to vector<8x128xf32>
    %127 = arith.maximumf %125, %126 : vector<8x128xf32>
    %c0_73 = arith.constant 0 : index
    %c0_74 = arith.constant 0 : index
    %128 = arith.index_cast %94 : i32 to index
    %129 = vector.load %arg2[%c0_73, %c0_74, %128] : memref<1x1x128xf32, #tpu.memory_space<vmem>>, vector<1x1x128xf32>
    %130 = vector.shape_cast %129 : vector<1x1x128xf32> to vector<1x128xf32>
    %cst_75 = arith.constant dense<0.000000e+00> : vector<16x128xf32>
    %131 = tpu.matmul %86, %127, %cst_75 {dimension_numbers = #tpu.dot_dimension_numbers<[1], [0], [0], [1], [0, 0, 1, 1], [], []>} : vector<16x8xf32>, vector<8x128xf32>, vector<16x128xf32> -> vector<16x128xf32>
    %132 = vector.broadcast %88 : vector<16x1xf32> to vector<16x128xf32>
    %133 = arith.addf %131, %132 : vector<16x128xf32>
    %134 = vector.broadcast %130 : vector<1x128xf32> to vector<16x128xf32>
    %135 = arith.mulf %133, %134 : vector<16x128xf32>
    %cst_76 = arith.constant 1.000000e+00 : f32
    %136 = vector.broadcast %cst_76 : f32 to vector<16x128xf32>
    %137 = arith.mulf %136, %135 : vector<16x128xf32>
    %c0_77 = arith.constant 0 : index
    %138 = arith.index_cast %94 : i32 to index
    %139 = vector.load %arg18[%c0_77, %138] : memref<16x128xf32, #tpu.memory_space<vmem>>, vector<16x128xf32>
    %140 = arith.addf %137, %139 : vector<16x128xf32>
    %cst_78 = arith.constant dense<0.000000e+00> : vector<16x128xf32>
    %141 = tpu.matmul %90, %140, %cst_78 {dimension_numbers = #tpu.dot_dimension_numbers<[1], [0], [0], [1], [0, 0, 1, 1], [], []>} : vector<16x16xf32>, vector<16x128xf32>, vector<16x128xf32> -> vector<16x128xf32>
    %142 = vector.broadcast %92 : vector<16x1xf32> to vector<16x128xf32>
    %143 = arith.addf %141, %142 : vector<16x128xf32>
    %c0_79 = arith.constant 0 : index
    %c0_80 = arith.constant 0 : index
    %144 = arith.index_cast %94 : i32 to index
    %145 = vector.load %arg17[%c0_79, %c0_80, %144] : memref<1x16x128xf32, #tpu.memory_space<vmem>>, vector<1x16x128xf32>
    %146 = vector.shape_cast %145 : vector<1x16x128xf32> to vector<16x128xf32>
    %147 = arith.addf %146, %143 : vector<16x128xf32>
    %148 = vector.broadcast %130 : vector<1x128xf32> to vector<16x128xf32>
    %149 = arith.mulf %147, %148 : vector<16x128xf32>
    %c0_81 = arith.constant 0 : index
    %c0_82 = arith.constant 0 : index
    %150 = arith.index_cast %94 : i32 to index
    %151 = vector.load %arg17[%c0_81, %c0_82, %150] : memref<1x16x128xf32, #tpu.memory_space<vmem>>, vector<1x16x128xf32>
    %152 = vector.shape_cast %151 : vector<1x16x128xf32> to vector<16x128xf32>
    %153 = vector.shape_cast %149 : vector<16x128xf32> to vector<1x16x128xf32>
    tpu.vector_store %arg17[%c0_81, %c0_82, %150], %153 {strides = array<i32>} : memref<1x16x128xf32, #tpu.memory_space<vmem>>, vector<1x16x128xf32>,
    %c1_i32_83 = arith.constant 1 : i32
    %c0_84 = arith.constant 0 : index
    %c0_85 = arith.constant 0 : index
    %c0_86 = arith.constant 0 : index
    %154 = vector.load %arg17[%c0_84, %c0_85, %c0_86] : memref<1x16x128xf32, #tpu.memory_space<vmem>>, vector<1x16x128xf32>
    %155 = vector.shape_cast %154 : vector<1x16x128xf32> to vector<16x128xf32>
    %c2_i32 = arith.constant 2 : i32
    %156 = vector.broadcast %c2_i32 : i32 to vector<1x128xi32>
    %157 = arith.cmpi sge, %0, %156 : vector<1x128xi32>
    %c2_i32_87 = arith.constant 2 : i32
    %158 = tpu.dynamic_rotate %155 by %c2_i32_87 dim 1 : vector<16x128xf32>, i32 -> vector<16x128xf32>
    %cst_88 = arith.constant 0.000000e+00 : f32
    %159 = vector.shape_cast %157 : vector<1x128xi1> to vector<1x128xi1>
    %160 = vector.broadcast %159 : vector<1x128xi1> to vector<16x128xi1>
    %161 = vector.broadcast %cst_88 : f32 to vector<16x128xf32>
    %162 = arith.select %160, %158, %161 : vector<16x128xi1>, vector<16x128xf32>
    %c126_i32 = arith.constant 126 : i32
    %163 = vector.broadcast %c126_i32 : i32 to vector<1x128xi32>
    %164 = arith.cmpi slt, %0, %163 : vector<1x128xi32>
    %c126_i32_89 = arith.constant 126 : i32
    %165 = tpu.dynamic_rotate %155 by %c126_i32_89 dim 1 : vector<16x128xf32>, i32 -> vector<16x128xf32>
    %cst_90 = arith.constant 0.000000e+00 : f32
    %166 = vector.shape_cast %164 : vector<1x128xi1> to vector<1x128xi1>
    %167 = vector.broadcast %166 : vector<1x128xi1> to vector<16x128xi1>
    %168 = vector.broadcast %cst_90 : f32 to vector<16x128xf32>
    %169 = arith.select %167, %165, %168 : vector<16x128xi1>, vector<16x128xf32>
    %170 = tpu.concatenate %162, %155, %169 in 0 : vector<16x128xf32>, vector<16x128xf32>, vector<16x128xf32> -> vector<48x128xf32>
    %c1 = arith.constant 1 : index
    %c0_91 = arith.constant 0 : index
    %c0_92 = arith.constant 0 : index
    %171 = vector.load %arg6[%c1, %c0_91, %c0_92] : memref<2x16x48xf32, #tpu.memory_space<vmem>>, vector<1x16x48xf32>
    %172 = vector.shape_cast %171 : vector<1x16x48xf32> to vector<16x48xf32>
    %cst_93 = arith.constant dense<0.000000e+00> : vector<16x128xf32>
    %173 = tpu.matmul %172, %170, %cst_93 {dimension_numbers = #tpu.dot_dimension_numbers<[1], [0], [0], [1], [0, 0, 1, 1], [], []>} : vector<16x48xf32>, vector<48x128xf32>, vector<16x128xf32> -> vector<16x128xf32>
    %c1_94 = arith.constant 1 : index
    %c0_95 = arith.constant 0 : index
    %c0_96 = arith.constant 0 : index
    %174 = vector.load %arg7[%c1_94, %c0_95, %c0_96] : memref<2x16x1xf32, #tpu.memory_space<vmem>>, vector<1x16x1xf32>
    %175 = vector.shape_cast %174 : vector<1x16x1xf32> to vector<16x1xf32>
    %176 = vector.broadcast %175 : vector<16x1xf32> to vector<16x128xf32>
    %177 = arith.addf %173, %176 : vector<16x128xf32>
    %cst_97 = arith.constant 0.000000e+00 : f32
    %178 = vector.broadcast %cst_97 : f32 to vector<16x128xf32>
    %179 = arith.maximumf %177, %178 : vector<16x128xf32>
    %c0_98 = arith.constant 0 : index
    %c0_99 = arith.constant 0 : index
    %180 = vector.load %arg18[%c0_98, %c0_99] : memref<16x128xf32, #tpu.memory_space<vmem>>, vector<16x128xf32>
    tpu.vector_store %arg18[%c0_98, %c0_99], %179 {strides = array<i32>} : memref<16x128xf32, #tpu.memory_space<vmem>>, vector<16x128xf32>,
    %181 = vector.broadcast %4 : vector<1x128xf32> to vector<16x128xf32>
    %182 = arith.mulf %179, %181 : vector<16x128xf32>
    %cst_100 = arith.constant dense<0.000000e+00> : vector<16xf32>
    %183 = vector.multi_reduction <add>, %182, %cst_100 [1] : vector<16x128xf32> to vector<16xf32>
    %184 = vector.shape_cast %183 : vector<16xf32> to vector<16x1xf32>
    %cst_101 = arith.constant 6.250000e-02 : f32
    %185 = vector.broadcast %cst_101 : f32 to vector<16x1xf32>
    %186 = arith.mulf %184, %185 : vector<16x1xf32>
    %187 = vector.broadcast %186 : vector<16x1xf32> to vector<16x128xf32>
    %188 = arith.subf %179, %187 : vector<16x128xf32>
    %189 = arith.mulf %188, %188 : vector<16x128xf32>
    %190 = vector.broadcast %4 : vector<1x128xf32> to vector<16x128xf32>
    %191 = arith.mulf %189, %190 : vector<16x128xf32>
    %cst_102 = arith.constant dense<0.000000e+00> : vector<16xf32>
    %192 = vector.multi_reduction <add>, %191, %cst_102 [1] : vector<16x128xf32> to vector<16xf32>
    %193 = vector.shape_cast %192 : vector<16xf32> to vector<16x1xf32>
    %cst_103 = arith.constant 6.250000e-02 : f32
    %194 = vector.broadcast %cst_103 : f32 to vector<16x1xf32>
    %195 = arith.mulf %193, %194 : vector<16x1xf32>
    %cst_104 = arith.constant 9.99999974E-6 : f32
    %196 = vector.broadcast %cst_104 : f32 to vector<16x1xf32>
    %197 = arith.addf %195, %196 : vector<16x1xf32>
    %198 = math.rsqrt %197 : vector<16x1xf32>
    %199 = vector.broadcast %198 : vector<16x1xf32> to vector<16x128xf32>
    %200 = arith.mulf %188, %199 : vector<16x128xf32>
    %c1_105 = arith.constant 1 : index
    %c0_106 = arith.constant 0 : index
    %c0_107 = arith.constant 0 : index
    %201 = vector.load %arg8[%c1_105, %c0_106, %c0_107] : memref<2x24x16xf32, #tpu.memory_space<vmem>>, vector<1x24x16xf32>
    %202 = vector.shape_cast %201 : vector<1x24x16xf32> to vector<24x16xf32>
    %cst_108 = arith.constant dense<0.000000e+00> : vector<24x128xf32>
    %203 = tpu.matmul %202, %200, %cst_108 {dimension_numbers = #tpu.dot_dimension_numbers<[1], [0], [0], [1], [0, 0, 1, 1], [], []>} : vector<24x16xf32>, vector<16x128xf32>, vector<24x128xf32> -> vector<24x128xf32>
    %c1_109 = arith.constant 1 : index
    %c0_110 = arith.constant 0 : index
    %c0_111 = arith.constant 0 : index
    %204 = vector.load %arg9[%c1_109, %c0_110, %c0_111] : memref<2x24x1xf32, #tpu.memory_space<vmem>>, vector<1x24x1xf32>
    %205 = vector.shape_cast %204 : vector<1x24x1xf32> to vector<24x1xf32>
    %206 = vector.broadcast %205 : vector<24x1xf32> to vector<24x128xf32>
    %207 = arith.addf %203, %206 : vector<24x128xf32>
    %208 = vector.extract_strided_slice %207 {offsets = [0, 0], sizes = [8, 128], strides = [1, 1]} : vector<24x128xf32> to vector<8x128xf32>
    %cst_112 = arith.constant 1.000000e+00 : f32
    %209 = vector.broadcast %cst_112 : f32 to vector<1x128xf32>
    %cst_113 = arith.constant 0.000000e+00 : f32
    %210 = vector.broadcast %cst_113 : f32 to vector<7x128xf32>
    %211 = vector.extract_strided_slice %207 {offsets = [8, 0], sizes = [8, 128], strides = [1, 1]} : vector<24x128xf32> to vector<8x128xf32>
    %cst_114 = arith.constant 0.000000e+00 : f32
    %212 = vector.broadcast %cst_114 : f32 to vector<7x128xf32>
    %213 = vector.extract_strided_slice %207 {offsets = [16, 0], sizes = [8, 128], strides = [1, 1]} : vector<24x128xf32> to vector<8x128xf32>
    %214 = vector.broadcast %6 : vector<1x128xf32> to vector<8x128xf32>
    %215 = arith.mulf %213, %214 : vector<8x128xf32>
    %216 = tpu.concatenate %208, %209, %210, %211, %8, %212, %215 in 0 : vector<8x128xf32>, vector<1x128xf32>, vector<7x128xf32>, vector<8x128xf32>, vector<1x128xf32>, vector<7x128xf32>, vector<8x128xf32> -> vector<40x128xf32>
    %c0_115 = arith.constant 0 : index
    %c0_116 = arith.constant 0 : index
    %217 = vector.load %arg19[%c0_115, %c0_116] : memref<40x128xf32, #tpu.memory_space<vmem>>, vector<40x128xf32>
    tpu.vector_store %arg19[%c0_115, %c0_116], %216 {strides = array<i32>} : memref<40x128xf32, #tpu.memory_space<vmem>>, vector<40x128xf32>,
    %c1_117 = arith.constant 1 : index
    %c0_118 = arith.constant 0 : index
    %c0_119 = arith.constant 0 : index
    %218 = vector.load %arg10[%c1_117, %c0_118, %c0_119] : memref<2x16x8xf32, #tpu.memory_space<vmem>>, vector<1x16x8xf32>
    %219 = vector.shape_cast %218 : vector<1x16x8xf32> to vector<16x8xf32>
    %c1_120 = arith.constant 1 : index
    %c0_121 = arith.constant 0 : index
    %c0_122 = arith.constant 0 : index
    %220 = vector.load %arg11[%c1_120, %c0_121, %c0_122] : memref<2x16x1xf32, #tpu.memory_space<vmem>>, vector<1x16x1xf32>
    %221 = vector.shape_cast %220 : vector<1x16x1xf32> to vector<16x1xf32>
    %c1_123 = arith.constant 1 : index
    %c0_124 = arith.constant 0 : index
    %c0_125 = arith.constant 0 : index
    %222 = vector.load %arg12[%c1_123, %c0_124, %c0_125] : memref<2x16x16xf32, #tpu.memory_space<vmem>>, vector<1x16x16xf32>
    %223 = vector.shape_cast %222 : vector<1x16x16xf32> to vector<16x16xf32>
    %c1_126 = arith.constant 1 : index
    %c0_127 = arith.constant 0 : index
    %c0_128 = arith.constant 0 : index
    %224 = vector.load %arg13[%c1_126, %c0_127, %c0_128] : memref<2x16x1xf32, #tpu.memory_space<vmem>>, vector<1x16x1xf32>
    %225 = vector.shape_cast %224 : vector<1x16x1xf32> to vector<16x1xf32>
    %c0_i32_129 = arith.constant 0 : i32
    %c128_i32_130 = arith.constant 128 : i32
    %226 = arith.muli %c0_i32_129, %c128_i32_130 : i32
    %227 = tpu.assume_multiple %226, 128 : i32
    %c0_131 = arith.constant 0 : index
    %228 = arith.index_cast %227 : i32 to index
    %229 = vector.load %arg19[%c0_131, %228] : memref<40x128xf32, #tpu.memory_space<vmem>>, vector<16x128xf32>
    %cst_132 = arith.constant -1.000000e+30 : f32
    %230 = vector.broadcast %cst_132 : f32 to vector<1x128xf32>
    %cst_133 = arith.constant 0.000000e+00 : f32
    %231 = vector.broadcast %cst_133 : f32 to vector<1x128xf32>
    %cst_134 = arith.constant 0.000000e+00 : f32
    %232 = vector.broadcast %cst_134 : f32 to vector<8x128xf32>
    %c0_i32_135 = arith.constant 0 : i32
    %c128_i32_136 = arith.constant 128 : i32
    %233 = arith.muli %c0_i32_135, %c128_i32_136 : i32
    %234 = tpu.assume_multiple %233, 128 : i32
    %c16_137 = arith.constant 16 : index
    %235 = arith.index_cast %234 : i32 to index
    %236 = vector.load %arg19[%c16_137, %235] : memref<40x128xf32, #tpu.memory_space<vmem>>, vector<16x128xf32>
    %c32_138 = arith.constant 32 : index
    %237 = arith.index_cast %234 : i32 to index
    %238 = vector.load %arg19[%c32_138, %237] : memref<40x128xf32, #tpu.memory_space<vmem>>, vector<8x128xf32>
    %cst_139 = arith.constant dense<0.000000e+00> : vector<128x128xf32>
    %239 = tpu.matmul %236, %229, %cst_139 {dimension_numbers = #tpu.dot_dimension_numbers<[0], [0], [1], [1], [0, 1, 1, 1], [], []>} : vector<16x128xf32>, vector<16x128xf32>, vector<128x128xf32> -> vector<128x128xf32>
    %cst_140 = arith.constant dense<0xFF800000> : vector<128xf32>
    %240 = vector.multi_reduction <maximumf>, %239, %cst_140 [0] : vector<128x128xf32> to vector<128xf32>
    %241 = vector.shape_cast %240 : vector<128xf32> to vector<1x128xf32>
    %242 = arith.maximumf %230, %241 : vector<1x128xf32>
    %243 = arith.subf %230, %242 : vector<1x128xf32>
    %244 = math.exp %243 : vector<1x128xf32>
    %245 = vector.broadcast %242 : vector<1x128xf32> to vector<128x128xf32>
    %246 = arith.subf %239, %245 : vector<128x128xf32>
    %247 = math.exp %246 : vector<128x128xf32>
    %248 = arith.mulf %244, %231 : vector<1x128xf32>
    %cst_141 = arith.constant dense<0.000000e+00> : vector<128xf32>
    %249 = vector.multi_reduction <add>, %247, %cst_141 [0] : vector<128x128xf32> to vector<128xf32>
    %250 = vector.shape_cast %249 : vector<128xf32> to vector<1x128xf32>
    %251 = arith.addf %248, %250 : vector<1x128xf32>
    %cst_142 = arith.constant dense<0.000000e+00> : vector<8x128xf32>
    %252 = tpu.matmul %238, %247, %cst_142 {dimension_numbers = #tpu.dot_dimension_numbers<[1], [0], [0], [1], [0, 0, 1, 1], [], []>} : vector<8x128xf32>, vector<128x128xf32>, vector<8x128xf32> -> vector<8x128xf32>
    %253 = vector.broadcast %244 : vector<1x128xf32> to vector<8x128xf32>
    %254 = arith.mulf %253, %232 : vector<8x128xf32>
    %255 = arith.addf %254, %252 : vector<8x128xf32>
    %c1_i32_143 = arith.constant 1 : i32
    %256 = tpu.reciprocal %251 : vector<1x128xf32> -> vector<1x128xf32>
    %257 = vector.broadcast %256 : vector<1x128xf32> to vector<8x128xf32>
    %258 = arith.mulf %255, %257 : vector<8x128xf32>
    %cst_144 = arith.constant 0.000000e+00 : f32
    %259 = vector.broadcast %cst_144 : f32 to vector<8x128xf32>
    %260 = arith.maximumf %258, %259 : vector<8x128xf32>
    %c0_145 = arith.constant 0 : index
    %c0_146 = arith.constant 0 : index
    %261 = arith.index_cast %227 : i32 to index
    %262 = vector.load %arg2[%c0_145, %c0_146, %261] : memref<1x1x128xf32, #tpu.memory_space<vmem>>, vector<1x1x128xf32>
    %263 = vector.shape_cast %262 : vector<1x1x128xf32> to vector<1x128xf32>
    %cst_147 = arith.constant dense<0.000000e+00> : vector<16x128xf32>
    %264 = tpu.matmul %219, %260, %cst_147 {dimension_numbers = #tpu.dot_dimension_numbers<[1], [0], [0], [1], [0, 0, 1, 1], [], []>} : vector<16x8xf32>, vector<8x128xf32>, vector<16x128xf32> -> vector<16x128xf32>
    %265 = vector.broadcast %221 : vector<16x1xf32> to vector<16x128xf32>
    %266 = arith.addf %264, %265 : vector<16x128xf32>
    %267 = vector.broadcast %263 : vector<1x128xf32> to vector<16x128xf32>
    %268 = arith.mulf %266, %267 : vector<16x128xf32>
    %cst_148 = arith.constant 1.000000e+00 : f32
    %269 = vector.broadcast %cst_148 : f32 to vector<16x128xf32>
    %270 = arith.mulf %269, %268 : vector<16x128xf32>
    %c0_149 = arith.constant 0 : index
    %271 = arith.index_cast %227 : i32 to index
    %272 = vector.load %arg18[%c0_149, %271] : memref<16x128xf32, #tpu.memory_space<vmem>>, vector<16x128xf32>
    %273 = arith.addf %270, %272 : vector<16x128xf32>
    %cst_150 = arith.constant dense<0.000000e+00> : vector<16x128xf32>
    %274 = tpu.matmul %223, %273, %cst_150 {dimension_numbers = #tpu.dot_dimension_numbers<[1], [0], [0], [1], [0, 0, 1, 1], [], []>} : vector<16x16xf32>, vector<16x128xf32>, vector<16x128xf32> -> vector<16x128xf32>
    %275 = vector.broadcast %225 : vector<16x1xf32> to vector<16x128xf32>
    %276 = arith.addf %274, %275 : vector<16x128xf32>
    %c0_151 = arith.constant 0 : index
    %c0_152 = arith.constant 0 : index
    %277 = arith.index_cast %227 : i32 to index
    %278 = vector.load %arg17[%c0_151, %c0_152, %277] : memref<1x16x128xf32, #tpu.memory_space<vmem>>, vector<1x16x128xf32>
    %279 = vector.shape_cast %278 : vector<1x16x128xf32> to vector<16x128xf32>
    %280 = arith.addf %279, %276 : vector<16x128xf32>
    %281 = vector.broadcast %263 : vector<1x128xf32> to vector<16x128xf32>
    %282 = arith.mulf %280, %281 : vector<16x128xf32>
    %c0_153 = arith.constant 0 : index
    %c0_154 = arith.constant 0 : index
    %283 = arith.index_cast %227 : i32 to index
    %284 = vector.load %arg17[%c0_153, %c0_154, %283] : memref<1x16x128xf32, #tpu.memory_space<vmem>>, vector<1x16x128xf32>
    %285 = vector.shape_cast %284 : vector<1x16x128xf32> to vector<16x128xf32>
    %286 = vector.shape_cast %282 : vector<16x128xf32> to vector<1x16x128xf32>
    tpu.vector_store %arg17[%c0_153, %c0_154, %283], %286 {strides = array<i32>} : memref<1x16x128xf32, #tpu.memory_space<vmem>>, vector<1x16x128xf32>,
    %c1_i32_155 = arith.constant 1 : i32
    %c0_156 = arith.constant 0 : index
    %c0_157 = arith.constant 0 : index
    %287 = vector.load %arg14[%c0_156, %c0_157] : memref<4x16xf32, #tpu.memory_space<vmem>>, vector<4x16xf32>
    %c0_158 = arith.constant 0 : index
    %c0_159 = arith.constant 0 : index
    %c0_160 = arith.constant 0 : index
    %288 = vector.load %arg17[%c0_158, %c0_159, %c0_160] : memref<1x16x128xf32, #tpu.memory_space<vmem>>, vector<1x16x128xf32>
    %289 = vector.shape_cast %288 : vector<1x16x128xf32> to vector<16x128xf32>
    %cst_161 = arith.constant dense<0.000000e+00> : vector<4x128xf32>
    %290 = tpu.matmul %287, %289, %cst_161 {dimension_numbers = #tpu.dot_dimension_numbers<[1], [0], [0], [1], [0, 0, 1, 1], [], []>} : vector<4x16xf32>, vector<16x128xf32>, vector<4x128xf32> -> vector<4x128xf32>
    %c0_162 = arith.constant 0 : index
    %c0_163 = arith.constant 0 : index
    %291 = vector.load %arg15[%c0_162, %c0_163] : memref<4x1xf32, #tpu.memory_space<vmem>>, vector<4x1xf32>
    %292 = vector.broadcast %291 : vector<4x1xf32> to vector<4x128xf32>
    %293 = arith.addf %290, %292 : vector<4x128xf32>
    %294 = vector.broadcast %6 : vector<1x128xf32> to vector<4x128xf32>
    %295 = arith.mulf %293, %294 : vector<4x128xf32>
    %c0_164 = arith.constant 0 : index
    %c0_165 = arith.constant 0 : index
    %c0_166 = arith.constant 0 : index
    %296 = vector.load %arg16[%c0_164, %c0_165, %c0_166] : memref<1x4x128xf32, #tpu.memory_space<vmem>>, vector<1x4x128xf32>
    %297 = vector.shape_cast %296 : vector<1x4x128xf32> to vector<4x128xf32>
    %298 = vector.shape_cast %295 : vector<4x128xf32> to vector<1x4x128xf32>
    tpu.vector_store %arg16[%c0_164, %c0_165, %c0_166], %298 {strides = array<i32>} : memref<1x4x128xf32, #tpu.memory_space<vmem>>, vector<1x4x128xf32>,
    return
  }
  func.func @transform_0(%arg0: i32) -> (i32, i32, i32) {
    %c0_i32 = arith.constant 0 : i32
    %c0_i32_0 = arith.constant 0 : i32
    %c0_i32_1 = arith.constant 0 : i32
    return %arg0, %c0_i32, %c0_i32_0 : i32, i32, i32
  }
  func.func @transform_1(%arg0: i32) -> (i32, i32, i32) {
    %c0_i32 = arith.constant 0 : i32
    %c0_i32_0 = arith.constant 0 : i32
    %c0_i32_1 = arith.constant 0 : i32
    return %arg0, %c0_i32, %c0_i32_0 : i32, i32, i32
  }
  func.func @transform_2(%arg0: i32) -> (i32, i32, i32) {
    %c0_i32 = arith.constant 0 : i32
    %c0_i32_0 = arith.constant 0 : i32
    %c0_i32_1 = arith.constant 0 : i32
    return %arg0, %c0_i32, %c0_i32_0 : i32, i32, i32
  }
  func.func @transform_3(%arg0: i32) -> (i32, i32) {
    %c0_i32 = arith.constant 0 : i32
    %c0_i32_0 = arith.constant 0 : i32
    %c0_i32_1 = arith.constant 0 : i32
    return %c0_i32, %c0_i32_0 : i32, i32
  }
  func.func @transform_4(%arg0: i32) -> (i32, i32) {
    %c0_i32 = arith.constant 0 : i32
    %c0_i32_0 = arith.constant 0 : i32
    %c0_i32_1 = arith.constant 0 : i32
    return %c0_i32, %c0_i32_0 : i32, i32
  }
  func.func @transform_5(%arg0: i32) -> (i32, i32, i32) {
    %c0_i32 = arith.constant 0 : i32
    %c0_i32_0 = arith.constant 0 : i32
    %c0_i32_1 = arith.constant 0 : i32
    %c0_i32_2 = arith.constant 0 : i32
    return %c0_i32, %c0_i32_0, %c0_i32_1 : i32, i32, i32
  }
  func.func @transform_6(%arg0: i32) -> (i32, i32, i32) {
    %c0_i32 = arith.constant 0 : i32
    %c0_i32_0 = arith.constant 0 : i32
    %c0_i32_1 = arith.constant 0 : i32
    %c0_i32_2 = arith.constant 0 : i32
    return %c0_i32, %c0_i32_0, %c0_i32_1 : i32, i32, i32
  }
  func.func @transform_7(%arg0: i32) -> (i32, i32, i32) {
    %c0_i32 = arith.constant 0 : i32
    %c0_i32_0 = arith.constant 0 : i32
    %c0_i32_1 = arith.constant 0 : i32
    %c0_i32_2 = arith.constant 0 : i32
    return %c0_i32, %c0_i32_0, %c0_i32_1 : i32, i32, i32
  }
  func.func @transform_8(%arg0: i32) -> (i32, i32, i32) {
    %c0_i32 = arith.constant 0 : i32
    %c0_i32_0 = arith.constant 0 : i32
    %c0_i32_1 = arith.constant 0 : i32
    %c0_i32_2 = arith.constant 0 : i32
    return %c0_i32, %c0_i32_0, %c0_i32_1 : i32, i32, i32
  }
  func.func @transform_9(%arg0: i32) -> (i32, i32, i32) {
    %c0_i32 = arith.constant 0 : i32
    %c0_i32_0 = arith.constant 0 : i32
    %c0_i32_1 = arith.constant 0 : i32
    %c0_i32_2 = arith.constant 0 : i32
    return %c0_i32, %c0_i32_0, %c0_i32_1 : i32, i32, i32
  }
  func.func @transform_10(%arg0: i32) -> (i32, i32, i32) {
    %c0_i32 = arith.constant 0 : i32
    %c0_i32_0 = arith.constant 0 : i32
    %c0_i32_1 = arith.constant 0 : i32
    %c0_i32_2 = arith.constant 0 : i32
    return %c0_i32, %c0_i32_0, %c0_i32_1 : i32, i32, i32
  }
  func.func @transform_11(%arg0: i32) -> (i32, i32, i32) {
    %c0_i32 = arith.constant 0 : i32
    %c0_i32_0 = arith.constant 0 : i32
    %c0_i32_1 = arith.constant 0 : i32
    %c0_i32_2 = arith.constant 0 : i32
    return %c0_i32, %c0_i32_0, %c0_i32_1 : i32, i32, i32
  }
  func.func @transform_12(%arg0: i32) -> (i32, i32, i32) {
    %c0_i32 = arith.constant 0 : i32
    %c0_i32_0 = arith.constant 0 : i32
    %c0_i32_1 = arith.constant 0 : i32
    %c0_i32_2 = arith.constant 0 : i32
    return %c0_i32, %c0_i32_0, %c0_i32_1 : i32, i32, i32
  }
  func.func @transform_13(%arg0: i32) -> (i32, i32) {
    %c0_i32 = arith.constant 0 : i32
    %c0_i32_0 = arith.constant 0 : i32
    %c0_i32_1 = arith.constant 0 : i32
    return %c0_i32, %c0_i32_0 : i32, i32
  }
  func.func @transform_14(%arg0: i32) -> (i32, i32) {
    %c0_i32 = arith.constant 0 : i32
    %c0_i32_0 = arith.constant 0 : i32
    %c0_i32_1 = arith.constant 0 : i32
    return %c0_i32, %c0_i32_0 : i32, i32
  }
  func.func @transform_15(%arg0: i32) -> (i32, i32, i32) {
    %c0_i32 = arith.constant 0 : i32
    %c0_i32_0 = arith.constant 0 : i32
    %c0_i32_1 = arith.constant 0 : i32
    return %arg0, %c0_i32, %c0_i32_0 : i32, i32, i32
  }
  func.func @transform_16(%arg0: i32) -> (i32, i32, i32) {
    %c0_i32 = arith.constant 0 : i32
    %c0_i32_0 = arith.constant 0 : i32
    %c0_i32_1 = arith.constant 0 : i32
    return %arg0, %c0_i32, %c0_i32_0 : i32, i32, i32
  }
}

</mosaic_0001>

<llo_original>
// kernel: tpu_custom_call.1
$region0: #{tpu_custom_call.1}
  #allocation0 [shape = 'u32[]', space=smem, size = 0x4, offset = 0x4, fixed_abs, tag = 'smem constant byte address 0x4 - core index']
  #allocation1 [shape = 'u32[144,128]{1,0:T(1,128)}', space=vmem, size = 0x12000, scoped, tag = 'internal scratch']
  #allocation2 [shape = 'f32[16,128]{1,0:T(8,128)}', space=vmem, size = 0x2000, scoped, tag = 'scratch operand']
  #allocation3 [shape = 'f32[40,128]{1,0:T(8,128)}', space=vmem, size = 0x5000, scoped, tag = 'scratch operand']
  %s0 = inlined_call_operand.vmem [shape: f32[2,8,128], index: 0, kind: input, shape index: {}]
  %s1 = inlined_call_operand.vmem [shape: f32[2,1,128], index: 1, kind: input, shape index: {}]
  %s2 = inlined_call_operand.vmem [shape: f32[2,1,128], index: 2, kind: input, shape index: {}]
  %s3 = inlined_call_operand.vmem [shape: f32[16,8], index: 3, kind: input, shape index: {}]
  %s4 = inlined_call_operand.vmem [shape: f32[16,1], index: 4, kind: input, shape index: {}]
  %s5 = inlined_call_operand.vmem [shape: f32[2,16,48], index: 5, kind: input, shape index: {}]
  %s6 = inlined_call_operand.vmem [shape: f32[2,16,1], index: 6, kind: input, shape index: {}]
  %s7 = inlined_call_operand.vmem [shape: f32[2,24,16], index: 7, kind: input, shape index: {}]
  %s8 = inlined_call_operand.vmem [shape: f32[2,24,1], index: 8, kind: input, shape index: {}]
  %s9 = inlined_call_operand.vmem [shape: f32[2,16,8], index: 9, kind: input, shape index: {}]
  %s10 = inlined_call_operand.vmem [shape: f32[2,16,1], index: 10, kind: input, shape index: {}]
  %s11 = inlined_call_operand.vmem [shape: f32[2,16,16], index: 11, kind: input, shape index: {}]
  %s12 = inlined_call_operand.vmem [shape: f32[2,16,1], index: 12, kind: input, shape index: {}]
  %s13 = inlined_call_operand.vmem [shape: f32[4,16], index: 13, kind: input, shape index: {}]
  %s14 = inlined_call_operand.vmem [shape: f32[4,1], index: 14, kind: input, shape index: {}]
  %s15 = inlined_call_operand.hbm [shape: f32[2,4,128], index: 15, kind: output, shape index: {0}]
  %s16 = inlined_call_operand.hbm [shape: f32[2,16,128], index: 16, kind: output, shape index: {1}]
  %17 = xla_tuple %s15, %s16
  %s18 = sld [smem:[#allocation0]]
  $region101: #{tpu_custom_call.1} parent=0
    _
  %s20 = ssub.s32 1, %s18
  %s21 = scalar_select 0, %s20, %s18
  $region1: #{tpu_custom_call.1} parent=0
    #allocation4 [shape = 'u8[4096]{0}', space=vmem, size = 0x1000, scoped, tag = 'output window, operand 0']
    #allocation5 [shape = 's32[2]{0}', space=sflag, size = 0x8, scoped, tag = 'scoped memory for tpu_custom_call.1']
    #allocation6 [shape = 'u8[16384]{0}', space=vmem, size = 0x4000, scoped, tag = 'output window, operand 1']
    #allocation7 [shape = 's32[2]{0}', space=sflag, size = 0x8, scoped, tag = 'scoped memory for tpu_custom_call.1']
    %22 = vsyncpa [#allocation5], 0
    %s23 = scalar_lea.sflag [#allocation5], 1
    %24 = vsyncpa %s23, 0
    %25 = vsyncpa [#allocation7], 0
    %s26 = scalar_lea.sflag [#allocation7], 1
    %27 = vsyncpa %s26, 0
    loop: start=0, step=1, limit=4
    $region2: #{tpu_custom_call.1} parent=1 // loop_pre_header
      _
    $region3: #{tpu_custom_call.1} parent=1 // loop_header
      %s29 = sphi 0, %s33
      %p30 = scmp.ge.s32.totalorder %s29, 4
      %s39 = sphi 0, %s41
      %s42 = sphi 0, %s39
      %s43 = sphi 0, %s42
      %s59 = sphi 0, %s43
      %s65 = sphi 0, %s67
      %s68 = sphi 0, %s65
      %s69 = sphi 0, %s68
      %s85 = sphi 0, %s69
      %s91 = sphi 0, %s93
      %s94 = sphi 0, %s91
      %s95 = sphi 0, %s94
      %s111 = sphi 0, %s95
      %s115 = sphi 0, %s115
      %s117 = sphi 0, %s115
      %s118 = sphi 0, %s117
      %s132 = sphi 0, %s118
      %s136 = sphi 0, %s136
      %s138 = sphi 0, %s136
      %s139 = sphi 0, %s138
      %s153 = sphi 0, %s139
      %s157 = sphi 0, %s157
      %s159 = sphi 0, %s157
      %s160 = sphi 0, %s159
      %s174 = sphi 0, %s160
      %s178 = sphi 0, %s178
      %s180 = sphi 0, %s178
      %s181 = sphi 0, %s180
      %s195 = sphi 0, %s181
      %s199 = sphi 0, %s199
      %s201 = sphi 0, %s199
      %s202 = sphi 0, %s201
      %s216 = sphi 0, %s202
      %s220 = sphi 0, %s220
      %s222 = sphi 0, %s220
      %s223 = sphi 0, %s222
      %s237 = sphi 0, %s223
      %s241 = sphi 0, %s241
      %s243 = sphi 0, %s241
      %s244 = sphi 0, %s243
      %s258 = sphi 0, %s244
      %s262 = sphi 0, %s262
      %s264 = sphi 0, %s262
      %s265 = sphi 0, %s264
      %s279 = sphi 0, %s265
      %s283 = sphi 0, %s283
      %s285 = sphi 0, %s283
      %s286 = sphi 0, %s285
      %s300 = sphi 0, %s286
      %s304 = sphi 0, %s304
      %s306 = sphi 0, %s304
      %s307 = sphi 0, %s306
      %s321 = sphi 0, %s307
      %s325 = sphi 0, %s325
      %s327 = sphi 0, %s325
      %s328 = sphi 0, %s327
      %s342 = sphi 0, %s328
      %s346 = sphi 0, %s346
      %s348 = sphi 0, %s346
      %s349 = sphi 0, %s348
      %s363 = sphi 0, %s349
      %s369 = sphi 0, %s371
      %s372 = sphi 0, %s369
      %s373 = sphi 0, %s372
      %s389 = sphi 0, %s373
      %s395 = sphi 0, %s397
      %s398 = sphi 0, %s395
      %s399 = sphi 0, %s398
      %s415 = sphi 0, %s399
    $region4: #{tpu_custom_call.1} parent=1 // loop_header_branch
      %32 = sbr.rel (%p30) target = $region8
    $region5: #{tpu_custom_call.1} parent=1 // loop_body
      %s34 = ssub.s32 %s29, 1
      %s35 = ssub.s32 %s29, 2
      %s36 = sadd.s32 %s29, 1
      %s37 = ssub.s32 %s29, %s36
      %p38 = scmp.eq.s32.totalorder %s37, 0
      %s40 = sadd.s32 %s39, 1
      %s41 = scalar_select %p38, %s39, %s40
      %p44 = pneg %p38
      %p45 = scmp.eq.s32.totalorder %s29, 1
      %p46 = por %p44, %p45
      %p47 = scmp.ne.s32.totalorder %s39, %s42
      %p48 = scmp.eq.s32.totalorder %s29, 0
      %p49 = por %p47, %p48
      %p50 = scmp.ne.s32.totalorder %s39, %s42
      %p51 = scmp.eq.s32.totalorder %s34, 1
      %p52 = por %p50, %p51
      %p53 = scmp.ne.s32.totalorder %s42, %s43
      %p54 = scmp.eq.s32.totalorder %s34, 0
      %p55 = por %p53, %p54
      %p56 = scmp.ne.s32.totalorder %s42, %s43
      %p57 = scmp.eq.s32.totalorder %s35, 1
      %p58 = por %p56, %p57
      %p60 = scmp.ne.s32.totalorder %s43, %s59
      %p61 = scmp.eq.s32.totalorder %s35, 0
      %p62 = por %p60, %p61
      %s63 = ssub.s32 %s29, %s36
      %p64 = scmp.eq.s32.totalorder %s63, 0
      %s66 = sadd.s32 %s65, 1
      %s67 = scalar_select %p64, %s65, %s66
      %p70 = pneg %p64
      %p71 = scmp.eq.s32.totalorder %s29, 1
      %p72 = por %p70, %p71
      %p73 = scmp.ne.s32.totalorder %s65, %s68
      %p74 = scmp.eq.s32.totalorder %s29, 0
      %p75 = por %p73, %p74
      %p76 = scmp.ne.s32.totalorder %s65, %s68
      %p77 = scmp.eq.s32.totalorder %s34, 1
      %p78 = por %p76, %p77
      %p79 = scmp.ne.s32.totalorder %s68, %s69
      %p80 = scmp.eq.s32.totalorder %s34, 0
      %p81 = por %p79, %p80
      %p82 = scmp.ne.s32.totalorder %s68, %s69
      %p83 = scmp.eq.s32.totalorder %s35, 1
      %p84 = por %p82, %p83
      %p86 = scmp.ne.s32.totalorder %s69, %s85
      %p87 = scmp.eq.s32.totalorder %s35, 0
      %p88 = por %p86, %p87
      %s89 = ssub.s32 %s29, %s36
      %p90 = scmp.eq.s32.totalorder %s89, 0
      %s92 = sadd.s32 %s91, 1
      %s93 = scalar_select %p90, %s91, %s92
      %p96 = pneg %p90
      %p97 = scmp.eq.s32.totalorder %s29, 1
      %p98 = por %p96, %p97
      %p99 = scmp.ne.s32.totalorder %s91, %s94
      %p100 = scmp.eq.s32.totalorder %s29, 0
      %p101 = por %p99, %p100
      %p102 = scmp.ne.s32.totalorder %s91, %s94
      %p103 = scmp.eq.s32.totalorder %s34, 1
      %p104 = por %p102, %p103
      %p105 = scmp.ne.s32.totalorder %s94, %s95
      %p106 = scmp.eq.s32.totalorder %s34, 0
      %p107 = por %p105, %p106
      %p108 = scmp.ne.s32.totalorder %s94, %s95
      %p109 = scmp.eq.s32.totalorder %s35, 1
      %p110 = por %p108, %p109
      %p112 = scmp.ne.s32.totalorder %s95, %s111
      %p113 = scmp.eq.s32.totalorder %s35, 0
      %p114 = por %p112, %p113
      %s116 = sadd.s32 %s115, 1
      %p119 = scmp.eq.s32.totalorder %s29, 1
      %p120 = scmp.ne.s32.totalorder %s115, %s117
      %p121 = scmp.eq.s32.totalorder %s29, 0
      %p122 = por %p120, %p121
      %p123 = scmp.ne.s32.totalorder %s115, %s117
      %p124 = scmp.eq.s32.totalorder %s34, 1
      %p125 = por %p123, %p124
      %p126 = scmp.ne.s32.totalorder %s117, %s118
      %p127 = scmp.eq.s32.totalorder %s34, 0
      %p128 = por %p126, %p127
      %p129 = scmp.ne.s32.totalorder %s117, %s118
      %p130 = scmp.eq.s32.totalorder %s35, 1
      %p131 = por %p129, %p130
      %p133 = scmp.ne.s32.totalorder %s118, %s132
      %p134 = scmp.eq.s32.totalorder %s35, 0
      %p135 = por %p133, %p134
      %s137 = sadd.s32 %s136, 1
      %p140 = scmp.eq.s32.totalorder %s29, 1
      %p141 = scmp.ne.s32.totalorder %s136, %s138
      %p142 = scmp.eq.s32.totalorder %s29, 0
      %p143 = por %p141, %p142
      %p144 = scmp.ne.s32.totalorder %s136, %s138
      %p145 = scmp.eq.s32.totalorder %s34, 1
      %p146 = por %p144, %p145
      %p147 = scmp.ne.s32.totalorder %s138, %s139
      %p148 = scmp.eq.s32.totalorder %s34, 0
      %p149 = por %p147, %p148
      %p150 = scmp.ne.s32.totalorder %s138, %s139
      %p151 = scmp.eq.s32.totalorder %s35, 1
      %p152 = por %p150, %p151
      %p154 = scmp.ne.s32.totalorder %s139, %s153
      %p155 = scmp.eq.s32.totalorder %s35, 0
      %p156 = por %p154, %p155
      %s158 = sadd.s32 %s157, 1
      %p161 = scmp.eq.s32.totalorder %s29, 1
      %p162 = scmp.ne.s32.totalorder %s157, %s159
      %p163 = scmp.eq.s32.totalorder %s29, 0
      %p164 = por %p162, %p163
      %p165 = scmp.ne.s32.totalorder %s157, %s159
      %p166 = scmp.eq.s32.totalorder %s34, 1
      %p167 = por %p165, %p166
      %p168 = scmp.ne.s32.totalorder %s159, %s160
      %p169 = scmp.eq.s32.totalorder %s34, 0
      %p170 = por %p168, %p169
      %p171 = scmp.ne.s32.totalorder %s159, %s160
      %p172 = scmp.eq.s32.totalorder %s35, 1
      %p173 = por %p171, %p172
      %p175 = scmp.ne.s32.totalorder %s160, %s174
      %p176 = scmp.eq.s32.totalorder %s35, 0
      %p177 = por %p175, %p176
      %s179 = sadd.s32 %s178, 1
      %p182 = scmp.eq.s32.totalorder %s29, 1
      %p183 = scmp.ne.s32.totalorder %s178, %s180
      %p184 = scmp.eq.s32.totalorder %s29, 0
      %p185 = por %p183, %p184
      %p186 = scmp.ne.s32.totalorder %s178, %s180
      %p187 = scmp.eq.s32.totalorder %s34, 1
      %p188 = por %p186, %p187
      %p189 = scmp.ne.s32.totalorder %s180, %s181
      %p190 = scmp.eq.s32.totalorder %s34, 0
      %p191 = por %p189, %p190
      %p192 = scmp.ne.s32.totalorder %s180, %s181
      %p193 = scmp.eq.s32.totalorder %s35, 1
      %p194 = por %p192, %p193
      %p196 = scmp.ne.s32.totalorder %s181, %s195
      %p197 = scmp.eq.s32.totalorder %s35, 0
      %p198 = por %p196, %p197
      %s200 = sadd.s32 %s199, 1
      %p203 = scmp.eq.s32.totalorder %s29, 1
      %p204 = scmp.ne.s32.totalorder %s199, %s201
      %p205 = scmp.eq.s32.totalorder %s29, 0
      %p206 = por %p204, %p205
      %p207 = scmp.ne.s32.totalorder %s199, %s201
      %p208 = scmp.eq.s32.totalorder %s34, 1
      %p209 = por %p207, %p208
      %p210 = scmp.ne.s32.totalorder %s201, %s202
      %p211 = scmp.eq.s32.totalorder %s34, 0
      %p212 = por %p210, %p211
      %p213 = scmp.ne.s32.totalorder %s201, %s202
      %p214 = scmp.eq.s32.totalorder %s35, 1
      %p215 = por %p213, %p214
      %p217 = scmp.ne.s32.totalorder %s202, %s216
      %p218 = scmp.eq.s32.totalorder %s35, 0
      %p219 = por %p217, %p218
      %s221 = sadd.s32 %s220, 1
      %p224 = scmp.eq.s32.totalorder %s29, 1
      %p225 = scmp.ne.s32.totalorder %s220, %s222
      %p226 = scmp.eq.s32.totalorder %s29, 0
      %p227 = por %p225, %p226
      %p228 = scmp.ne.s32.totalorder %s220, %s222
      %p229 = scmp.eq.s32.totalorder %s34, 1
      %p230 = por %p228, %p229
      %p231 = scmp.ne.s32.totalorder %s222, %s223
      %p232 = scmp.eq.s32.totalorder %s34, 0
      %p233 = por %p231, %p232
      %p234 = scmp.ne.s32.totalorder %s222, %s223
      %p235 = scmp.eq.s32.totalorder %s35, 1
      %p236 = por %p234, %p235
      %p238 = scmp.ne.s32.totalorder %s223, %s237
      %p239 = scmp.eq.s32.totalorder %s35, 0
      %p240 = por %p238, %p239
      %s242 = sadd.s32 %s241, 1
      %p245 = scmp.eq.s32.totalorder %s29, 1
      %p246 = scmp.ne.s32.totalorder %s241, %s243
      %p247 = scmp.eq.s32.totalorder %s29, 0
      %p248 = por %p246, %p247
      %p249 = scmp.ne.s32.totalorder %s241, %s243
      %p250 = scmp.eq.s32.totalorder %s34, 1
      %p251 = por %p249, %p250
      %p252 = scmp.ne.s32.totalorder %s243, %s244
      %p253 = scmp.eq.s32.totalorder %s34, 0
      %p254 = por %p252, %p253
      %p255 = scmp.ne.s32.totalorder %s243, %s244
      %p256 = scmp.eq.s32.totalorder %s35, 1
      %p257 = por %p255, %p256
      %p259 = scmp.ne.s32.totalorder %s244, %s258
      %p260 = scmp.eq.s32.totalorder %s35, 0
      %p261 = por %p259, %p260
      %s263 = sadd.s32 %s262, 1
      %p266 = scmp.eq.s32.totalorder %s29, 1
      %p267 = scmp.ne.s32.totalorder %s262, %s264
      %p268 = scmp.eq.s32.totalorder %s29, 0
      %p269 = por %p267, %p268
      %p270 = scmp.ne.s32.totalorder %s262, %s264
      %p271 = scmp.eq.s32.totalorder %s34, 1
      %p272 = por %p270, %p271
      %p273 = scmp.ne.s32.totalorder %s264, %s265
      %p274 = scmp.eq.s32.totalorder %s34, 0
      %p275 = por %p273, %p274
      %p276 = scmp.ne.s32.totalorder %s264, %s265
      %p277 = scmp.eq.s32.totalorder %s35, 1
      %p278 = por %p276, %p277
      %p280 = scmp.ne.s32.totalorder %s265, %s279
      %p281 = scmp.eq.s32.totalorder %s35, 0
      %p282 = por %p280, %p281
      %s284 = sadd.s32 %s283, 1
      %p287 = scmp.eq.s32.totalorder %s29, 1
      %p288 = scmp.ne.s32.totalorder %s283, %s285
      %p289 = scmp.eq.s32.totalorder %s29, 0
      %p290 = por %p288, %p289
      %p291 = scmp.ne.s32.totalorder %s283, %s285
      %p292 = scmp.eq.s32.totalorder %s34, 1
      %p293 = por %p291, %p292
      %p294 = scmp.ne.s32.totalorder %s285, %s286
      %p295 = scmp.eq.s32.totalorder %s34, 0
      %p296 = por %p294, %p295
      %p297 = scmp.ne.s32.totalorder %s285, %s286
      %p298 = scmp.eq.s32.totalorder %s35, 1
      %p299 = por %p297, %p298
      %p301 = scmp.ne.s32.totalorder %s286, %s300
      %p302 = scmp.eq.s32.totalorder %s35, 0
      %p303 = por %p301, %p302
      %s305 = sadd.s32 %s304, 1
      %p308 = scmp.eq.s32.totalorder %s29, 1
      %p309 = scmp.ne.s32.totalorder %s304, %s306
      %p310 = scmp.eq.s32.totalorder %s29, 0
      %p311 = por %p309, %p310
      %p312 = scmp.ne.s32.totalorder %s304, %s306
      %p313 = scmp.eq.s32.totalorder %s34, 1
      %p314 = por %p312, %p313
      %p315 = scmp.ne.s32.totalorder %s306, %s307
      %p316 = scmp.eq.s32.totalorder %s34, 0
      %p317 = por %p315, %p316
      %p318 = scmp.ne.s32.totalorder %s306, %s307
      %p319 = scmp.eq.s32.totalorder %s35, 1
      %p320 = por %p318, %p319
      %p322 = scmp.ne.s32.totalorder %s307, %s321
      %p323 = scmp.eq.s32.totalorder %s35, 0
      %p324 = por %p322, %p323
      %s326 = sadd.s32 %s325, 1
      %p329 = scmp.eq.s32.totalorder %s29, 1
      %p330 = scmp.ne.s32.totalorder %s325, %s327
      %p331 = scmp.eq.s32.totalorder %s29, 0
      %p332 = por %p330, %p331
      %p333 = scmp.ne.s32.totalorder %s325, %s327
      %p334 = scmp.eq.s32.totalorder %s34, 1
      %p335 = por %p333, %p334
      %p336 = scmp.ne.s32.totalorder %s327, %s328
      %p337 = scmp.eq.s32.totalorder %s34, 0
      %p338 = por %p336, %p337
      %p339 = scmp.ne.s32.totalorder %s327, %s328
      %p340 = scmp.eq.s32.totalorder %s35, 1
      %p341 = por %p339, %p340
      %p343 = scmp.ne.s32.totalorder %s328, %s342
      %p344 = scmp.eq.s32.totalorder %s35, 0
      %p345 = por %p343, %p344
      %s347 = sadd.s32 %s346, 1
      %p350 = scmp.eq.s32.totalorder %s29, 1
      %p351 = scmp.ne.s32.totalorder %s346, %s348
      %p352 = scmp.eq.s32.totalorder %s29, 0
      %p353 = por %p351, %p352
      %p354 = scmp.ne.s32.totalorder %s346, %s348
      %p355 = scmp.eq.s32.totalorder %s34, 1
      %p356 = por %p354, %p355
      %p357 = scmp.ne.s32.totalorder %s348, %s349
      %p358 = scmp.eq.s32.totalorder %s34, 0
      %p359 = por %p357, %p358
      %p360 = scmp.ne.s32.totalorder %s348, %s349
      %p361 = scmp.eq.s32.totalorder %s35, 1
      %p362 = por %p360, %p361
      %p364 = scmp.ne.s32.totalorder %s349, %s363
      %p365 = scmp.eq.s32.totalorder %s35, 0
      %p366 = por %p364, %p365
      %s367 = ssub.s32 %s29, %s36
      %p368 = scmp.eq.s32.totalorder %s367, 0
      %s370 = sadd.s32 %s369, 1
      %s371 = scalar_select %p368, %s369, %s370
      %p374 = pneg %p368
      %p375 = scmp.eq.s32.totalorder %s29, 1
      %p376 = por %p374, %p375
      %p377 = scmp.ne.s32.totalorder %s369, %s372
      %p378 = scmp.eq.s32.totalorder %s29, 0
      %p379 = por %p377, %p378
      %p380 = scmp.ne.s32.totalorder %s369, %s372
      %p381 = scmp.eq.s32.totalorder %s34, 1
      %p382 = por %p380, %p381
      %p383 = scmp.ne.s32.totalorder %s372, %s373
      %p384 = scmp.eq.s32.totalorder %s34, 0
      %p385 = por %p383, %p384
      %p386 = scmp.ne.s32.totalorder %s372, %s373
      %p387 = scmp.eq.s32.totalorder %s35, 1
      %p388 = por %p386, %p387
      %p390 = scmp.ne.s32.totalorder %s373, %s389
      %p391 = scmp.eq.s32.totalorder %s35, 0
      %p392 = por %p390, %p391
      %s393 = ssub.s32 %s29, %s36
      %p394 = scmp.eq.s32.totalorder %s393, 0
      %s396 = sadd.s32 %s395, 1
      %s397 = scalar_select %p394, %s395, %s396
      %p400 = pneg %p394
      %p401 = scmp.eq.s32.totalorder %s29, 1
      %p402 = por %p400, %p401
      %p403 = scmp.ne.s32.totalorder %s395, %s398
      %p404 = scmp.eq.s32.totalorder %s29, 0
      %p405 = por %p403, %p404
      %p406 = scmp.ne.s32.totalorder %s395, %s398
      %p407 = scmp.eq.s32.totalorder %s34, 1
      %p408 = por %p406, %p407
      %p409 = scmp.ne.s32.totalorder %s398, %s399
      %p410 = scmp.eq.s32.totalorder %s34, 0
      %p411 = por %p409, %p410
      %p412 = scmp.ne.s32.totalorder %s398, %s399
      %p413 = scmp.eq.s32.totalorder %s35, 1
      %p414 = por %p412, %p413
      %p416 = scmp.ne.s32.totalorder %s399, %s415
      %p417 = scmp.eq.s32.totalorder %s35, 0
      %p418 = por %p416, %p417
      %p419 = scmp.le.s32.totalorder 1, %s29
      %p420 = scmp.lt.s32.totalorder %s29, 3
      %p421 = pnand %p419, %p420
      %p422 = pneg %p421
      // Predicated region
      $region9: #{tpu_custom_call.1} parent=5 // pred_check
        _
      $region10: #{tpu_custom_call.1} parent=5 // pred_check_branch
        %424 = sbr.rel (%p421) target = $region12
      $region11: #{tpu_custom_call.1} parent=5 // pred_region
        %s425 = ssub.s32 %s29, 1
        // Predicated region
        $region13: #{tpu_custom_call.1} parent=11 // pred_check
          %p426 = pneg %p128
        $region14: #{tpu_custom_call.1} parent=11 // pred_check_branch
          %428 = sbr.rel (%p426) target = $region16
        $region15: #{tpu_custom_call.1} parent=11 // pred_region
          _
        $region16: #{tpu_custom_call.1} parent=11 // pred_fallthru
          _
        // Predicated region
        $region17: #{tpu_custom_call.1} parent=11 // pred_check
          %p429 = pneg %p149
        $region18: #{tpu_custom_call.1} parent=11 // pred_check_branch
          %431 = sbr.rel (%p429) target = $region20
        $region19: #{tpu_custom_call.1} parent=11 // pred_region
          _
        $region20: #{tpu_custom_call.1} parent=11 // pred_fallthru
          _
        // Predicated region
        $region21: #{tpu_custom_call.1} parent=11 // pred_check
          %p432 = pneg %p170
        $region22: #{tpu_custom_call.1} parent=11 // pred_check_branch
          %434 = sbr.rel (%p432) target = $region24
        $region23: #{tpu_custom_call.1} parent=11 // pred_region
          _
        $region24: #{tpu_custom_call.1} parent=11 // pred_fallthru
          _
        // Predicated region
        $region25: #{tpu_custom_call.1} parent=11 // pred_check
          %p435 = pneg %p191
        $region26: #{tpu_custom_call.1} parent=11 // pred_check_branch
          %437 = sbr.rel (%p435) target = $region28
        $region27: #{tpu_custom_call.1} parent=11 // pred_region
          _
        $region28: #{tpu_custom_call.1} parent=11 // pred_fallthru
          _
        // Predicated region
        $region29: #{tpu_custom_call.1} parent=11 // pred_check
          %p438 = pneg %p212
        $region30: #{tpu_custom_call.1} parent=11 // pred_check_branch
          %440 = sbr.rel (%p438) target = $region32
        $region31: #{tpu_custom_call.1} parent=11 // pred_region
          _
        $region32: #{tpu_custom_call.1} parent=11 // pred_fallthru
          _
        // Predicated region
        $region33: #{tpu_custom_call.1} parent=11 // pred_check
          %p441 = pneg %p233
        $region34: #{tpu_custom_call.1} parent=11 // pred_check_branch
          %443 = sbr.rel (%p441) target = $region36
        $region35: #{tpu_custom_call.1} parent=11 // pred_region
          _
        $region36: #{tpu_custom_call.1} parent=11 // pred_fallthru
          _
        // Predicated region
        $region37: #{tpu_custom_call.1} parent=11 // pred_check
          %p444 = pneg %p254
        $region38: #{tpu_custom_call.1} parent=11 // pred_check_branch
          %446 = sbr.rel (%p444) target = $region40
        $region39: #{tpu_custom_call.1} parent=11 // pred_region
          _
        $region40: #{tpu_custom_call.1} parent=11 // pred_fallthru
          _
        // Predicated region
        $region41: #{tpu_custom_call.1} parent=11 // pred_check
          %p447 = pneg %p275
        $region42: #{tpu_custom_call.1} parent=11 // pred_check_branch
          %449 = sbr.rel (%p447) target = $region44
        $region43: #{tpu_custom_call.1} parent=11 // pred_region
          _
        $region44: #{tpu_custom_call.1} parent=11 // pred_fallthru
          _
        // Predicated region
        $region45: #{tpu_custom_call.1} parent=11 // pred_check
          %p450 = pneg %p296
        $region46: #{tpu_custom_call.1} parent=11 // pred_check_branch
          %452 = sbr.rel (%p450) target = $region48
        $region47: #{tpu_custom_call.1} parent=11 // pred_region
          _
        $region48: #{tpu_custom_call.1} parent=11 // pred_fallthru
          _
        // Predicated region
        $region49: #{tpu_custom_call.1} parent=11 // pred_check
          %p453 = pneg %p317
        $region50: #{tpu_custom_call.1} parent=11 // pred_check_branch
          %455 = sbr.rel (%p453) target = $region52
        $region51: #{tpu_custom_call.1} parent=11 // pred_region
          _
        $region52: #{tpu_custom_call.1} parent=11 // pred_fallthru
          _
        // Predicated region
        $region53: #{tpu_custom_call.1} parent=11 // pred_check
          %p456 = pneg %p338
        $region54: #{tpu_custom_call.1} parent=11 // pred_check_branch
          %458 = sbr.rel (%p456) target = $region56
        $region55: #{tpu_custom_call.1} parent=11 // pred_region
          _
        $region56: #{tpu_custom_call.1} parent=11 // pred_fallthru
          _
        // Predicated region
        $region57: #{tpu_custom_call.1} parent=11 // pred_check
          %p459 = pneg %p359
        $region58: #{tpu_custom_call.1} parent=11 // pred_check_branch
          %461 = sbr.rel (%p459) target = $region60
        $region59: #{tpu_custom_call.1} parent=11 // pred_region
          _
        $region60: #{tpu_custom_call.1} parent=11 // pred_fallthru
          _
      $region12: #{tpu_custom_call.1} parent=5 // pred_fallthru
        _
      %p462 = scmp.lt.s32.totalorder %s29, 2
      // Predicated region
      $region61: #{tpu_custom_call.1} parent=5 // pred_check
        %p463 = pneg %p462
      $region62: #{tpu_custom_call.1} parent=5 // pred_check_branch
        %465 = sbr.rel (%p463) target = $region64
      $region63: #{tpu_custom_call.1} parent=5 // pred_region
        // Predicated region
        $region65: #{tpu_custom_call.1} parent=63 // pred_check
          %p466 = pneg %p49
        $region66: #{tpu_custom_call.1} parent=63 // pred_check_branch
          %468 = sbr.rel (%p466) target = $region68
        $region67: #{tpu_custom_call.1} parent=63 // pred_region
          %p469 = scmp.lt.s32.totalorder %s29, 1
          %s470 = scalar_select %p469, %s29, 1
          %s471 = smul.addr %s470, 8
          %s472 = scalar_lea.vmem %s0, %s471
        $region68: #{tpu_custom_call.1} parent=63 // pred_fallthru
          _
        // Predicated region
        $region69: #{tpu_custom_call.1} parent=63 // pred_check
          %p473 = pneg %p75
        $region70: #{tpu_custom_call.1} parent=63 // pred_check_branch
          %475 = sbr.rel (%p473) target = $region72
        $region71: #{tpu_custom_call.1} parent=63 // pred_region
          %p476 = scmp.lt.s32.totalorder %s29, 1
          %s477 = scalar_select %p476, %s29, 1
          %s478 = scalar_lea.vmem %s1, %s477
        $region72: #{tpu_custom_call.1} parent=63 // pred_fallthru
          _
        // Predicated region
        $region73: #{tpu_custom_call.1} parent=63 // pred_check
          %p479 = pneg %p101
        $region74: #{tpu_custom_call.1} parent=63 // pred_check_branch
          %481 = sbr.rel (%p479) target = $region76
        $region75: #{tpu_custom_call.1} parent=63 // pred_region
          %p482 = scmp.lt.s32.totalorder %s29, 1
          %s483 = scalar_select %p482, %s29, 1
          %s484 = scalar_lea.vmem %s2, %s483
        $region76: #{tpu_custom_call.1} parent=63 // pred_fallthru
          _
      $region64: #{tpu_custom_call.1} parent=5 // pred_fallthru
        _
      %p485 = scmp.le.s32.totalorder 1, %s29
      %p486 = scmp.lt.s32.totalorder %s29, 3
      %p487 = pnand %p485, %p486
      %p488 = pneg %p487
      // Predicated region
      $region77: #{tpu_custom_call.1} parent=5 // pred_check
        _
      $region78: #{tpu_custom_call.1} parent=5 // pred_check_branch
        %490 = sbr.rel (%p487) target = $region80
      $region79: #{tpu_custom_call.1} parent=5 // pred_region
        %s491 = ssub.s32 %s29, 1
        %p492 = scmp.lt.s32.totalorder %s34, 1
        %s493 = scalar_select %p492, %s34, 1
        %s494 = smul.addr %s493, 8
        %s495 = scalar_lea.vmem %s0, %s494
        %p496 = pneg %p55
        %p497 = pneg %p52
        %p498 = scmp.lt.s32.totalorder %s34, 1
        %s499 = scalar_select %p498, %s34, 1
        %s500 = scalar_lea.vmem %s1, %s499
        %p501 = pneg %p81
        %p502 = pneg %p78
        %p503 = scmp.lt.s32.totalorder %s34, 1
        %s504 = scalar_select %p503, %s34, 1
        %s505 = scalar_lea.vmem %s2, %s504
        %p506 = pneg %p107
        %p507 = pneg %p104
        %p508 = pneg %p128
        %p509 = pneg %p125
        %p510 = pneg %p149
        %p511 = pneg %p146
        %p512 = pneg %p170
        %p513 = pneg %p167
        %p514 = pneg %p191
        %p515 = pneg %p188
        %p516 = pneg %p212
        %p517 = pneg %p209
        %p518 = pneg %p233
        %p519 = pneg %p230
        %p520 = pneg %p254
        %p521 = pneg %p251
        %p522 = pneg %p275
        %p523 = pneg %p272
        %p524 = pneg %p296
        %p525 = pneg %p293
        %p526 = pneg %p317
        %p527 = pneg %p314
        %p528 = pneg %p338
        %p529 = pneg %p335
        %p530 = pneg %p359
        %p531 = pneg %p356
        %p532 = pneg %p385
        %p533 = pneg %p382
        %s534 = sand.u32 %s372, 1
        %s535 = scalar_lea.sflag [#allocation5], %s534
        %s536 = sand.u32 %s372, 1
        %s537 = smul.addr %s536, 4
        %s538 = scalar_lea.vmem [#allocation4], %s537
        %p539 = pneg %p411
        %p540 = pneg %p408
        %s541 = sand.u32 %s398, 1
        %s542 = scalar_lea.sflag [#allocation7], %s541
        %s543 = sand.u32 %s398, 1
        %s544 = smul.addr %s543, 16
        %s545 = scalar_lea.vmem [#allocation6], %s544
        %p546 = scmp.lt.s32.totalorder %s34, 1
        %s547 = scalar_select %p546, %s34, 1
        %s548 = smul.addr %s547, 8
        %s549 = scalar_lea.vmem %s0, %s548
        %p550 = scmp.lt.s32.totalorder %s34, 1
        %s551 = scalar_select %p550, %s34, 1
        %s552 = scalar_lea.vmem %s1, %s551
        %p553 = scmp.lt.s32.totalorder %s34, 1
        %s554 = scalar_select %p553, %s34, 1
        %s555 = scalar_lea.vmem %s2, %s554
        %v556 = vlaneseq
        %v557 = vand.u32 %v556, 127
        %vm558 = vcmp.lt.s32.totalorder %v557, 16
        %v559 = vsel %vm558, 1, 0
        %v560 = vcvt.s32.f32 %v559
        %v561 = vld [vmem:[%s552] sm:$0x1]
        %v562 = vld [vmem:[%s555] sm:$0x1]
        %v563 = vld [vmem:[%s3] sm:$0xff]
        %v564 = vld [vmem:[%s3 + $0x8] sm:$0xff]
        %v565 = vld [vmem:[%s549] sm:$0xff]
        %v566 = vld [vmem:[%s4] sm:$0xff]
        %v567 = vld [vmem:[%s4 + $0x8] sm:$0xff]
        %569 = vset.pattern.permute.xlu0 0
        %570 = vperm.xlu0 %569, %v566
        %v571 = vpop.permute.xlu0 %570
        %574 = vset.pattern.permute.xlu0 0
        %575 = vperm.xlu0 %574, %v567
        %v576 = vpop.permute.xlu0 %575
        %vm578 = vcmask 64512
        %v580 = vsel %vm578, %v563, 0
        %v583 = vsel %vm578, %v564, 0
        %585 = vmatprep.subr.mxu0 0.0
        %586 = vmatpush1.msra.mxu0 %v565
        %587 = vmatprep.subr.mxu0 0.0
        %588 = vmatpush1.msra.mxu0 0.0
        %589 = vmatprep.subr.mxu0 0.0
        %590 = vmatpush1.msra.mxu0 0.0
        %591 = vmatprep.subr.mxu0 0.0
        %592 = vmatpush1.msra.mxu0 0.0
        %593 = vmatprep.subr.mxu0 0.0
        %594 = vmatpush1.msra.mxu0 0.0
        %595 = vmatprep.subr.mxu0 0.0
        %596 = vmatpush1.msra.mxu0 0.0
        %597 = vmatprep.subr.mxu0 0.0
        %598 = vmatpush1.msra.mxu0 0.0
        %599 = vmatprep.subr.mxu0 0.0
        %600 = vmatpush1.msra.mxu0 0.0
        %601 = vmatprep.subr.mxu0 0.0
        %602 = vmatpush1.msra.mxu0 0.0
        %603 = vmatprep.subr.mxu0 0.0
        %604 = vmatpush1.msra.mxu0 0.0
        %605 = vmatprep.subr.mxu0 0.0
        %606 = vmatpush1.msra.mxu0 0.0
        %607 = vmatprep.subr.mxu0 0.0
        %608 = vmatpush1.msra.mxu0 0.0
        %609 = vmatprep.subr.mxu0 0.0
        %610 = vmatpush1.msra.mxu0 0.0
        %611 = vmatprep.subr.mxu0 0.0
        %612 = vmatpush1.msra.mxu0 0.0
        %613 = vmatprep.subr.mxu0 0.0
        %614 = vmatpush1.msra.mxu0 0.0
        %615 = vmatprep.subr.mxu0 0.0
        %616 = vmatpush1.msra.mxu0 0.0
        %617 = vmatprep.subr.mxu0 0.0
        %618 = vmatpush1.msra.mxu0 0.0
        %619 = vmatprep.subr.mxu0 0.0
        %620 = vmatpush1.msra.mxu0 0.0
        %621 = vmatprep.subr.mxu0 0.0
        %622 = vmatpush1.msra.mxu0 0.0
        %623 = vmatprep.subr.mxu0 0.0
        %624 = vmatpush1.msra.mxu0 0.0
        %625 = vmatprep.subr.mxu0 0.0
        %626 = vmatpush1.msra.mxu0 0.0
        %627 = vmatprep.subr.mxu0 0.0
        %628 = vmatpush1.msra.mxu0 0.0
        %629 = vmatprep.subr.mxu0 0.0
        %630 = vmatpush1.msra.mxu0 0.0
        %631 = vmatprep.subr.mxu0 0.0
        %632 = vmatpush1.msra.mxu0 0.0
        %633 = vmatprep.subr.mxu0 0.0
        %634 = vmatpush1.msra.mxu0 0.0
        %635 = vmatprep.subr.mxu0 0.0
        %636 = vmatpush1.msra.mxu0 0.0
        %637 = vmatprep.subr.mxu0 0.0
        %638 = vmatpush1.msra.mxu0 0.0
        %639 = vmatprep.subr.mxu0 0.0
        %640 = vmatpush1.msra.mxu0 0.0
        %641 = vmatprep.subr.mxu0 0.0
        %642 = vmatpush1.msra.mxu0 0.0
        %643 = vmatprep.subr.mxu0 0.0
        %644 = vmatpush1.msra.mxu0 0.0
        %645 = vmatprep.subr.mxu0 0.0
        %646 = vmatpush1.msra.mxu0 0.0
        %647 = vmatprep.subr.mxu0 0.0
        %648 = vmatpush1.msra.mxu0 0.0
        %649 = vmatprep.mubr.f32.mxu0 0.0
        %650 = vmatmul.mubr.f32.gmra.mrb[0].mxu0 %v580
        %v651 = vpop.f32.mrb[0].mxu0
        %v652 = vadd.f32 %v571, %v651
        %v653 = vpop.f32.mrb[0].mxu0
        %654 = vmatprep.mubr.f32.mxu0 0.0
        %655 = vmatmul.mubr.f32.gmra.mrb[0].mxu0 %v583
        %v656 = vpop.f32.mrb[0].mxu0
        %v657 = vadd.f32 %v576, %v656
        %v658 = vpop.f32.mrb[0].mxu0
        %659 = vdwg.mxu0
        %v660 = vmul.f32 %v652, %v560
        %v661 = vmul.f32 %v657, %v560
        %662 = vst [vmem:[%s545] sm:$0xff] %v660
        %663 = vst [vmem:[%s545 + $0x8] sm:$0xff] %v661
        %v664 = vld [vmem:[%s545] sm:$0xff]
        %v665 = vld [vmem:[%s545 + $0x8] sm:$0xff]
        %vm666 = vcmp.ge.s32.totalorder %v557, 1
        %667 = vrot.lane.b32.xlu0 %v664, 1
        %v668 = vpop.permute.xlu0 %667
        %669 = vrot.lane.b32.xlu0 %v665, 1
        %v670 = vpop.permute.xlu0 %669
        %v671 = vsel %vm666, 1, 0
        %vm672 = vcmp.eq.s32.totalorder %v671, 1
        %v673 = vsel %vm672, %v668, 0.0
        %v674 = vsel %vm672, %v670, 0.0
        %vm675 = vcmp.lt.s32.totalorder %v557, 127
        %676 = vrot.lane.b32.xlu0 %v664, 127
        %v677 = vpop.permute.xlu0 %676
        %678 = vrot.lane.b32.xlu0 %v665, 127
        %v679 = vpop.permute.xlu0 %678
        %v680 = vsel %vm675, 1, 0
        %vm681 = vcmp.eq.s32.totalorder %v680, 1
        %v682 = vsel %vm681, %v677, 0.0
        %v683 = vsel %vm681, %v679, 0.0
        %v684 = vld [vmem:[%s5] sm:$0xff]
        %v685 = vld [vmem:[%s5 + $0x8] sm:$0xff]
        %v686 = vld [vmem:[%s6] sm:$0xff]
        %v687 = vld [vmem:[%s6 + $0x8] sm:$0xff]
        %689 = vset.pattern.permute.xlu0 0
        %690 = vperm.xlu0 %689, %v686
        %v691 = vpop.permute.xlu0 %690
        %694 = vset.pattern.permute.xlu0 0
        %695 = vperm.xlu0 %694, %v687
        %v696 = vpop.permute.xlu0 %695
        %vm698 = vcmask 392192
        %v700 = vsel %vm698, %v684, 0
        %v703 = vsel %vm698, %v685, 0
        %705 = vmatprep.subr.mxu0 0.0
        %706 = vmatpush1.msra.mxu0 %v673
        %707 = vmatprep.subr.mxu0 0.0
        %708 = vmatpush1.msra.mxu0 %v674
        %709 = vmatprep.subr.mxu0 0.0
        %710 = vmatpush1.msra.mxu0 %v664
        %711 = vmatprep.subr.mxu0 0.0
        %712 = vmatpush1.msra.mxu0 %v665
        %713 = vmatprep.subr.mxu0 0.0
        %714 = vmatpush1.msra.mxu0 %v682
        %715 = vmatprep.subr.mxu0 0.0
        %716 = vmatpush1.msra.mxu0 %v683
        %717 = vmatprep.subr.mxu0 0.0
        %718 = vmatpush1.msra.mxu0 0.0
        %719 = vmatprep.subr.mxu0 0.0
        %720 = vmatpush1.msra.mxu0 0.0
        %721 = vmatprep.subr.mxu0 0.0
        %722 = vmatpush1.msra.mxu0 0.0
        %723 = vmatprep.subr.mxu0 0.0
        %724 = vmatpush1.msra.mxu0 0.0
        %725 = vmatprep.subr.mxu0 0.0
        %726 = vmatpush1.msra.mxu0 0.0
        %727 = vmatprep.subr.mxu0 0.0
        %728 = vmatpush1.msra.mxu0 0.0
        %729 = vmatprep.subr.mxu0 0.0
        %730 = vmatpush1.msra.mxu0 0.0
        %731 = vmatprep.subr.mxu0 0.0
        %732 = vmatpush1.msra.mxu0 0.0
        %733 = vmatprep.subr.mxu0 0.0
        %734 = vmatpush1.msra.mxu0 0.0
        %735 = vmatprep.subr.mxu0 0.0
        %736 = vmatpush1.msra.mxu0 0.0
        %737 = vmatprep.subr.mxu0 0.0
        %738 = vmatpush1.msra.mxu0 0.0
        %739 = vmatprep.subr.mxu0 0.0
        %740 = vmatpush1.msra.mxu0 0.0
        %741 = vmatprep.subr.mxu0 0.0
        %742 = vmatpush1.msra.mxu0 0.0
        %743 = vmatprep.subr.mxu0 0.0
        %744 = vmatpush1.msra.mxu0 0.0
        %745 = vmatprep.subr.mxu0 0.0
        %746 = vmatpush1.msra.mxu0 0.0
        %747 = vmatprep.subr.mxu0 0.0
        %748 = vmatpush1.msra.mxu0 0.0
        %749 = vmatprep.subr.mxu0 0.0
        %750 = vmatpush1.msra.mxu0 0.0
        %751 = vmatprep.subr.mxu0 0.0
        %752 = vmatpush1.msra.mxu0 0.0
        %753 = vmatprep.subr.mxu0 0.0
        %754 = vmatpush1.msra.mxu0 0.0
        %755 = vmatprep.subr.mxu0 0.0
        %756 = vmatpush1.msra.mxu0 0.0
        %757 = vmatprep.subr.mxu0 0.0
        %758 = vmatpush1.msra.mxu0 0.0
        %759 = vmatprep.subr.mxu0 0.0
        %760 = vmatpush1.msra.mxu0 0.0
        %761 = vmatprep.subr.mxu0 0.0
        %762 = vmatpush1.msra.mxu0 0.0
        %763 = vmatprep.subr.mxu0 0.0
        %764 = vmatpush1.msra.mxu0 0.0
        %765 = vmatprep.subr.mxu0 0.0
        %766 = vmatpush1.msra.mxu0 0.0
        %767 = vmatprep.subr.mxu0 0.0
        %768 = vmatpush1.msra.mxu0 0.0
        %769 = vmatprep.mubr.f32.mxu0 0.0
        %770 = vmatmul.mubr.f32.gmra.mrb[0].mxu0 %v700
        %v771 = vpop.f32.mrb[0].mxu0
        %v772 = vadd.f32 %v691, %v771
        %v773 = vpop.f32.mrb[0].mxu0
        %774 = vmatprep.mubr.f32.mxu0 0.0
        %775 = vmatmul.mubr.f32.gmra.mrb[0].mxu0 %v703
        %v776 = vpop.f32.mrb[0].mxu0
        %v777 = vadd.f32 %v696, %v776
        %v778 = vpop.f32.mrb[0].mxu0
        %779 = vdwg.mxu0
        %v780 = vmax.f32 %v772, 0.0
        %v781 = vmax.f32 %v777, 0.0
        %782 = vst [vmem:[#allocation2] sm:$0xff] %v780
        %783 = vst [vmem:[#allocation2 + $0x8] sm:$0xff] %v781
        %v784 = vmul.f32 %v780, %v560
        %v785 = vmul.f32 %v781, %v560
        %786 = vadd.xlane.f32.xlu0 %v784
        %v787 = vpop.xlane.xlu0 %786
        %788 = vadd.xlane.f32.xlu0 %v785
        %v789 = vpop.xlane.xlu0 %788
        %v790 = vmul.f32 %v787, 0.0625
        %v791 = vmul.f32 %v789, 0.0625
        %v792 = vsub.f32 %v780, %v790
        %v793 = vsub.f32 %v781, %v791
        %v794 = vmul.f32 %v792, %v792
        %v795 = vmul.f32 %v793, %v793
        %v796 = vmul.f32 %v794, %v560
        %v797 = vmul.f32 %v795, %v560
        %798 = vadd.xlane.f32.xlu0 %v796
        %v799 = vpop.xlane.xlu0 %798
        %800 = vadd.xlane.f32.xlu0 %v797
        %v801 = vpop.xlane.xlu0 %800
        %v802 = vmul.f32 %v799, 0.0625
        %v803 = vmul.f32 %v801, 0.0625
        %v804 = vadd.f32 %v802, 1e-05
        %v805 = vadd.f32 %v803, 1e-05
        %v806 = vrsqrt.pop %v804
        %v807 = vrsqrt.pop %v805
        %v808 = vmul.f32 %v792, %v806
        %v809 = vmul.f32 %v793, %v807
        %v810 = vld [vmem:[%s7] sm:$0xff]
        %v811 = vld [vmem:[%s7 + $0x8] sm:$0xff]
        %v812 = vld [vmem:[%s7 + $0x10] sm:$0xff]
        %v813 = vld [vmem:[%s8] sm:$0xff]
        %v814 = vld [vmem:[%s8 + $0x8] sm:$0xff]
        %v815 = vld [vmem:[%s8 + $0x10] sm:$0xff]
        %817 = vset.pattern.permute.xlu0 0
        %818 = vperm.xlu0 %817, %v813
        %v819 = vpop.permute.xlu0 %818
        %822 = vset.pattern.permute.xlu0 0
        %823 = vperm.xlu0 %822, %v814
        %v824 = vpop.permute.xlu0 %823
        %827 = vset.pattern.permute.xlu0 0
        %828 = vperm.xlu0 %827, %v815
        %v829 = vpop.permute.xlu0 %828
        %vm831 = vcmask 130048
        %v833 = vsel %vm831, %v810, 0
        %v836 = vsel %vm831, %v811, 0
        %v839 = vsel %vm831, %v812, 0
        %841 = vmatprep.subr.mxu0 0.0
        %842 = vmatpush1.msra.mxu0 %v808
        %843 = vmatprep.subr.mxu0 0.0
        %844 = vmatpush1.msra.mxu0 %v809
        %845 = vmatprep.subr.mxu0 0.0
        %846 = vmatpush1.msra.mxu0 0.0
        %847 = vmatprep.subr.mxu0 0.0
        %848 = vmatpush1.msra.mxu0 0.0
        %849 = vmatprep.subr.mxu0 0.0
        %850 = vmatpush1.msra.mxu0 0.0
        %851 = vmatprep.subr.mxu0 0.0
        %852 = vmatpush1.msra.mxu0 0.0
        %853 = vmatprep.subr.mxu0 0.0
        %854 = vmatpush1.msra.mxu0 0.0
        %855 = vmatprep.subr.mxu0 0.0
        %856 = vmatpush1.msra.mxu0 0.0
        %857 = vmatprep.subr.mxu0 0.0
        %858 = vmatpush1.msra.mxu0 0.0
        %859 = vmatprep.subr.mxu0 0.0
        %860 = vmatpush1.msra.mxu0 0.0
        %861 = vmatprep.subr.mxu0 0.0
        %862 = vmatpush1.msra.mxu0 0.0
        %863 = vmatprep.subr.mxu0 0.0
        %864 = vmatpush1.msra.mxu0 0.0
        %865 = vmatprep.subr.mxu0 0.0
        %866 = vmatpush1.msra.mxu0 0.0
        %867 = vmatprep.subr.mxu0 0.0
        %868 = vmatpush1.msra.mxu0 0.0
        %869 = vmatprep.subr.mxu0 0.0
        %870 = vmatpush1.msra.mxu0 0.0
        %871 = vmatprep.subr.mxu0 0.0
        %872 = vmatpush1.msra.mxu0 0.0
        %873 = vmatprep.subr.mxu0 0.0
        %874 = vmatpush1.msra.mxu0 0.0
        %875 = vmatprep.subr.mxu0 0.0
        %876 = vmatpush1.msra.mxu0 0.0
        %877 = vmatprep.subr.mxu0 0.0
        %878 = vmatpush1.msra.mxu0 0.0
        %879 = vmatprep.subr.mxu0 0.0
        %880 = vmatpush1.msra.mxu0 0.0
        %881 = vmatprep.subr.mxu0 0.0
        %882 = vmatpush1.msra.mxu0 0.0
        %883 = vmatprep.subr.mxu0 0.0
        %884 = vmatpush1.msra.mxu0 0.0
        %885 = vmatprep.subr.mxu0 0.0
        %886 = vmatpush1.msra.mxu0 0.0
        %887 = vmatprep.subr.mxu0 0.0
        %888 = vmatpush1.msra.mxu0 0.0
        %889 = vmatprep.subr.mxu0 0.0
        %890 = vmatpush1.msra.mxu0 0.0
        %891 = vmatprep.subr.mxu0 0.0
        %892 = vmatpush1.msra.mxu0 0.0
        %893 = vmatprep.subr.mxu0 0.0
        %894 = vmatpush1.msra.mxu0 0.0
        %895 = vmatprep.subr.mxu0 0.0
        %896 = vmatpush1.msra.mxu0 0.0
        %897 = vmatprep.subr.mxu0 0.0
        %898 = vmatpush1.msra.mxu0 0.0
        %899 = vmatprep.subr.mxu0 0.0
        %900 = vmatpush1.msra.mxu0 0.0
        %901 = vmatprep.subr.mxu0 0.0
        %902 = vmatpush1.msra.mxu0 0.0
        %903 = vmatprep.subr.mxu0 0.0
        %904 = vmatpush1.msra.mxu0 0.0
        %905 = vmatprep.mubr.f32.mxu0 0.0
        %906 = vmatmul.mubr.f32.gmra.mrb[0].mxu0 %v833
        %v907 = vpop.f32.mrb[0].mxu0
        %v908 = vadd.f32 %v819, %v907
        %v909 = vpop.f32.mrb[0].mxu0
        %910 = vmatprep.mubr.f32.mxu0 0.0
        %911 = vmatmul.mubr.f32.gmra.mrb[0].mxu0 %v836
        %v912 = vpop.f32.mrb[0].mxu0
        %v913 = vadd.f32 %v824, %v912
        %v914 = vpop.f32.mrb[0].mxu0
        %915 = vmatprep.mubr.f32.mxu0 0.0
        %916 = vmatmul.mubr.f32.gmra.mrb[0].mxu0 %v839
        %v917 = vpop.f32.mrb[0].mxu0
        %v918 = vadd.f32 %v829, %v917
        %v919 = vpop.f32.mrb[0].mxu0
        %920 = vdwg.mxu0
        %v922 = vlaneseq
        %v923 = vshrl.u32 %v922, 7
        %v924 = vsub.s32 0, %v923
        %v925 = vrot.slane %v561, %v924
        %v927 = vmul.f32 %v918, %v925
        %vm928 = vcmask 1040384
        %v929 = vsel %vm928, 1.0, 0.0
        %v930 = vsel %vm928, %v562, 0.0
        %931 = vst [vmem:[#allocation3] sm:$0xff] %v908
        %932 = vst [vmem:[#allocation3 + $0x8] sm:$0xff] %v929
        %933 = vst [vmem:[#allocation3 + $0x10] sm:$0xff] %v913
        %934 = vst [vmem:[#allocation3 + $0x18] sm:$0xff] %v930
        %935 = vst [vmem:[#allocation3 + $0x20] sm:$0xff] %v927
        %v936 = vld [vmem:[%s9] sm:$0xff]
        %v937 = vld [vmem:[%s9 + $0x8] sm:$0xff]
        %v938 = vld [vmem:[%s10] sm:$0xff]
        %v939 = vld [vmem:[%s10 + $0x8] sm:$0xff]
        %v940 = vld [vmem:[%s11] sm:$0xff]
        %v941 = vld [vmem:[%s11 + $0x8] sm:$0xff]
        %v942 = vld [vmem:[%s12] sm:$0xff]
        %v943 = vld [vmem:[%s12 + $0x8] sm:$0xff]
        %v944 = vld [vmem:[#allocation3] sm:$0xff]
        %v945 = vld [vmem:[#allocation3 + $0x8] sm:$0xff]
        %v946 = vld [vmem:[#allocation3 + $0x10] sm:$0xff]
        %v947 = vld [vmem:[#allocation3 + $0x18] sm:$0xff]
        %v948 = vld [vmem:[#allocation3 + $0x20] sm:$0xff]
        %949 = vxpose.xlu0.b32.start [1/16] %v946, 128
        %950 = vxpose.xlu0.b32.cont [2/16] %v947, 128
        %951 = vxpose.xlu0.b32.cont [3/16] 0.0, 128
        %952 = vxpose.xlu0.b32.cont [4/16] 0.0, 128
        %953 = vxpose.xlu0.b32.cont [5/16] 0.0, 128
        %954 = vxpose.xlu0.b32.cont [6/16] 0.0, 128
        %955 = vxpose.xlu0.b32.cont [7/16] 0.0, 128
        %956 = vxpose.xlu0.b32.cont [8/16] 0.0, 128
        %957 = vxpose.xlu0.b32.cont [9/16] 0.0, 128
        %958 = vxpose.xlu0.b32.cont [10/16] 0.0, 128
        %959 = vxpose.xlu0.b32.cont [11/16] 0.0, 128
        %960 = vxpose.xlu0.b32.cont [12/16] 0.0, 128
        %961 = vxpose.xlu0.b32.cont [13/16] 0.0, 128
        %962 = vxpose.xlu0.b32.cont [14/16] 0.0, 128
        %963 = vxpose.xlu0.b32.cont [15/16] 0.0, 128
        %964 = vxpose.xlu0.b32.end [16/16] 0.0, 128
        %v965 = vpop.trf.xlu0
        %v966 = vpop.trf.xlu0
        %v967 = vpop.trf.xlu0
        %v968 = vpop.trf.xlu0
        %v969 = vpop.trf.xlu0
        %v970 = vpop.trf.xlu0
        %v971 = vpop.trf.xlu0
        %v972 = vpop.trf.xlu0
        %v973 = vpop.trf.xlu0
        %v974 = vpop.trf.xlu0
        %v975 = vpop.trf.xlu0
        %v976 = vpop.trf.xlu0
        %v977 = vpop.trf.xlu0
        %v978 = vpop.trf.xlu0
        %v979 = vpop.trf.xlu0
        %v980 = vpop.trf.xlu0
        %v982 = vsel %vm831, %v965, 0
        %v985 = vsel %vm831, %v966, 0
        %v988 = vsel %vm831, %v967, 0
        %v991 = vsel %vm831, %v968, 0
        %v994 = vsel %vm831, %v969, 0
        %v997 = vsel %vm831, %v970, 0
        %v1000 = vsel %vm831, %v971, 0
        %v1003 = vsel %vm831, %v972, 0
        %v1006 = vsel %vm831, %v973, 0
        %v1009 = vsel %vm831, %v974, 0
        %v1012 = vsel %vm831, %v975, 0
        %v1015 = vsel %vm831, %v976, 0
        %v1018 = vsel %vm831, %v977, 0
        %v1021 = vsel %vm831, %v978, 0
        %v1024 = vsel %vm831, %v979, 0
        %v1027 = vsel %vm831, %v980, 0
        %1029 = vmatprep.subr.mxu0 0.0
        %1030 = vmatpush1.msra.mxu0 %v944
        %1031 = vmatprep.subr.mxu0 0.0
        %1032 = vmatpush1.msra.mxu0 %v945
        %1033 = vmatprep.subr.mxu0 0.0
        %1034 = vmatpush1.msra.mxu0 0.0
        %1035 = vmatprep.subr.mxu0 0.0
        %1036 = vmatpush1.msra.mxu0 0.0
        %1037 = vmatprep.subr.mxu0 0.0
        %1038 = vmatpush1.msra.mxu0 0.0
        %1039 = vmatprep.subr.mxu0 0.0
        %1040 = vmatpush1.msra.mxu0 0.0
        %1041 = vmatprep.subr.mxu0 0.0
        %1042 = vmatpush1.msra.mxu0 0.0
        %1043 = vmatprep.subr.mxu0 0.0
        %1044 = vmatpush1.msra.mxu0 0.0
        %1045 = vmatprep.subr.mxu0 0.0
        %1046 = vmatpush1.msra.mxu0 0.0
        %1047 = vmatprep.subr.mxu0 0.0
        %1048 = vmatpush1.msra.mxu0 0.0
        %1049 = vmatprep.subr.mxu0 0.0
        %1050 = vmatpush1.msra.mxu0 0.0
        %1051 = vmatprep.subr.mxu0 0.0
        %1052 = vmatpush1.msra.mxu0 0.0
        %1053 = vmatprep.subr.mxu0 0.0
        %1054 = vmatpush1.msra.mxu0 0.0
        %1055 = vmatprep.subr.mxu0 0.0
        %1056 = vmatpush1.msra.mxu0 0.0
        %1057 = vmatprep.subr.mxu0 0.0
        %1058 = vmatpush1.msra.mxu0 0.0
        %1059 = vmatprep.subr.mxu0 0.0
        %1060 = vmatpush1.msra.mxu0 0.0
        %1061 = vmatprep.subr.mxu0 0.0
        %1062 = vmatpush1.msra.mxu0 0.0
        %1063 = vmatprep.subr.mxu0 0.0
        %1064 = vmatpush1.msra.mxu0 0.0
        %1065 = vmatprep.subr.mxu0 0.0
        %1066 = vmatpush1.msra.mxu0 0.0
        %1067 = vmatprep.subr.mxu0 0.0
        %1068 = vmatpush1.msra.mxu0 0.0
        %1069 = vmatprep.subr.mxu0 0.0
        %1070 = vmatpush1.msra.mxu0 0.0
        %1071 = vmatprep.subr.mxu0 0.0
        %1072 = vmatpush1.msra.mxu0 0.0
        %1073 = vmatprep.subr.mxu0 0.0
        %1074 = vmatpush1.msra.mxu0 0.0
        %1075 = vmatprep.subr.mxu0 0.0
        %1076 = vmatpush1.msra.mxu0 0.0
        %1077 = vmatprep.subr.mxu0 0.0
        %1078 = vmatpush1.msra.mxu0 0.0
        %1079 = vmatprep.subr.mxu0 0.0
        %1080 = vmatpush1.msra.mxu0 0.0
        %1081 = vmatprep.subr.mxu0 0.0
        %1082 = vmatpush1.msra.mxu0 0.0
        %1083 = vmatprep.subr.mxu0 0.0
        %1084 = vmatpush1.msra.mxu0 0.0
        %1085 = vmatprep.subr.mxu0 0.0
        %1086 = vmatpush1.msra.mxu0 0.0
        %1087 = vmatprep.subr.mxu0 0.0
        %1088 = vmatpush1.msra.mxu0 0.0
        %1089 = vmatprep.subr.mxu0 0.0
        %1090 = vmatpush1.msra.mxu0 0.0
        %1091 = vmatprep.subr.mxu0 0.0
        %1092 = vmatpush1.msra.mxu0 0.0
        %1093 = vmatprep.mubr.f32.mxu0 0.0
        %1094 = vmatmul.mubr.f32.gmra.mrb[0].mxu0 %v982
        %v1095 = vpop.f32.mrb[0].mxu0
        %v1096 = vadd.f32 0.0, %v1095
        %v1097 = vpop.f32.mrb[0].mxu0
        %1098 = vmatprep.mubr.f32.mxu0 0.0
        %1099 = vmatmul.mubr.f32.gmra.mrb[0].mxu0 %v985
        %v1100 = vpop.f32.mrb[0].mxu0
        %v1101 = vadd.f32 0.0, %v1100
        %v1102 = vpop.f32.mrb[0].mxu0
        %1103 = vmatprep.mubr.f32.mxu0 0.0
        %1104 = vmatmul.mubr.f32.gmra.mrb[0].mxu0 %v988
        %v1105 = vpop.f32.mrb[0].mxu0
        %v1106 = vadd.f32 0.0, %v1105
        %v1107 = vpop.f32.mrb[0].mxu0
        %1108 = vmatprep.mubr.f32.mxu0 0.0
        %1109 = vmatmul.mubr.f32.gmra.mrb[0].mxu0 %v991
        %v1110 = vpop.f32.mrb[0].mxu0
        %v1111 = vadd.f32 0.0, %v1110
        %v1112 = vpop.f32.mrb[0].mxu0
        %1113 = vmatprep.mubr.f32.mxu0 0.0
        %1114 = vmatmul.mubr.f32.gmra.mrb[0].mxu0 %v994
        %v1115 = vpop.f32.mrb[0].mxu0
        %v1116 = vadd.f32 0.0, %v1115
        %v1117 = vpop.f32.mrb[0].mxu0
        %1118 = vmatprep.mubr.f32.mxu0 0.0
        %1119 = vmatmul.mubr.f32.gmra.mrb[0].mxu0 %v997
        %v1120 = vpop.f32.mrb[0].mxu0
        %v1121 = vadd.f32 0.0, %v1120
        %v1122 = vpop.f32.mrb[0].mxu0
        %1123 = vmatprep.mubr.f32.mxu0 0.0
        %1124 = vmatmul.mubr.f32.gmra.mrb[0].mxu0 %v1000
        %v1125 = vpop.f32.mrb[0].mxu0
        %v1126 = vadd.f32 0.0, %v1125
        %v1127 = vpop.f32.mrb[0].mxu0
        %1128 = vmatprep.mubr.f32.mxu0 0.0
        %1129 = vmatmul.mubr.f32.gmra.mrb[0].mxu0 %v1003
        %v1130 = vpop.f32.mrb[0].mxu0
        %v1131 = vadd.f32 0.0, %v1130
        %v1132 = vpop.f32.mrb[0].mxu0
        %1133 = vmatprep.mubr.f32.mxu0 0.0
        %1134 = vmatmul.mubr.f32.gmra.mrb[0].mxu0 %v1006
        %v1135 = vpop.f32.mrb[0].mxu0
        %v1136 = vadd.f32 0.0, %v1135
        %v1137 = vpop.f32.mrb[0].mxu0
        %1138 = vmatprep.mubr.f32.mxu0 0.0
        %1139 = vmatmul.mubr.f32.gmra.mrb[0].mxu0 %v1009
        %v1140 = vpop.f32.mrb[0].mxu0
        %v1141 = vadd.f32 0.0, %v1140
        %v1142 = vpop.f32.mrb[0].mxu0
        %1143 = vmatprep.mubr.f32.mxu0 0.0
        %1144 = vmatmul.mubr.f32.gmra.mrb[0].mxu0 %v1012
        %v1145 = vpop.f32.mrb[0].mxu0
        %v1146 = vadd.f32 0.0, %v1145
        %v1147 = vpop.f32.mrb[0].mxu0
        %1148 = vmatprep.mubr.f32.mxu0 0.0
        %1149 = vmatmul.mubr.f32.gmra.mrb[0].mxu0 %v1015
        %v1150 = vpop.f32.mrb[0].mxu0
        %v1151 = vadd.f32 0.0, %v1150
        %v1152 = vpop.f32.mrb[0].mxu0
        %1153 = vmatprep.mubr.f32.mxu0 0.0
        %1154 = vmatmul.mubr.f32.gmra.mrb[0].mxu0 %v1018
        %v1155 = vpop.f32.mrb[0].mxu0
        %v1156 = vadd.f32 0.0, %v1155
        %v1157 = vpop.f32.mrb[0].mxu0
        %1158 = vmatprep.mubr.f32.mxu0 0.0
        %1159 = vmatmul.mubr.f32.gmra.mrb[0].mxu0 %v1021
        %v1160 = vpop.f32.mrb[0].mxu0
        %v1161 = vadd.f32 0.0, %v1160
        %v1162 = vpop.f32.mrb[0].mxu0
        %1163 = vmatprep.mubr.f32.mxu0 0.0
        %1164 = vmatmul.mubr.f32.gmra.mrb[0].mxu0 %v1024
        %v1165 = vpop.f32.mrb[0].mxu0
        %v1166 = vadd.f32 0.0, %v1165
        %v1167 = vpop.f32.mrb[0].mxu0
        %1168 = vmatprep.mubr.f32.mxu0 0.0
        %1169 = vmatmul.mubr.f32.gmra.mrb[0].mxu0 %v1027
        %v1170 = vpop.f32.mrb[0].mxu0
        %v1171 = vadd.f32 0.0, %v1170
        %v1172 = vpop.f32.mrb[0].mxu0
        %1173 = vdwg.mxu0
        %v1174 = vmax.f32 %v1096, %v1116
        %v1175 = vmax.f32 %v1101, %v1121
        %v1176 = vmax.f32 %v1106, %v1126
        %v1177 = vmax.f32 %v1111, %v1131
        %v1178 = vmax.f32 %v1174, %v1136
        %v1179 = vmax.f32 %v1175, %v1141
        %v1180 = vmax.f32 %v1176, %v1146
        %v1181 = vmax.f32 %v1177, %v1151
        %v1182 = vmax.f32 %v1178, %v1156
        %v1183 = vmax.f32 %v1179, %v1161
        %v1184 = vmax.f32 %v1180, %v1166
        %v1185 = vmax.f32 %v1181, %v1171
        %v1186 = vmax.f32 %v1182, %v1183
        %v1187 = vmax.f32 %v1184, %v1185
        %v1188 = vmax.f32 %v1186, %v1187
        %v1189 = vrot.slane %v1188, 4
        %v1190 = vmax.f32 %v1188, %v1189
        %v1191 = vrot.slane %v1190, 2
        %v1192 = vmax.f32 %v1190, %v1191
        %v1193 = vrot.slane %v1192, 1
        %v1194 = vmax.f32 %v1192, %v1193
        %v1195 = vmax.f32 %v1194, -1e+30
        %v1196 = vsub.f32 -1e+30, %v1195
        %v1197 = vmul.f32 %v1196, 1.442695
        %v1198 = vpow.pop %v1197
        %v1199 = vsub.f32 %v1096, %v1195
        %v1200 = vsub.f32 %v1101, %v1195
        %v1201 = vsub.f32 %v1106, %v1195
        %v1202 = vsub.f32 %v1111, %v1195
        %v1203 = vsub.f32 %v1116, %v1195
        %v1204 = vsub.f32 %v1121, %v1195
        %v1205 = vsub.f32 %v1126, %v1195
        %v1206 = vsub.f32 %v1131, %v1195
        %v1207 = vsub.f32 %v1136, %v1195
        %v1208 = vsub.f32 %v1141, %v1195
        %v1209 = vsub.f32 %v1146, %v1195
        %v1210 = vsub.f32 %v1151, %v1195
        %v1211 = vsub.f32 %v1156, %v1195
        %v1212 = vsub.f32 %v1161, %v1195
        %v1213 = vsub.f32 %v1166, %v1195
        %v1214 = vsub.f32 %v1171, %v1195
        %v1215 = vmul.f32 %v1199, 1.442695
        %v1216 = vpow.pop %v1215
        %v1217 = vmul.f32 %v1200, 1.442695
        %v1218 = vpow.pop %v1217
        %v1219 = vmul.f32 %v1201, 1.442695
        %v1220 = vpow.pop %v1219
        %v1221 = vmul.f32 %v1202, 1.442695
        %v1222 = vpow.pop %v1221
        %v1223 = vmul.f32 %v1203, 1.442695
        %v1224 = vpow.pop %v1223
        %v1225 = vmul.f32 %v1204, 1.442695
        %v1226 = vpow.pop %v1225
        %v1227 = vmul.f32 %v1205, 1.442695
        %v1228 = vpow.pop %v1227
        %v1229 = vmul.f32 %v1206, 1.442695
        %v1230 = vpow.pop %v1229
        %v1231 = vmul.f32 %v1207, 1.442695
        %v1232 = vpow.pop %v1231
        %v1233 = vmul.f32 %v1208, 1.442695
        %v1234 = vpow.pop %v1233
        %v1235 = vmul.f32 %v1209, 1.442695
        %v1236 = vpow.pop %v1235
        %v1237 = vmul.f32 %v1210, 1.442695
        %v1238 = vpow.pop %v1237
        %v1239 = vmul.f32 %v1211, 1.442695
        %v1240 = vpow.pop %v1239
        %v1241 = vmul.f32 %v1212, 1.442695
        %v1242 = vpow.pop %v1241
        %v1243 = vmul.f32 %v1213, 1.442695
        %v1244 = vpow.pop %v1243
        %v1245 = vmul.f32 %v1214, 1.442695
        %v1246 = vpow.pop %v1245
        %v1247 = vmul.f32 %v1198, 0.0
        %v1248 = vadd.f32 %v1216, %v1218
        %v1249 = vadd.f32 %v1248, %v1220
        %v1250 = vadd.f32 %v1249, %v1222
        %v1251 = vadd.f32 %v1250, %v1224
        %v1252 = vadd.f32 %v1251, %v1226
        %v1253 = vadd.f32 %v1252, %v1228
        %v1254 = vadd.f32 %v1253, %v1230
        %v1255 = vadd.f32 %v1254, %v1232
        %v1256 = vadd.f32 %v1255, %v1234
        %v1257 = vadd.f32 %v1256, %v1236
        %v1258 = vadd.f32 %v1257, %v1238
        %v1259 = vadd.f32 %v1258, %v1240
        %v1260 = vadd.f32 %v1259, %v1242
        %v1261 = vadd.f32 %v1260, %v1244
        %v1262 = vadd.f32 %v1261, %v1246
        %v1263 = vrot.slane %v1262, 4
        %v1264 = vadd.f32 %v1262, %v1263
        %v1265 = vrot.slane %v1264, 2
        %v1266 = vadd.f32 %v1264, %v1265
        %v1267 = vrot.slane %v1266, 1
        %v1268 = vadd.f32 %v1266, %v1267
        %v1269 = vadd.f32 %v1247, %v1268
        %1270 = vmatprep.subr.mxu0 0.0
        %1271 = vmatpush1.msra.mxu0 %v1216
        %1272 = vmatprep.subr.mxu0 0.0
        %1273 = vmatpush1.msra.mxu0 %v1218
        %1274 = vmatprep.subr.mxu0 0.0
        %1275 = vmatpush1.msra.mxu0 %v1220
        %1276 = vmatprep.subr.mxu0 0.0
        %1277 = vmatpush1.msra.mxu0 %v1222
        %1278 = vmatprep.subr.mxu0 0.0
        %1279 = vmatpush1.msra.mxu0 %v1224
        %1280 = vmatprep.subr.mxu0 0.0
        %1281 = vmatpush1.msra.mxu0 %v1226
        %1282 = vmatprep.subr.mxu0 0.0
        %1283 = vmatpush1.msra.mxu0 %v1228
        %1284 = vmatprep.subr.mxu0 0.0
        %1285 = vmatpush1.msra.mxu0 %v1230
        %1286 = vmatprep.subr.mxu0 0.0
        %1287 = vmatpush1.msra.mxu0 %v1232
        %1288 = vmatprep.subr.mxu0 0.0
        %1289 = vmatpush1.msra.mxu0 %v1234
        %1290 = vmatprep.subr.mxu0 0.0
        %1291 = vmatpush1.msra.mxu0 %v1236
        %1292 = vmatprep.subr.mxu0 0.0
        %1293 = vmatpush1.msra.mxu0 %v1238
        %1294 = vmatprep.subr.mxu0 0.0
        %1295 = vmatpush1.msra.mxu0 %v1240
        %1296 = vmatprep.subr.mxu0 0.0
        %1297 = vmatpush1.msra.mxu0 %v1242
        %1298 = vmatprep.subr.mxu0 0.0
        %1299 = vmatpush1.msra.mxu0 %v1244
        %1300 = vmatprep.subr.mxu0 0.0
        %1301 = vmatpush1.msra.mxu0 %v1246
        %1302 = vmatprep.subr.mxu0 0.0
        %1303 = vmatpush1.msra.mxu0 0.0
        %1304 = vmatprep.subr.mxu0 0.0
        %1305 = vmatpush1.msra.mxu0 0.0
        %1306 = vmatprep.subr.mxu0 0.0
        %1307 = vmatpush1.msra.mxu0 0.0
        %1308 = vmatprep.subr.mxu0 0.0
        %1309 = vmatpush1.msra.mxu0 0.0
        %1310 = vmatprep.subr.mxu0 0.0
        %1311 = vmatpush1.msra.mxu0 0.0
        %1312 = vmatprep.subr.mxu0 0.0
        %1313 = vmatpush1.msra.mxu0 0.0
        %1314 = vmatprep.subr.mxu0 0.0
        %1315 = vmatpush1.msra.mxu0 0.0
        %1316 = vmatprep.subr.mxu0 0.0
        %1317 = vmatpush1.msra.mxu0 0.0
        %1318 = vmatprep.subr.mxu0 0.0
        %1319 = vmatpush1.msra.mxu0 0.0
        %1320 = vmatprep.subr.mxu0 0.0
        %1321 = vmatpush1.msra.mxu0 0.0
        %1322 = vmatprep.subr.mxu0 0.0
        %1323 = vmatpush1.msra.mxu0 0.0
        %1324 = vmatprep.subr.mxu0 0.0
        %1325 = vmatpush1.msra.mxu0 0.0
        %1326 = vmatprep.subr.mxu0 0.0
        %1327 = vmatpush1.msra.mxu0 0.0
        %1328 = vmatprep.subr.mxu0 0.0
        %1329 = vmatpush1.msra.mxu0 0.0
        %1330 = vmatprep.subr.mxu0 0.0
        %1331 = vmatpush1.msra.mxu0 0.0
        %1332 = vmatprep.subr.mxu0 0.0
        %1333 = vmatpush1.msra.mxu0 0.0
        %1334 = vmatprep.mubr.f32.mxu0 0.0
        %1335 = vmatmul.mubr.f32.gmra.mrb[0].mxu0 %v948
        %v1336 = vpop.f32.mrb[0].mxu0
        %v1337 = vadd.f32 0.0, %v1336
        %v1338 = vpop.f32.mrb[0].mxu0
        %1339 = vdwg.mxu0
        %v1340 = vadd.f32 %v1247, %v1337
        %v1341 = vrcp.pop %v1269
        %v1342 = vmul.f32 %v1340, %v1341
        %v1343 = vmax.f32 %v1342, 0.0
        %v1344 = vld [vmem:[%s552] sm:$0x1]
        %1346 = vset.pattern.permute.xlu0 0
        %1347 = vperm.xlu0 %1346, %v938
        %v1348 = vpop.permute.xlu0 %1347
        %1351 = vset.pattern.permute.xlu0 0
        %1352 = vperm.xlu0 %1351, %v939
        %v1353 = vpop.permute.xlu0 %1352
        %v1356 = vsel %vm578, %v936, 0
        %v1359 = vsel %vm578, %v937, 0
        %1361 = vmatprep.subr.mxu0 0.0
        %1362 = vmatpush1.msra.mxu0 %v1343
        %1363 = vmatprep.subr.mxu0 0.0
        %1364 = vmatpush1.msra.mxu0 0.0
        %1365 = vmatprep.subr.mxu0 0.0
        %1366 = vmatpush1.msra.mxu0 0.0
        %1367 = vmatprep.subr.mxu0 0.0
        %1368 = vmatpush1.msra.mxu0 0.0
        %1369 = vmatprep.subr.mxu0 0.0
        %1370 = vmatpush1.msra.mxu0 0.0
        %1371 = vmatprep.subr.mxu0 0.0
        %1372 = vmatpush1.msra.mxu0 0.0
        %1373 = vmatprep.subr.mxu0 0.0
        %1374 = vmatpush1.msra.mxu0 0.0
        %1375 = vmatprep.subr.mxu0 0.0
        %1376 = vmatpush1.msra.mxu0 0.0
        %1377 = vmatprep.subr.mxu0 0.0
        %1378 = vmatpush1.msra.mxu0 0.0
        %1379 = vmatprep.subr.mxu0 0.0
        %1380 = vmatpush1.msra.mxu0 0.0
        %1381 = vmatprep.subr.mxu0 0.0
        %1382 = vmatpush1.msra.mxu0 0.0
        %1383 = vmatprep.subr.mxu0 0.0
        %1384 = vmatpush1.msra.mxu0 0.0
        %1385 = vmatprep.subr.mxu0 0.0
        %1386 = vmatpush1.msra.mxu0 0.0
        %1387 = vmatprep.subr.mxu0 0.0
        %1388 = vmatpush1.msra.mxu0 0.0
        %1389 = vmatprep.subr.mxu0 0.0
        %1390 = vmatpush1.msra.mxu0 0.0
        %1391 = vmatprep.subr.mxu0 0.0
        %1392 = vmatpush1.msra.mxu0 0.0
        %1393 = vmatprep.subr.mxu0 0.0
        %1394 = vmatpush1.msra.mxu0 0.0
        %1395 = vmatprep.subr.mxu0 0.0
        %1396 = vmatpush1.msra.mxu0 0.0
        %1397 = vmatprep.subr.mxu0 0.0
        %1398 = vmatpush1.msra.mxu0 0.0
        %1399 = vmatprep.subr.mxu0 0.0
        %1400 = vmatpush1.msra.mxu0 0.0
        %1401 = vmatprep.subr.mxu0 0.0
        %1402 = vmatpush1.msra.mxu0 0.0
        %1403 = vmatprep.subr.mxu0 0.0
        %1404 = vmatpush1.msra.mxu0 0.0
        %1405 = vmatprep.subr.mxu0 0.0
        %1406 = vmatpush1.msra.mxu0 0.0
        %1407 = vmatprep.subr.mxu0 0.0
        %1408 = vmatpush1.msra.mxu0 0.0
        %1409 = vmatprep.subr.mxu0 0.0
        %1410 = vmatpush1.msra.mxu0 0.0
        %1411 = vmatprep.subr.mxu0 0.0
        %1412 = vmatpush1.msra.mxu0 0.0
        %1413 = vmatprep.subr.mxu0 0.0
        %1414 = vmatpush1.msra.mxu0 0.0
        %1415 = vmatprep.subr.mxu0 0.0
        %1416 = vmatpush1.msra.mxu0 0.0
        %1417 = vmatprep.subr.mxu0 0.0
        %1418 = vmatpush1.msra.mxu0 0.0
        %1419 = vmatprep.subr.mxu0 0.0
        %1420 = vmatpush1.msra.mxu0 0.0
        %1421 = vmatprep.subr.mxu0 0.0
        %1422 = vmatpush1.msra.mxu0 0.0
        %1423 = vmatprep.subr.mxu0 0.0
        %1424 = vmatpush1.msra.mxu0 0.0
        %1425 = vmatprep.mubr.f32.mxu0 0.0
        %1426 = vmatmul.mubr.f32.gmra.mrb[0].mxu0 %v1356
        %v1427 = vpop.f32.mrb[0].mxu0
        %v1428 = vadd.f32 %v1348, %v1427
        %v1429 = vpop.f32.mrb[0].mxu0
        %1430 = vmatprep.mubr.f32.mxu0 0.0
        %1431 = vmatmul.mubr.f32.gmra.mrb[0].mxu0 %v1359
        %v1432 = vpop.f32.mrb[0].mxu0
        %v1433 = vadd.f32 %v1353, %v1432
        %v1434 = vpop.f32.mrb[0].mxu0
        %1435 = vdwg.mxu0
        %v1437 = vlaneseq
        %v1438 = vshrl.u32 %v1437, 7
        %v1439 = vsub.s32 0, %v1438
        %v1440 = vrot.slane %v1344, %v1439
        %v1442 = vmul.f32 %v1428, %v1440
        %v1443 = vmul.f32 %v1433, %v1440
        %v1444 = vld [vmem:[#allocation2] sm:$0xff]
        %v1445 = vld [vmem:[#allocation2 + $0x8] sm:$0xff]
        %v1446 = vadd.f32 %v1442, %v1444
        %v1447 = vadd.f32 %v1443, %v1445
        %1449 = vset.pattern.permute.xlu0 0
        %1450 = vperm.xlu0 %1449, %v942
        %v1451 = vpop.permute.xlu0 %1450
        %1454 = vset.pattern.permute.xlu0 0
        %1455 = vperm.xlu0 %1454, %v943
        %v1456 = vpop.permute.xlu0 %1455
        %v1459 = vsel %vm831, %v940, 0
        %v1462 = vsel %vm831, %v941, 0
        %1464 = vmatprep.subr.mxu0 0.0
        %1465 = vmatpush1.msra.mxu0 %v1446
        %1466 = vmatprep.subr.mxu0 0.0
        %1467 = vmatpush1.msra.mxu0 %v1447
        %1468 = vmatprep.subr.mxu0 0.0
        %1469 = vmatpush1.msra.mxu0 0.0
        %1470 = vmatprep.subr.mxu0 0.0
        %1471 = vmatpush1.msra.mxu0 0.0
        %1472 = vmatprep.subr.mxu0 0.0
        %1473 = vmatpush1.msra.mxu0 0.0
        %1474 = vmatprep.subr.mxu0 0.0
        %1475 = vmatpush1.msra.mxu0 0.0
        %1476 = vmatprep.subr.mxu0 0.0
        %1477 = vmatpush1.msra.mxu0 0.0
        %1478 = vmatprep.subr.mxu0 0.0
        %1479 = vmatpush1.msra.mxu0 0.0
        %1480 = vmatprep.subr.mxu0 0.0
        %1481 = vmatpush1.msra.mxu0 0.0
        %1482 = vmatprep.subr.mxu0 0.0
        %1483 = vmatpush1.msra.mxu0 0.0
        %1484 = vmatprep.subr.mxu0 0.0
        %1485 = vmatpush1.msra.mxu0 0.0
        %1486 = vmatprep.subr.mxu0 0.0
        %1487 = vmatpush1.msra.mxu0 0.0
        %1488 = vmatprep.subr.mxu0 0.0
        %1489 = vmatpush1.msra.mxu0 0.0
        %1490 = vmatprep.subr.mxu0 0.0
        %1491 = vmatpush1.msra.mxu0 0.0
        %1492 = vmatprep.subr.mxu0 0.0
        %1493 = vmatpush1.msra.mxu0 0.0
        %1494 = vmatprep.subr.mxu0 0.0
        %1495 = vmatpush1.msra.mxu0 0.0
        %1496 = vmatprep.subr.mxu0 0.0
        %1497 = vmatpush1.msra.mxu0 0.0
        %1498 = vmatprep.subr.mxu0 0.0
        %1499 = vmatpush1.msra.mxu0 0.0
        %1500 = vmatprep.subr.mxu0 0.0
        %1501 = vmatpush1.msra.mxu0 0.0
        %1502 = vmatprep.subr.mxu0 0.0
        %1503 = vmatpush1.msra.mxu0 0.0
        %1504 = vmatprep.subr.mxu0 0.0
        %1505 = vmatpush1.msra.mxu0 0.0
        %1506 = vmatprep.subr.mxu0 0.0
        %1507 = vmatpush1.msra.mxu0 0.0
        %1508 = vmatprep.subr.mxu0 0.0
        %1509 = vmatpush1.msra.mxu0 0.0
        %1510 = vmatprep.subr.mxu0 0.0
        %1511 = vmatpush1.msra.mxu0 0.0
        %1512 = vmatprep.subr.mxu0 0.0
        %1513 = vmatpush1.msra.mxu0 0.0
        %1514 = vmatprep.subr.mxu0 0.0
        %1515 = vmatpush1.msra.mxu0 0.0
        %1516 = vmatprep.subr.mxu0 0.0
        %1517 = vmatpush1.msra.mxu0 0.0
        %1518 = vmatprep.subr.mxu0 0.0
        %1519 = vmatpush1.msra.mxu0 0.0
        %1520 = vmatprep.subr.mxu0 0.0
        %1521 = vmatpush1.msra.mxu0 0.0
        %1522 = vmatprep.subr.mxu0 0.0
        %1523 = vmatpush1.msra.mxu0 0.0
        %1524 = vmatprep.subr.mxu0 0.0
        %1525 = vmatpush1.msra.mxu0 0.0
        %1526 = vmatprep.subr.mxu0 0.0
        %1527 = vmatpush1.msra.mxu0 0.0
        %1528 = vmatprep.mubr.f32.mxu0 0.0
        %1529 = vmatmul.mubr.f32.gmra.mrb[0].mxu0 %v1459
        %v1530 = vpop.f32.mrb[0].mxu0
        %v1531 = vadd.f32 %v1451, %v1530
        %v1532 = vpop.f32.mrb[0].mxu0
        %1533 = vmatprep.mubr.f32.mxu0 0.0
        %1534 = vmatmul.mubr.f32.gmra.mrb[0].mxu0 %v1462
        %v1535 = vpop.f32.mrb[0].mxu0
        %v1536 = vadd.f32 %v1456, %v1535
        %v1537 = vpop.f32.mrb[0].mxu0
        %1538 = vdwg.mxu0
        %v1539 = vld [vmem:[%s545] sm:$0xff]
        %v1540 = vld [vmem:[%s545 + $0x8] sm:$0xff]
        %v1541 = vadd.f32 %v1539, %v1531
        %v1542 = vadd.f32 %v1540, %v1536
        %v1543 = vmul.f32 %v1541, %v1440
        %v1544 = vmul.f32 %v1542, %v1440
        %1545 = vst [vmem:[%s545] sm:$0xff] %v1543
        %1546 = vst [vmem:[%s545 + $0x8] sm:$0xff] %v1544
        %v1547 = vld [vmem:[%s545] sm:$0xff]
        %v1548 = vld [vmem:[%s545 + $0x8] sm:$0xff]
        %vm1549 = vcmp.ge.s32.totalorder %v557, 2
        %1550 = vrot.lane.b32.xlu0 %v1547, 2
        %v1551 = vpop.permute.xlu0 %1550
        %1552 = vrot.lane.b32.xlu0 %v1548, 2
        %v1553 = vpop.permute.xlu0 %1552
        %v1554 = vsel %vm1549, 1, 0
        %vm1555 = vcmp.eq.s32.totalorder %v1554, 1
        %v1556 = vsel %vm1555, %v1551, 0.0
        %v1557 = vsel %vm1555, %v1553, 0.0
        %vm1558 = vcmp.lt.s32.totalorder %v557, 126
        %1559 = vrot.lane.b32.xlu0 %v1547, 126
        %v1560 = vpop.permute.xlu0 %1559
        %1561 = vrot.lane.b32.xlu0 %v1548, 126
        %v1562 = vpop.permute.xlu0 %1561
        %v1563 = vsel %vm1558, 1, 0
        %vm1564 = vcmp.eq.s32.totalorder %v1563, 1
        %v1565 = vsel %vm1564, %v1560, 0.0
        %v1566 = vsel %vm1564, %v1562, 0.0
        %s1567 = scalar_lea.vmem %s5, 16
        %v1568 = vld [vmem:[%s1567] sm:$0xff]
        %v1569 = vld [vmem:[%s1567 + $0x8] sm:$0xff]
        %s1570 = scalar_lea.vmem %s6, 16
        %v1571 = vld [vmem:[%s1570] sm:$0xff]
        %v1572 = vld [vmem:[%s1570 + $0x8] sm:$0xff]
        %1574 = vset.pattern.permute.xlu0 0
        %1575 = vperm.xlu0 %1574, %v1571
        %v1576 = vpop.permute.xlu0 %1575
        %1579 = vset.pattern.permute.xlu0 0
        %1580 = vperm.xlu0 %1579, %v1572
        %v1581 = vpop.permute.xlu0 %1580
        %v1584 = vsel %vm698, %v1568, 0
        %v1587 = vsel %vm698, %v1569, 0
        %1589 = vmatprep.subr.mxu0 0.0
        %1590 = vmatpush1.msra.mxu0 %v1556
        %1591 = vmatprep.subr.mxu0 0.0
        %1592 = vmatpush1.msra.mxu0 %v1557
        %1593 = vmatprep.subr.mxu0 0.0
        %1594 = vmatpush1.msra.mxu0 %v1547
        %1595 = vmatprep.subr.mxu0 0.0
        %1596 = vmatpush1.msra.mxu0 %v1548
        %1597 = vmatprep.subr.mxu0 0.0
        %1598 = vmatpush1.msra.mxu0 %v1565
        %1599 = vmatprep.subr.mxu0 0.0
        %1600 = vmatpush1.msra.mxu0 %v1566
        %1601 = vmatprep.subr.mxu0 0.0
        %1602 = vmatpush1.msra.mxu0 0.0
        %1603 = vmatprep.subr.mxu0 0.0
        %1604 = vmatpush1.msra.mxu0 0.0
        %1605 = vmatprep.subr.mxu0 0.0
        %1606 = vmatpush1.msra.mxu0 0.0
        %1607 = vmatprep.subr.mxu0 0.0
        %1608 = vmatpush1.msra.mxu0 0.0
        %1609 = vmatprep.subr.mxu0 0.0
        %1610 = vmatpush1.msra.mxu0 0.0
        %1611 = vmatprep.subr.mxu0 0.0
        %1612 = vmatpush1.msra.mxu0 0.0
        %1613 = vmatprep.subr.mxu0 0.0
        %1614 = vmatpush1.msra.mxu0 0.0
        %1615 = vmatprep.subr.mxu0 0.0
        %1616 = vmatpush1.msra.mxu0 0.0
        %1617 = vmatprep.subr.mxu0 0.0
        %1618 = vmatpush1.msra.mxu0 0.0
        %1619 = vmatprep.subr.mxu0 0.0
        %1620 = vmatpush1.msra.mxu0 0.0
        %1621 = vmatprep.subr.mxu0 0.0
        %1622 = vmatpush1.msra.mxu0 0.0
        %1623 = vmatprep.subr.mxu0 0.0
        %1624 = vmatpush1.msra.mxu0 0.0
        %1625 = vmatprep.subr.mxu0 0.0
        %1626 = vmatpush1.msra.mxu0 0.0
        %1627 = vmatprep.subr.mxu0 0.0
        %1628 = vmatpush1.msra.mxu0 0.0
        %1629 = vmatprep.subr.mxu0 0.0
        %1630 = vmatpush1.msra.mxu0 0.0
        %1631 = vmatprep.subr.mxu0 0.0
        %1632 = vmatpush1.msra.mxu0 0.0
        %1633 = vmatprep.subr.mxu0 0.0
        %1634 = vmatpush1.msra.mxu0 0.0
        %1635 = vmatprep.subr.mxu0 0.0
        %1636 = vmatpush1.msra.mxu0 0.0
        %1637 = vmatprep.subr.mxu0 0.0
        %1638 = vmatpush1.msra.mxu0 0.0
        %1639 = vmatprep.subr.mxu0 0.0
        %1640 = vmatpush1.msra.mxu0 0.0
        %1641 = vmatprep.subr.mxu0 0.0
        %1642 = vmatpush1.msra.mxu0 0.0
        %1643 = vmatprep.subr.mxu0 0.0
        %1644 = vmatpush1.msra.mxu0 0.0
        %1645 = vmatprep.subr.mxu0 0.0
        %1646 = vmatpush1.msra.mxu0 0.0
        %1647 = vmatprep.subr.mxu0 0.0
        %1648 = vmatpush1.msra.mxu0 0.0
        %1649 = vmatprep.subr.mxu0 0.0
        %1650 = vmatpush1.msra.mxu0 0.0
        %1651 = vmatprep.subr.mxu0 0.0
        %1652 = vmatpush1.msra.mxu0 0.0
        %1653 = vmatprep.mubr.f32.mxu0 0.0
        %1654 = vmatmul.mubr.f32.gmra.mrb[0].mxu0 %v1584
        %v1655 = vpop.f32.mrb[0].mxu0
        %v1656 = vadd.f32 %v1576, %v1655
        %v1657 = vpop.f32.mrb[0].mxu0
        %1658 = vmatprep.mubr.f32.mxu0 0.0
        %1659 = vmatmul.mubr.f32.gmra.mrb[0].mxu0 %v1587
        %v1660 = vpop.f32.mrb[0].mxu0
        %v1661 = vadd.f32 %v1581, %v1660
        %v1662 = vpop.f32.mrb[0].mxu0
        %1663 = vdwg.mxu0
        %v1664 = vmax.f32 %v1656, 0.0
        %v1665 = vmax.f32 %v1661, 0.0
        %1666 = vst [vmem:[#allocation2] sm:$0xff] %v1664
        %1667 = vst [vmem:[#allocation2 + $0x8] sm:$0xff] %v1665
        %v1668 = vmul.f32 %v1664, %v560
        %v1669 = vmul.f32 %v1665, %v560
        %1670 = vadd.xlane.f32.xlu0 %v1668
        %v1671 = vpop.xlane.xlu0 %1670
        %1672 = vadd.xlane.f32.xlu0 %v1669
        %v1673 = vpop.xlane.xlu0 %1672
        %v1674 = vmul.f32 %v1671, 0.0625
        %v1675 = vmul.f32 %v1673, 0.0625
        %v1676 = vsub.f32 %v1664, %v1674
        %v1677 = vsub.f32 %v1665, %v1675
        %v1678 = vmul.f32 %v1676, %v1676
        %v1679 = vmul.f32 %v1677, %v1677
        %v1680 = vmul.f32 %v1678, %v560
        %v1681 = vmul.f32 %v1679, %v560
        %1682 = vadd.xlane.f32.xlu0 %v1680
        %v1683 = vpop.xlane.xlu0 %1682
        %1684 = vadd.xlane.f32.xlu0 %v1681
        %v1685 = vpop.xlane.xlu0 %1684
        %v1686 = vmul.f32 %v1683, 0.0625
        %v1687 = vmul.f32 %v1685, 0.0625
        %v1688 = vadd.f32 %v1686, 1e-05
        %v1689 = vadd.f32 %v1687, 1e-05
        %v1690 = vrsqrt.pop %v1688
        %v1691 = vrsqrt.pop %v1689
        %v1692 = vmul.f32 %v1676, %v1690
        %v1693 = vmul.f32 %v1677, %v1691
        %s1694 = scalar_lea.vmem %s7, 24
        %v1695 = vld [vmem:[%s1694] sm:$0xff]
        %v1696 = vld [vmem:[%s1694 + $0x8] sm:$0xff]
        %v1697 = vld [vmem:[%s1694 + $0x10] sm:$0xff]
        %s1698 = scalar_lea.vmem %s8, 24
        %v1699 = vld [vmem:[%s1698] sm:$0xff]
        %v1700 = vld [vmem:[%s1698 + $0x8] sm:$0xff]
        %v1701 = vld [vmem:[%s1698 + $0x10] sm:$0xff]
        %1703 = vset.pattern.permute.xlu0 0
        %1704 = vperm.xlu0 %1703, %v1699
        %v1705 = vpop.permute.xlu0 %1704
        %1708 = vset.pattern.permute.xlu0 0
        %1709 = vperm.xlu0 %1708, %v1700
        %v1710 = vpop.permute.xlu0 %1709
        %1713 = vset.pattern.permute.xlu0 0
        %1714 = vperm.xlu0 %1713, %v1701
        %v1715 = vpop.permute.xlu0 %1714
        %v1718 = vsel %vm831, %v1695, 0
        %v1721 = vsel %vm831, %v1696, 0
        %v1724 = vsel %vm831, %v1697, 0
        %1726 = vmatprep.subr.mxu0 0.0
        %1727 = vmatpush1.msra.mxu0 %v1692
        %1728 = vmatprep.subr.mxu0 0.0
        %1729 = vmatpush1.msra.mxu0 %v1693
        %1730 = vmatprep.subr.mxu0 0.0
        %1731 = vmatpush1.msra.mxu0 0.0
        %1732 = vmatprep.subr.mxu0 0.0
        %1733 = vmatpush1.msra.mxu0 0.0
        %1734 = vmatprep.subr.mxu0 0.0
        %1735 = vmatpush1.msra.mxu0 0.0
        %1736 = vmatprep.subr.mxu0 0.0
        %1737 = vmatpush1.msra.mxu0 0.0
        %1738 = vmatprep.subr.mxu0 0.0
        %1739 = vmatpush1.msra.mxu0 0.0
        %1740 = vmatprep.subr.mxu0 0.0
        %1741 = vmatpush1.msra.mxu0 0.0
        %1742 = vmatprep.subr.mxu0 0.0
        %1743 = vmatpush1.msra.mxu0 0.0
        %1744 = vmatprep.subr.mxu0 0.0
        %1745 = vmatpush1.msra.mxu0 0.0
        %1746 = vmatprep.subr.mxu0 0.0
        %1747 = vmatpush1.msra.mxu0 0.0
        %1748 = vmatprep.subr.mxu0 0.0
        %1749 = vmatpush1.msra.mxu0 0.0
        %1750 = vmatprep.subr.mxu0 0.0
        %1751 = vmatpush1.msra.mxu0 0.0
        %1752 = vmatprep.subr.mxu0 0.0
        %1753 = vmatpush1.msra.mxu0 0.0
        %1754 = vmatprep.subr.mxu0 0.0
        %1755 = vmatpush1.msra.mxu0 0.0
        %1756 = vmatprep.subr.mxu0 0.0
        %1757 = vmatpush1.msra.mxu0 0.0
        %1758 = vmatprep.subr.mxu0 0.0
        %1759 = vmatpush1.msra.mxu0 0.0
        %1760 = vmatprep.subr.mxu0 0.0
        %1761 = vmatpush1.msra.mxu0 0.0
        %1762 = vmatprep.subr.mxu0 0.0
        %1763 = vmatpush1.msra.mxu0 0.0
        %1764 = vmatprep.subr.mxu0 0.0
        %1765 = vmatpush1.msra.mxu0 0.0
        %1766 = vmatprep.subr.mxu0 0.0
        %1767 = vmatpush1.msra.mxu0 0.0
        %1768 = vmatprep.subr.mxu0 0.0
        %1769 = vmatpush1.msra.mxu0 0.0
        %1770 = vmatprep.subr.mxu0 0.0
        %1771 = vmatpush1.msra.mxu0 0.0
        %1772 = vmatprep.subr.mxu0 0.0
        %1773 = vmatpush1.msra.mxu0 0.0
        %1774 = vmatprep.subr.mxu0 0.0
        %1775 = vmatpush1.msra.mxu0 0.0
        %1776 = vmatprep.subr.mxu0 0.0
        %1777 = vmatpush1.msra.mxu0 0.0
        %1778 = vmatprep.subr.mxu0 0.0
        %1779 = vmatpush1.msra.mxu0 0.0
        %1780 = vmatprep.subr.mxu0 0.0
        %1781 = vmatpush1.msra.mxu0 0.0
        %1782 = vmatprep.subr.mxu0 0.0
        %1783 = vmatpush1.msra.mxu0 0.0
        %1784 = vmatprep.subr.mxu0 0.0
        %1785 = vmatpush1.msra.mxu0 0.0
        %1786 = vmatprep.subr.mxu0 0.0
        %1787 = vmatpush1.msra.mxu0 0.0
        %1788 = vmatprep.subr.mxu0 0.0
        %1789 = vmatpush1.msra.mxu0 0.0
        %1790 = vmatprep.mubr.f32.mxu0 0.0
        %1791 = vmatmul.mubr.f32.gmra.mrb[0].mxu0 %v1718
        %v1792 = vpop.f32.mrb[0].mxu0
        %v1793 = vadd.f32 %v1705, %v1792
        %v1794 = vpop.f32.mrb[0].mxu0
        %1795 = vmatprep.mubr.f32.mxu0 0.0
        %1796 = vmatmul.mubr.f32.gmra.mrb[0].mxu0 %v1721
        %v1797 = vpop.f32.mrb[0].mxu0
        %v1798 = vadd.f32 %v1710, %v1797
        %v1799 = vpop.f32.mrb[0].mxu0
        %1800 = vmatprep.mubr.f32.mxu0 0.0
        %1801 = vmatmul.mubr.f32.gmra.mrb[0].mxu0 %v1724
        %v1802 = vpop.f32.mrb[0].mxu0
        %v1803 = vadd.f32 %v1715, %v1802
        %v1804 = vpop.f32.mrb[0].mxu0
        %1805 = vdwg.mxu0
        %v1806 = vmul.f32 %v1803, %v925
        %1807 = vst [vmem:[#allocation3] sm:$0xff] %v1793
        %1808 = vst [vmem:[#allocation3 + $0x8] sm:$0xff] %v929
        %1809 = vst [vmem:[#allocation3 + $0x10] sm:$0xff] %v1798
        %1810 = vst [vmem:[#allocation3 + $0x18] sm:$0xff] %v930
        %1811 = vst [vmem:[#allocation3 + $0x20] sm:$0xff] %v1806
        %s1812 = scalar_lea.vmem %s9, 16
        %v1813 = vld [vmem:[%s1812] sm:$0xff]
        %v1814 = vld [vmem:[%s1812 + $0x8] sm:$0xff]
        %s1815 = scalar_lea.vmem %s10, 16
        %v1816 = vld [vmem:[%s1815] sm:$0xff]
        %v1817 = vld [vmem:[%s1815 + $0x8] sm:$0xff]
        %s1818 = scalar_lea.vmem %s11, 16
        %v1819 = vld [vmem:[%s1818] sm:$0xff]
        %v1820 = vld [vmem:[%s1818 + $0x8] sm:$0xff]
        %s1821 = scalar_lea.vmem %s12, 16
        %v1822 = vld [vmem:[%s1821] sm:$0xff]
        %v1823 = vld [vmem:[%s1821 + $0x8] sm:$0xff]
        %v1824 = vld [vmem:[#allocation3] sm:$0xff]
        %v1825 = vld [vmem:[#allocation3 + $0x8] sm:$0xff]
        %v1826 = vld [vmem:[#allocation3 + $0x10] sm:$0xff]
        %v1827 = vld [vmem:[#allocation3 + $0x18] sm:$0xff]
        %v1828 = vld [vmem:[#allocation3 + $0x20] sm:$0xff]
        %1829 = vxpose.xlu0.b32.start [1/16] %v1826, 128
        %1830 = vxpose.xlu0.b32.cont [2/16] %v1827, 128
        %1831 = vxpose.xlu0.b32.cont [3/16] 0.0, 128
        %1832 = vxpose.xlu0.b32.cont [4/16] 0.0, 128
        %1833 = vxpose.xlu0.b32.cont [5/16] 0.0, 128
        %1834 = vxpose.xlu0.b32.cont [6/16] 0.0, 128
        %1835 = vxpose.xlu0.b32.cont [7/16] 0.0, 128
        %1836 = vxpose.xlu0.b32.cont [8/16] 0.0, 128
        %1837 = vxpose.xlu0.b32.cont [9/16] 0.0, 128
        %1838 = vxpose.xlu0.b32.cont [10/16] 0.0, 128
        %1839 = vxpose.xlu0.b32.cont [11/16] 0.0, 128
        %1840 = vxpose.xlu0.b32.cont [12/16] 0.0, 128
        %1841 = vxpose.xlu0.b32.cont [13/16] 0.0, 128
        %1842 = vxpose.xlu0.b32.cont [14/16] 0.0, 128
        %1843 = vxpose.xlu0.b32.cont [15/16] 0.0, 128
        %1844 = vxpose.xlu0.b32.end [16/16] 0.0, 128
        %v1845 = vpop.trf.xlu0
        %v1846 = vpop.trf.xlu0
        %v1847 = vpop.trf.xlu0
        %v1848 = vpop.trf.xlu0
        %v1849 = vpop.trf.xlu0
        %v1850 = vpop.trf.xlu0
        %v1851 = vpop.trf.xlu0
        %v1852 = vpop.trf.xlu0
        %v1853 = vpop.trf.xlu0
        %v1854 = vpop.trf.xlu0
        %v1855 = vpop.trf.xlu0
        %v1856 = vpop.trf.xlu0
        %v1857 = vpop.trf.xlu0
        %v1858 = vpop.trf.xlu0
        %v1859 = vpop.trf.xlu0
        %v1860 = vpop.trf.xlu0
        %v1862 = vsel %vm831, %v1845, 0
        %v1865 = vsel %vm831, %v1846, 0
        %v1868 = vsel %vm831, %v1847, 0
        %v1871 = vsel %vm831, %v1848, 0
        %v1874 = vsel %vm831, %v1849, 0
        %v1877 = vsel %vm831, %v1850, 0
        %v1880 = vsel %vm831, %v1851, 0
        %v1883 = vsel %vm831, %v1852, 0
        %v1886 = vsel %vm831, %v1853, 0
        %v1889 = vsel %vm831, %v1854, 0
        %v1892 = vsel %vm831, %v1855, 0
        %v1895 = vsel %vm831, %v1856, 0
        %v1898 = vsel %vm831, %v1857, 0
        %v1901 = vsel %vm831, %v1858, 0
        %v1904 = vsel %vm831, %v1859, 0
        %v1907 = vsel %vm831, %v1860, 0
        %1909 = vmatprep.subr.mxu0 0.0
        %1910 = vmatpush1.msra.mxu0 %v1824
        %1911 = vmatprep.subr.mxu0 0.0
        %1912 = vmatpush1.msra.mxu0 %v1825
        %1913 = vmatprep.subr.mxu0 0.0
        %1914 = vmatpush1.msra.mxu0 0.0
        %1915 = vmatprep.subr.mxu0 0.0
        %1916 = vmatpush1.msra.mxu0 0.0
        %1917 = vmatprep.subr.mxu0 0.0
        %1918 = vmatpush1.msra.mxu0 0.0
        %1919 = vmatprep.subr.mxu0 0.0
        %1920 = vmatpush1.msra.mxu0 0.0
        %1921 = vmatprep.subr.mxu0 0.0
        %1922 = vmatpush1.msra.mxu0 0.0
        %1923 = vmatprep.subr.mxu0 0.0
        %1924 = vmatpush1.msra.mxu0 0.0
        %1925 = vmatprep.subr.mxu0 0.0
        %1926 = vmatpush1.msra.mxu0 0.0
        %1927 = vmatprep.subr.mxu0 0.0
        %1928 = vmatpush1.msra.mxu0 0.0
        %1929 = vmatprep.subr.mxu0 0.0
        %1930 = vmatpush1.msra.mxu0 0.0
        %1931 = vmatprep.subr.mxu0 0.0
        %1932 = vmatpush1.msra.mxu0 0.0
        %1933 = vmatprep.subr.mxu0 0.0
        %1934 = vmatpush1.msra.mxu0 0.0
        %1935 = vmatprep.subr.mxu0 0.0
        %1936 = vmatpush1.msra.mxu0 0.0
        %1937 = vmatprep.subr.mxu0 0.0
        %1938 = vmatpush1.msra.mxu0 0.0
        %1939 = vmatprep.subr.mxu0 0.0
        %1940 = vmatpush1.msra.mxu0 0.0
        %1941 = vmatprep.subr.mxu0 0.0
        %1942 = vmatpush1.msra.mxu0 0.0
        %1943 = vmatprep.subr.mxu0 0.0
        %1944 = vmatpush1.msra.mxu0 0.0
        %1945 = vmatprep.subr.mxu0 0.0
        %1946 = vmatpush1.msra.mxu0 0.0
        %1947 = vmatprep.subr.mxu0 0.0
        %1948 = vmatpush1.msra.mxu0 0.0
        %1949 = vmatprep.subr.mxu0 0.0
        %1950 = vmatpush1.msra.mxu0 0.0
        %1951 = vmatprep.subr.mxu0 0.0
        %1952 = vmatpush1.msra.mxu0 0.0
        %1953 = vmatprep.subr.mxu0 0.0
        %1954 = vmatpush1.msra.mxu0 0.0
        %1955 = vmatprep.subr.mxu0 0.0
        %1956 = vmatpush1.msra.mxu0 0.0
        %1957 = vmatprep.subr.mxu0 0.0
        %1958 = vmatpush1.msra.mxu0 0.0
        %1959 = vmatprep.subr.mxu0 0.0
        %1960 = vmatpush1.msra.mxu0 0.0
        %1961 = vmatprep.subr.mxu0 0.0
        %1962 = vmatpush1.msra.mxu0 0.0
        %1963 = vmatprep.subr.mxu0 0.0
        %1964 = vmatpush1.msra.mxu0 0.0
        %1965 = vmatprep.subr.mxu0 0.0
        %1966 = vmatpush1.msra.mxu0 0.0
        %1967 = vmatprep.subr.mxu0 0.0
        %1968 = vmatpush1.msra.mxu0 0.0
        %1969 = vmatprep.subr.mxu0 0.0
        %1970 = vmatpush1.msra.mxu0 0.0
        %1971 = vmatprep.subr.mxu0 0.0
        %1972 = vmatpush1.msra.mxu0 0.0
        %1973 = vmatprep.mubr.f32.mxu0 0.0
        %1974 = vmatmul.mubr.f32.gmra.mrb[0].mxu0 %v1862
        %v1975 = vpop.f32.mrb[0].mxu0
        %v1976 = vadd.f32 0.0, %v1975
        %v1977 = vpop.f32.mrb[0].mxu0
        %1978 = vmatprep.mubr.f32.mxu0 0.0
        %1979 = vmatmul.mubr.f32.gmra.mrb[0].mxu0 %v1865
        %v1980 = vpop.f32.mrb[0].mxu0
        %v1981 = vadd.f32 0.0, %v1980
        %v1982 = vpop.f32.mrb[0].mxu0
        %1983 = vmatprep.mubr.f32.mxu0 0.0
        %1984 = vmatmul.mubr.f32.gmra.mrb[0].mxu0 %v1868
        %v1985 = vpop.f32.mrb[0].mxu0
        %v1986 = vadd.f32 0.0, %v1985
        %v1987 = vpop.f32.mrb[0].mxu0
        %1988 = vmatprep.mubr.f32.mxu0 0.0
        %1989 = vmatmul.mubr.f32.gmra.mrb[0].mxu0 %v1871
        %v1990 = vpop.f32.mrb[0].mxu0
        %v1991 = vadd.f32 0.0, %v1990
        %v1992 = vpop.f32.mrb[0].mxu0
        %1993 = vmatprep.mubr.f32.mxu0 0.0
        %1994 = vmatmul.mubr.f32.gmra.mrb[0].mxu0 %v1874
        %v1995 = vpop.f32.mrb[0].mxu0
        %v1996 = vadd.f32 0.0, %v1995
        %v1997 = vpop.f32.mrb[0].mxu0
        %1998 = vmatprep.mubr.f32.mxu0 0.0
        %1999 = vmatmul.mubr.f32.gmra.mrb[0].mxu0 %v1877
        %v2000 = vpop.f32.mrb[0].mxu0
        %v2001 = vadd.f32 0.0, %v2000
        %v2002 = vpop.f32.mrb[0].mxu0
        %2003 = vmatprep.mubr.f32.mxu0 0.0
        %2004 = vmatmul.mubr.f32.gmra.mrb[0].mxu0 %v1880
        %v2005 = vpop.f32.mrb[0].mxu0
        %v2006 = vadd.f32 0.0, %v2005
        %v2007 = vpop.f32.mrb[0].mxu0
        %2008 = vmatprep.mubr.f32.mxu0 0.0
        %2009 = vmatmul.mubr.f32.gmra.mrb[0].mxu0 %v1883
        %v2010 = vpop.f32.mrb[0].mxu0
        %v2011 = vadd.f32 0.0, %v2010
        %v2012 = vpop.f32.mrb[0].mxu0
        %2013 = vmatprep.mubr.f32.mxu0 0.0
        %2014 = vmatmul.mubr.f32.gmra.mrb[0].mxu0 %v1886
        %v2015 = vpop.f32.mrb[0].mxu0
        %v2016 = vadd.f32 0.0, %v2015
        %v2017 = vpop.f32.mrb[0].mxu0
        %2018 = vmatprep.mubr.f32.mxu0 0.0
        %2019 = vmatmul.mubr.f32.gmra.mrb[0].mxu0 %v1889
        %v2020 = vpop.f32.mrb[0].mxu0
        %v2021 = vadd.f32 0.0, %v2020
        %v2022 = vpop.f32.mrb[0].mxu0
        %2023 = vmatprep.mubr.f32.mxu0 0.0
        %2024 = vmatmul.mubr.f32.gmra.mrb[0].mxu0 %v1892
        %v2025 = vpop.f32.mrb[0].mxu0
        %v2026 = vadd.f32 0.0, %v2025
        %v2027 = vpop.f32.mrb[0].mxu0
        %2028 = vmatprep.mubr.f32.mxu0 0.0
        %2029 = vmatmul.mubr.f32.gmra.mrb[0].mxu0 %v1895
        %v2030 = vpop.f32.mrb[0].mxu0
        %v2031 = vadd.f32 0.0, %v2030
        %v2032 = vpop.f32.mrb[0].mxu0
        %2033 = vmatprep.mubr.f32.mxu0 0.0
        %2034 = vmatmul.mubr.f32.gmra.mrb[0].mxu0 %v1898
        %v2035 = vpop.f32.mrb[0].mxu0
        %v2036 = vadd.f32 0.0, %v2035
        %v2037 = vpop.f32.mrb[0].mxu0
        %2038 = vmatprep.mubr.f32.mxu0 0.0
        %2039 = vmatmul.mubr.f32.gmra.mrb[0].mxu0 %v1901
        %v2040 = vpop.f32.mrb[0].mxu0
        %v2041 = vadd.f32 0.0, %v2040
        %v2042 = vpop.f32.mrb[0].mxu0
        %2043 = vmatprep.mubr.f32.mxu0 0.0
        %2044 = vmatmul.mubr.f32.gmra.mrb[0].mxu0 %v1904
        %v2045 = vpop.f32.mrb[0].mxu0
        %v2046 = vadd.f32 0.0, %v2045
        %v2047 = vpop.f32.mrb[0].mxu0
        %2048 = vmatprep.mubr.f32.mxu0 0.0
        %2049 = vmatmul.mubr.f32.gmra.mrb[0].mxu0 %v1907
        %v2050 = vpop.f32.mrb[0].mxu0
        %v2051 = vadd.f32 0.0, %v2050
        %v2052 = vpop.f32.mrb[0].mxu0
        %2053 = vdwg.mxu0
        %v2054 = vmax.f32 %v1976, %v1996
        %v2055 = vmax.f32 %v1981, %v2001
        %v2056 = vmax.f32 %v1986, %v2006
        %v2057 = vmax.f32 %v1991, %v2011
        %v2058 = vmax.f32 %v2054, %v2016
        %v2059 = vmax.f32 %v2055, %v2021
        %v2060 = vmax.f32 %v2056, %v2026
        %v2061 = vmax.f32 %v2057, %v2031
        %v2062 = vmax.f32 %v2058, %v2036
        %v2063 = vmax.f32 %v2059, %v2041
        %v2064 = vmax.f32 %v2060, %v2046
        %v2065 = vmax.f32 %v2061, %v2051
        %v2066 = vmax.f32 %v2062, %v2063
        %v2067 = vmax.f32 %v2064, %v2065
        %v2068 = vmax.f32 %v2066, %v2067
        %v2069 = vrot.slane %v2068, 4
        %v2070 = vmax.f32 %v2068, %v2069
        %v2071 = vrot.slane %v2070, 2
        %v2072 = vmax.f32 %v2070, %v2071
        %v2073 = vrot.slane %v2072, 1
        %v2074 = vmax.f32 %v2072, %v2073
        %v2075 = vmax.f32 %v2074, -1e+30
        %v2076 = vsub.f32 -1e+30, %v2075
        %v2077 = vmul.f32 %v2076, 1.442695
        %v2078 = vpow.pop %v2077
        %v2079 = vsub.f32 %v1976, %v2075
        %v2080 = vsub.f32 %v1981, %v2075
        %v2081 = vsub.f32 %v1986, %v2075
        %v2082 = vsub.f32 %v1991, %v2075
        %v2083 = vsub.f32 %v1996, %v2075
        %v2084 = vsub.f32 %v2001, %v2075
        %v2085 = vsub.f32 %v2006, %v2075
        %v2086 = vsub.f32 %v2011, %v2075
        %v2087 = vsub.f32 %v2016, %v2075
        %v2088 = vsub.f32 %v2021, %v2075
        %v2089 = vsub.f32 %v2026, %v2075
        %v2090 = vsub.f32 %v2031, %v2075
        %v2091 = vsub.f32 %v2036, %v2075
        %v2092 = vsub.f32 %v2041, %v2075
        %v2093 = vsub.f32 %v2046, %v2075
        %v2094 = vsub.f32 %v2051, %v2075
        %v2095 = vmul.f32 %v2079, 1.442695
        %v2096 = vpow.pop %v2095
        %v2097 = vmul.f32 %v2080, 1.442695
        %v2098 = vpow.pop %v2097
        %v2099 = vmul.f32 %v2081, 1.442695
        %v2100 = vpow.pop %v2099
        %v2101 = vmul.f32 %v2082, 1.442695
        %v2102 = vpow.pop %v2101
        %v2103 = vmul.f32 %v2083, 1.442695
        %v2104 = vpow.pop %v2103
        %v2105 = vmul.f32 %v2084, 1.442695
        %v2106 = vpow.pop %v2105
        %v2107 = vmul.f32 %v2085, 1.442695
        %v2108 = vpow.pop %v2107
        %v2109 = vmul.f32 %v2086, 1.442695
        %v2110 = vpow.pop %v2109
        %v2111 = vmul.f32 %v2087, 1.442695
        %v2112 = vpow.pop %v2111
        %v2113 = vmul.f32 %v2088, 1.442695
        %v2114 = vpow.pop %v2113
        %v2115 = vmul.f32 %v2089, 1.442695
        %v2116 = vpow.pop %v2115
        %v2117 = vmul.f32 %v2090, 1.442695
        %v2118 = vpow.pop %v2117
        %v2119 = vmul.f32 %v2091, 1.442695
        %v2120 = vpow.pop %v2119
        %v2121 = vmul.f32 %v2092, 1.442695
        %v2122 = vpow.pop %v2121
        %v2123 = vmul.f32 %v2093, 1.442695
        %v2124 = vpow.pop %v2123
        %v2125 = vmul.f32 %v2094, 1.442695
        %v2126 = vpow.pop %v2125
        %v2127 = vmul.f32 %v2078, 0.0
        %v2128 = vadd.f32 %v2096, %v2098
        %v2129 = vadd.f32 %v2128, %v2100
        %v2130 = vadd.f32 %v2129, %v2102
        %v2131 = vadd.f32 %v2130, %v2104
        %v2132 = vadd.f32 %v2131, %v2106
        %v2133 = vadd.f32 %v2132, %v2108
        %v2134 = vadd.f32 %v2133, %v2110
        %v2135 = vadd.f32 %v2134, %v2112
        %v2136 = vadd.f32 %v2135, %v2114
        %v2137 = vadd.f32 %v2136, %v2116
        %v2138 = vadd.f32 %v2137, %v2118
        %v2139 = vadd.f32 %v2138, %v2120
        %v2140 = vadd.f32 %v2139, %v2122
        %v2141 = vadd.f32 %v2140, %v2124
        %v2142 = vadd.f32 %v2141, %v2126
        %v2143 = vrot.slane %v2142, 4
        %v2144 = vadd.f32 %v2142, %v2143
        %v2145 = vrot.slane %v2144, 2
        %v2146 = vadd.f32 %v2144, %v2145
        %v2147 = vrot.slane %v2146, 1
        %v2148 = vadd.f32 %v2146, %v2147
        %v2149 = vadd.f32 %v2127, %v2148
        %2150 = vmatprep.subr.mxu0 0.0
        %2151 = vmatpush1.msra.mxu0 %v2096
        %2152 = vmatprep.subr.mxu0 0.0
        %2153 = vmatpush1.msra.mxu0 %v2098
        %2154 = vmatprep.subr.mxu0 0.0
        %2155 = vmatpush1.msra.mxu0 %v2100
        %2156 = vmatprep.subr.mxu0 0.0
        %2157 = vmatpush1.msra.mxu0 %v2102
        %2158 = vmatprep.subr.mxu0 0.0
        %2159 = vmatpush1.msra.mxu0 %v2104
        %2160 = vmatprep.subr.mxu0 0.0
        %2161 = vmatpush1.msra.mxu0 %v2106
        %2162 = vmatprep.subr.mxu0 0.0
        %2163 = vmatpush1.msra.mxu0 %v2108
        %2164 = vmatprep.subr.mxu0 0.0
        %2165 = vmatpush1.msra.mxu0 %v2110
        %2166 = vmatprep.subr.mxu0 0.0
        %2167 = vmatpush1.msra.mxu0 %v2112
        %2168 = vmatprep.subr.mxu0 0.0
        %2169 = vmatpush1.msra.mxu0 %v2114
        %2170 = vmatprep.subr.mxu0 0.0
        %2171 = vmatpush1.msra.mxu0 %v2116
        %2172 = vmatprep.subr.mxu0 0.0
        %2173 = vmatpush1.msra.mxu0 %v2118
        %2174 = vmatprep.subr.mxu0 0.0
        %2175 = vmatpush1.msra.mxu0 %v2120
        %2176 = vmatprep.subr.mxu0 0.0
        %2177 = vmatpush1.msra.mxu0 %v2122
        %2178 = vmatprep.subr.mxu0 0.0
        %2179 = vmatpush1.msra.mxu0 %v2124
        %2180 = vmatprep.subr.mxu0 0.0
        %2181 = vmatpush1.msra.mxu0 %v2126
        %2182 = vmatprep.subr.mxu0 0.0
        %2183 = vmatpush1.msra.mxu0 0.0
        %2184 = vmatprep.subr.mxu0 0.0
        %2185 = vmatpush1.msra.mxu0 0.0
        %2186 = vmatprep.subr.mxu0 0.0
        %2187 = vmatpush1.msra.mxu0 0.0
        %2188 = vmatprep.subr.mxu0 0.0
        %2189 = vmatpush1.msra.mxu0 0.0
        %2190 = vmatprep.subr.mxu0 0.0
        %2191 = vmatpush1.msra.mxu0 0.0
        %2192 = vmatprep.subr.mxu0 0.0
        %2193 = vmatpush1.msra.mxu0 0.0
        %2194 = vmatprep.subr.mxu0 0.0
        %2195 = vmatpush1.msra.mxu0 0.0
        %2196 = vmatprep.subr.mxu0 0.0
        %2197 = vmatpush1.msra.mxu0 0.0
        %2198 = vmatprep.subr.mxu0 0.0
        %2199 = vmatpush1.msra.mxu0 0.0
        %2200 = vmatprep.subr.mxu0 0.0
        %2201 = vmatpush1.msra.mxu0 0.0
        %2202 = vmatprep.subr.mxu0 0.0
        %2203 = vmatpush1.msra.mxu0 0.0
        %2204 = vmatprep.subr.mxu0 0.0
        %2205 = vmatpush1.msra.mxu0 0.0
        %2206 = vmatprep.subr.mxu0 0.0
        %2207 = vmatpush1.msra.mxu0 0.0
        %2208 = vmatprep.subr.mxu0 0.0
        %2209 = vmatpush1.msra.mxu0 0.0
        %2210 = vmatprep.subr.mxu0 0.0
        %2211 = vmatpush1.msra.mxu0 0.0
        %2212 = vmatprep.subr.mxu0 0.0
        %2213 = vmatpush1.msra.mxu0 0.0
        %2214 = vmatprep.mubr.f32.mxu0 0.0
        %2215 = vmatmul.mubr.f32.gmra.mrb[0].mxu0 %v1828
        %v2216 = vpop.f32.mrb[0].mxu0
        %v2217 = vadd.f32 0.0, %v2216
        %v2218 = vpop.f32.mrb[0].mxu0
        %2219 = vdwg.mxu0
        %v2220 = vadd.f32 %v2127, %v2217
        %v2221 = vrcp.pop %v2149
        %v2222 = vmul.f32 %v2220, %v2221
        %v2223 = vmax.f32 %v2222, 0.0
        %v2224 = vld [vmem:[%s552] sm:$0x1]
        %2226 = vset.pattern.permute.xlu0 0
        %2227 = vperm.xlu0 %2226, %v1816
        %v2228 = vpop.permute.xlu0 %2227
        %2231 = vset.pattern.permute.xlu0 0
        %2232 = vperm.xlu0 %2231, %v1817
        %v2233 = vpop.permute.xlu0 %2232
        %v2236 = vsel %vm578, %v1813, 0
        %v2239 = vsel %vm578, %v1814, 0
        %2241 = vmatprep.subr.mxu0 0.0
        %2242 = vmatpush1.msra.mxu0 %v2223
        %2243 = vmatprep.subr.mxu0 0.0
        %2244 = vmatpush1.msra.mxu0 0.0
        %2245 = vmatprep.subr.mxu0 0.0
        %2246 = vmatpush1.msra.mxu0 0.0
        %2247 = vmatprep.subr.mxu0 0.0
        %2248 = vmatpush1.msra.mxu0 0.0
        %2249 = vmatprep.subr.mxu0 0.0
        %2250 = vmatpush1.msra.mxu0 0.0
        %2251 = vmatprep.subr.mxu0 0.0
        %2252 = vmatpush1.msra.mxu0 0.0
        %2253 = vmatprep.subr.mxu0 0.0
        %2254 = vmatpush1.msra.mxu0 0.0
        %2255 = vmatprep.subr.mxu0 0.0
        %2256 = vmatpush1.msra.mxu0 0.0
        %2257 = vmatprep.subr.mxu0 0.0
        %2258 = vmatpush1.msra.mxu0 0.0
        %2259 = vmatprep.subr.mxu0 0.0
        %2260 = vmatpush1.msra.mxu0 0.0
        %2261 = vmatprep.subr.mxu0 0.0
        %2262 = vmatpush1.msra.mxu0 0.0
        %2263 = vmatprep.subr.mxu0 0.0
        %2264 = vmatpush1.msra.mxu0 0.0
        %2265 = vmatprep.subr.mxu0 0.0
        %2266 = vmatpush1.msra.mxu0 0.0
        %2267 = vmatprep.subr.mxu0 0.0
        %2268 = vmatpush1.msra.mxu0 0.0
        %2269 = vmatprep.subr.mxu0 0.0
        %2270 = vmatpush1.msra.mxu0 0.0
        %2271 = vmatprep.subr.mxu0 0.0
        %2272 = vmatpush1.msra.mxu0 0.0
        %2273 = vmatprep.subr.mxu0 0.0
        %2274 = vmatpush1.msra.mxu0 0.0
        %2275 = vmatprep.subr.mxu0 0.0
        %2276 = vmatpush1.msra.mxu0 0.0
        %2277 = vmatprep.subr.mxu0 0.0
        %2278 = vmatpush1.msra.mxu0 0.0
        %2279 = vmatprep.subr.mxu0 0.0
        %2280 = vmatpush1.msra.mxu0 0.0
        %2281 = vmatprep.subr.mxu0 0.0
        %2282 = vmatpush1.msra.mxu0 0.0
        %2283 = vmatprep.subr.mxu0 0.0
        %2284 = vmatpush1.msra.mxu0 0.0
        %2285 = vmatprep.subr.mxu0 0.0
        %2286 = vmatpush1.msra.mxu0 0.0
        %2287 = vmatprep.subr.mxu0 0.0
        %2288 = vmatpush1.msra.mxu0 0.0
        %2289 = vmatprep.subr.mxu0 0.0
        %2290 = vmatpush1.msra.mxu0 0.0
        %2291 = vmatprep.subr.mxu0 0.0
        %2292 = vmatpush1.msra.mxu0 0.0
        %2293 = vmatprep.subr.mxu0 0.0
        %2294 = vmatpush1.msra.mxu0 0.0
        %2295 = vmatprep.subr.mxu0 0.0
        %2296 = vmatpush1.msra.mxu0 0.0
        %2297 = vmatprep.subr.mxu0 0.0
        %2298 = vmatpush1.msra.mxu0 0.0
        %2299 = vmatprep.subr.mxu0 0.0
        %2300 = vmatpush1.msra.mxu0 0.0
        %2301 = vmatprep.subr.mxu0 0.0
        %2302 = vmatpush1.msra.mxu0 0.0
        %2303 = vmatprep.subr.mxu0 0.0
        %2304 = vmatpush1.msra.mxu0 0.0
        %2305 = vmatprep.mubr.f32.mxu0 0.0
        %2306 = vmatmul.mubr.f32.gmra.mrb[0].mxu0 %v2236
        %v2307 = vpop.f32.mrb[0].mxu0
        %v2308 = vadd.f32 %v2228, %v2307
        %v2309 = vpop.f32.mrb[0].mxu0
        %2310 = vmatprep.mubr.f32.mxu0 0.0
        %2311 = vmatmul.mubr.f32.gmra.mrb[0].mxu0 %v2239
        %v2312 = vpop.f32.mrb[0].mxu0
        %v2313 = vadd.f32 %v2233, %v2312
        %v2314 = vpop.f32.mrb[0].mxu0
        %2315 = vdwg.mxu0
        %v2317 = vlaneseq
        %v2318 = vshrl.u32 %v2317, 7
        %v2319 = vsub.s32 0, %v2318
        %v2320 = vrot.slane %v2224, %v2319
        %v2322 = vmul.f32 %v2308, %v2320
        %v2323 = vmul.f32 %v2313, %v2320
        %v2324 = vld [vmem:[#allocation2] sm:$0xff]
        %v2325 = vld [vmem:[#allocation2 + $0x8] sm:$0xff]
        %v2326 = vadd.f32 %v2322, %v2324
        %v2327 = vadd.f32 %v2323, %v2325
        %2329 = vset.pattern.permute.xlu0 0
        %2330 = vperm.xlu0 %2329, %v1822
        %v2331 = vpop.permute.xlu0 %2330
        %2334 = vset.pattern.permute.xlu0 0
        %2335 = vperm.xlu0 %2334, %v1823
        %v2336 = vpop.permute.xlu0 %2335
        %v2339 = vsel %vm831, %v1819, 0
        %v2342 = vsel %vm831, %v1820, 0
        %2344 = vmatprep.subr.mxu0 0.0
        %2345 = vmatpush1.msra.mxu0 %v2326
        %2346 = vmatprep.subr.mxu0 0.0
        %2347 = vmatpush1.msra.mxu0 %v2327
        %2348 = vmatprep.subr.mxu0 0.0
        %2349 = vmatpush1.msra.mxu0 0.0
        %2350 = vmatprep.subr.mxu0 0.0
        %2351 = vmatpush1.msra.mxu0 0.0
        %2352 = vmatprep.subr.mxu0 0.0
        %2353 = vmatpush1.msra.mxu0 0.0
        %2354 = vmatprep.subr.mxu0 0.0
        %2355 = vmatpush1.msra.mxu0 0.0
        %2356 = vmatprep.subr.mxu0 0.0
        %2357 = vmatpush1.msra.mxu0 0.0
        %2358 = vmatprep.subr.mxu0 0.0
        %2359 = vmatpush1.msra.mxu0 0.0
        %2360 = vmatprep.subr.mxu0 0.0
        %2361 = vmatpush1.msra.mxu0 0.0
        %2362 = vmatprep.subr.mxu0 0.0
        %2363 = vmatpush1.msra.mxu0 0.0
        %2364 = vmatprep.subr.mxu0 0.0
        %2365 = vmatpush1.msra.mxu0 0.0
        %2366 = vmatprep.subr.mxu0 0.0
        %2367 = vmatpush1.msra.mxu0 0.0
        %2368 = vmatprep.subr.mxu0 0.0
        %2369 = vmatpush1.msra.mxu0 0.0
        %2370 = vmatprep.subr.mxu0 0.0
        %2371 = vmatpush1.msra.mxu0 0.0
        %2372 = vmatprep.subr.mxu0 0.0
        %2373 = vmatpush1.msra.mxu0 0.0
        %2374 = vmatprep.subr.mxu0 0.0
        %2375 = vmatpush1.msra.mxu0 0.0
        %2376 = vmatprep.subr.mxu0 0.0
        %2377 = vmatpush1.msra.mxu0 0.0
        %2378 = vmatprep.subr.mxu0 0.0
        %2379 = vmatpush1.msra.mxu0 0.0
        %2380 = vmatprep.subr.mxu0 0.0
        %2381 = vmatpush1.msra.mxu0 0.0
        %2382 = vmatprep.subr.mxu0 0.0
        %2383 = vmatpush1.msra.mxu0 0.0
        %2384 = vmatprep.subr.mxu0 0.0
        %2385 = vmatpush1.msra.mxu0 0.0
        %2386 = vmatprep.subr.mxu0 0.0
        %2387 = vmatpush1.msra.mxu0 0.0
        %2388 = vmatprep.subr.mxu0 0.0
        %2389 = vmatpush1.msra.mxu0 0.0
        %2390 = vmatprep.subr.mxu0 0.0
        %2391 = vmatpush1.msra.mxu0 0.0
        %2392 = vmatprep.subr.mxu0 0.0
        %2393 = vmatpush1.msra.mxu0 0.0
        %2394 = vmatprep.subr.mxu0 0.0
        %2395 = vmatpush1.msra.mxu0 0.0
        %2396 = vmatprep.subr.mxu0 0.0
        %2397 = vmatpush1.msra.mxu0 0.0
        %2398 = vmatprep.subr.mxu0 0.0
        %2399 = vmatpush1.msra.mxu0 0.0
        %2400 = vmatprep.subr.mxu0 0.0
        %2401 = vmatpush1.msra.mxu0 0.0
        %2402 = vmatprep.subr.mxu0 0.0
        %2403 = vmatpush1.msra.mxu0 0.0
        %2404 = vmatprep.subr.mxu0 0.0
        %2405 = vmatpush1.msra.mxu0 0.0
        %2406 = vmatprep.subr.mxu0 0.0
        %2407 = vmatpush1.msra.mxu0 0.0
        %2408 = vmatprep.mubr.f32.mxu0 0.0
        %2409 = vmatmul.mubr.f32.gmra.mrb[0].mxu0 %v2339
        %v2410 = vpop.f32.mrb[0].mxu0
        %v2411 = vadd.f32 %v2331, %v2410
        %v2412 = vpop.f32.mrb[0].mxu0
        %2413 = vmatprep.mubr.f32.mxu0 0.0
        %2414 = vmatmul.mubr.f32.gmra.mrb[0].mxu0 %v2342
        %v2415 = vpop.f32.mrb[0].mxu0
        %v2416 = vadd.f32 %v2336, %v2415
        %v2417 = vpop.f32.mrb[0].mxu0
        %2418 = vdwg.mxu0
        %v2419 = vld [vmem:[%s545] sm:$0xff]
        %v2420 = vld [vmem:[%s545 + $0x8] sm:$0xff]
        %v2421 = vadd.f32 %v2419, %v2411
        %v2422 = vadd.f32 %v2420, %v2416
        %v2423 = vmul.f32 %v2421, %v2320
        %v2424 = vmul.f32 %v2422, %v2320
        %2425 = vst [vmem:[%s545] sm:$0xff] %v2423
        %2426 = vst [vmem:[%s545 + $0x8] sm:$0xff] %v2424
        %v2427 = vld [vmem:[%s13] sm:$0xf]
        %v2428 = vld [vmem:[%s545] sm:$0xff]
        %v2429 = vld [vmem:[%s545 + $0x8] sm:$0xff]
        %v2430 = vld [vmem:[%s14] sm:$0xf]
        %2432 = vset.pattern.permute.xlu0 0
        %2433 = vperm.xlu0 %2432, %v2430
        %v2434 = vpop.permute.xlu0 %2433
        %v2437 = vsel %vm831, %v2427, 0
        %2439 = vmatprep.subr.mxu0 0.0
        %2440 = vmatpush1.msra.mxu0 %v2428
        %2441 = vmatprep.subr.mxu0 0.0
        %2442 = vmatpush1.msra.mxu0 %v2429
        %2443 = vmatprep.subr.mxu0 0.0
        %2444 = vmatpush1.msra.mxu0 0.0
        %2445 = vmatprep.subr.mxu0 0.0
        %2446 = vmatpush1.msra.mxu0 0.0
        %2447 = vmatprep.subr.mxu0 0.0
        %2448 = vmatpush1.msra.mxu0 0.0
        %2449 = vmatprep.subr.mxu0 0.0
        %2450 = vmatpush1.msra.mxu0 0.0
        %2451 = vmatprep.subr.mxu0 0.0
        %2452 = vmatpush1.msra.mxu0 0.0
        %2453 = vmatprep.subr.mxu0 0.0
        %2454 = vmatpush1.msra.mxu0 0.0
        %2455 = vmatprep.subr.mxu0 0.0
        %2456 = vmatpush1.msra.mxu0 0.0
        %2457 = vmatprep.subr.mxu0 0.0
        %2458 = vmatpush1.msra.mxu0 0.0
        %2459 = vmatprep.subr.mxu0 0.0
        %2460 = vmatpush1.msra.mxu0 0.0
        %2461 = vmatprep.subr.mxu0 0.0
        %2462 = vmatpush1.msra.mxu0 0.0
        %2463 = vmatprep.subr.mxu0 0.0
        %2464 = vmatpush1.msra.mxu0 0.0
        %2465 = vmatprep.subr.mxu0 0.0
        %2466 = vmatpush1.msra.mxu0 0.0
        %2467 = vmatprep.subr.mxu0 0.0
        %2468 = vmatpush1.msra.mxu0 0.0
        %2469 = vmatprep.subr.mxu0 0.0
        %2470 = vmatpush1.msra.mxu0 0.0
        %2471 = vmatprep.subr.mxu0 0.0
        %2472 = vmatpush1.msra.mxu0 0.0
        %2473 = vmatprep.subr.mxu0 0.0
        %2474 = vmatpush1.msra.mxu0 0.0
        %2475 = vmatprep.subr.mxu0 0.0
        %2476 = vmatpush1.msra.mxu0 0.0
        %2477 = vmatprep.subr.mxu0 0.0
        %2478 = vmatpush1.msra.mxu0 0.0
        %2479 = vmatprep.subr.mxu0 0.0
        %2480 = vmatpush1.msra.mxu0 0.0
        %2481 = vmatprep.subr.mxu0 0.0
        %2482 = vmatpush1.msra.mxu0 0.0
        %2483 = vmatprep.subr.mxu0 0.0
        %2484 = vmatpush1.msra.mxu0 0.0
        %2485 = vmatprep.subr.mxu0 0.0
        %2486 = vmatpush1.msra.mxu0 0.0
        %2487 = vmatprep.subr.mxu0 0.0
        %2488 = vmatpush1.msra.mxu0 0.0
        %2489 = vmatprep.subr.mxu0 0.0
        %2490 = vmatpush1.msra.mxu0 0.0
        %2491 = vmatprep.subr.mxu0 0.0
        %2492 = vmatpush1.msra.mxu0 0.0
        %2493 = vmatprep.subr.mxu0 0.0
        %2494 = vmatpush1.msra.mxu0 0.0
        %2495 = vmatprep.subr.mxu0 0.0
        %2496 = vmatpush1.msra.mxu0 0.0
        %2497 = vmatprep.subr.mxu0 0.0
        %2498 = vmatpush1.msra.mxu0 0.0
        %2499 = vmatprep.subr.mxu0 0.0
        %2500 = vmatpush1.msra.mxu0 0.0
        %2501 = vmatprep.subr.mxu0 0.0
        %2502 = vmatpush1.msra.mxu0 0.0
        %2503 = vmatprep.mubr.f32.mxu0 0.0
        %2504 = vmatmul.mubr.f32.gmra.mrb[0].mxu0 %v2437
        %v2505 = vpop.f32.mrb[0].mxu0
        %v2506 = vadd.f32 %v2434, %v2505
        %v2507 = vpop.f32.mrb[0].mxu0
        %2508 = vdwg.mxu0
        %v2509 = vmul.f32 %v2506, %v925
        %2510 = vst [vmem:[%s538] sm:$0xf] %v2509
        %s2511 = sand.u32 %s372, 1
        %s2512 = scalar_lea.sflag [#allocation5], %s2511
        %s2513 = sand.u32 %s372, 1
        %s2514 = smul.addr %s2513, 4
        %s2515 = scalar_lea.vmem [#allocation4], %s2514
        %s2516 = sand.u32 %s398, 1
        %s2517 = scalar_lea.sflag [#allocation7], %s2516
        %s2518 = sand.u32 %s398, 1
        %s2519 = smul.addr %s2518, 16
        %s2520 = scalar_lea.vmem [#allocation6], %s2519
        // Predicated region
        $region81: #{tpu_custom_call.1} parent=79 // pred_check
          %p2521 = pneg %p382
        $region82: #{tpu_custom_call.1} parent=79 // pred_check_branch
          %2523 = sbr.rel (%p2521) target = $region84
        $region83: #{tpu_custom_call.1} parent=79 // pred_region
          %s2525 = ssub.s32 64, 64
          %2526 = vsyncadd %s2512, %s2525
          %s2527 = smul.addr %s34, 64
          %s2528 = scalar_lea.hbm %s15, %s2527
          %s2530 = sshll.u32 %s2515, 4
          %s2531 = int_to_ptr.vmem [resolvable:$true] %s2530
          %2533 = dma.vmem_to_hbm [thread:$0]  %s2531, 64, %s2528, %s2512
        $region84: #{tpu_custom_call.1} parent=79 // pred_fallthru
          _
        // Predicated region
        $region85: #{tpu_custom_call.1} parent=79 // pred_check
          %p2534 = pneg %p408
        $region86: #{tpu_custom_call.1} parent=79 // pred_check_branch
          %2536 = sbr.rel (%p2534) target = $region88
        $region87: #{tpu_custom_call.1} parent=79 // pred_region
          %s2538 = ssub.s32 256, 256
          %2539 = vsyncadd %s2517, %s2538
          %s2540 = smul.addr %s34, 2
          %s2541 = smul.addr %s2540, 128
          %s2542 = scalar_lea.hbm %s16, %s2541
          %s2543 = sshll.u32 %s2520, 4
          %s2544 = int_to_ptr.vmem [resolvable:$true] %s2543
          %2549 = dma.vmem_to_hbm [thread:$0]  %s2544, 256, %s2542, %s2517, 128, 128, 8
        $region88: #{tpu_custom_call.1} parent=79 // pred_fallthru
          _
      $region80: #{tpu_custom_call.1} parent=5 // pred_fallthru
        _
      %p2550 = scmp.le.s32.totalorder 2, %s29
      // Predicated region
      $region89: #{tpu_custom_call.1} parent=5 // pred_check
        %p2551 = pneg %p2550
      $region90: #{tpu_custom_call.1} parent=5 // pred_check_branch
        %2553 = sbr.rel (%p2551) target = $region92
      $region91: #{tpu_custom_call.1} parent=5 // pred_region
        %s2554 = ssub.s32 %s29, 2
        // Predicated region
        $region93: #{tpu_custom_call.1} parent=91 // pred_check
          %p2555 = pneg %p388
        $region94: #{tpu_custom_call.1} parent=91 // pred_check_branch
          %2557 = sbr.rel (%p2555) target = $region96
        $region95: #{tpu_custom_call.1} parent=91 // pred_region
          %s2558 = sand.u32 %s373, 1
          %s2559 = scalar_lea.sflag [#allocation5], %s2558
          %s2560 = sand.u32 %s373, 1
          %s2561 = smul.addr %s2560, 4
          %s2562 = scalar_lea.vmem [#allocation4], %s2561
          %2563 = dma.done %s2559, 64
        $region96: #{tpu_custom_call.1} parent=91 // pred_fallthru
          _
        // Predicated region
        $region97: #{tpu_custom_call.1} parent=91 // pred_check
          %p2564 = pneg %p414
        $region98: #{tpu_custom_call.1} parent=91 // pred_check_branch
          %2566 = sbr.rel (%p2564) target = $region100
        $region99: #{tpu_custom_call.1} parent=91 // pred_region
          %s2567 = sand.u32 %s399, 1
          %s2568 = scalar_lea.sflag [#allocation7], %s2567
          %s2569 = sand.u32 %s399, 1
          %s2570 = smul.addr %s2569, 16
          %s2571 = scalar_lea.vmem [#allocation6], %s2570
          %2572 = dma.done %s2568, 256
        $region100: #{tpu_custom_call.1} parent=91 // pred_fallthru
          _
      $region92: #{tpu_custom_call.1} parent=5 // pred_fallthru
        _
    $region6: #{tpu_custom_call.1} parent=1 // loop_footer
      %s33 = sadd.s32 1, %s29
    $region7: #{tpu_custom_call.1} parent=1 // loop_footer_branch
      %28 = sbr.rel target = $region3
    $region8: #{tpu_custom_call.1} parent=1 // loop_exit
      _
    %2573 = vsyncpa [#allocation5], 1
    %s2574 = scalar_lea.sflag [#allocation5], 1
    %2575 = vsyncpa %s2574, 1
    %2576 = vsyncpa [#allocation7], 1
    %s2577 = scalar_lea.sflag [#allocation7], 1
    %2578 = vsyncpa %s2577, 1

</llo_original>
